<compile_context>
chip_gen: v7x
topology: tpu7x:2x2x1
jax: 0.10.0
libtpu: 0.0.40
codegen_flags: <defaults>
</compile_context>

<pallas_src>
import functools

import jax
import jax.numpy as jnp
from jax.experimental import pallas as pl
from jax.experimental.pallas import tpu as pltpu

_C1, _C2, _C3 = 32, 64, 64
_K1, _S1 = 8, 4
_K2, _S2 = 4, 2
_K3 = 3
_H1 = _W1 = 8          # conv1 output spatial
_H2 = _W2 = 3          # conv2 output spatial
_FC1 = 512
_NPAD = 128            # lane-padded width of the fc2 output

# Packed-bias layout: one lane-aligned (1, 1024) f32 buffer -> one DMA.
_B1_OFF, _B2_OFF, _B3_OFF, _BF1_OFF, _BF2_OFF = 0, 128, 256, 384, 896
_BIAS_W = 1024


# ------------------------------ fused kernel ------------------------------- #
def _fused_dqn_kernel(p1_ref, w1_ref, w2_ref, w3_ref, wf1_ref, wf2_ref,
                      b_ref, o_ref, *, bt):
    f32, bf16 = jnp.float32, jnp.bfloat16
    m2 = _H2 * _W2 * bt                         # conv2 patch-matrix rows

    b1 = b_ref[:, _B1_OFF:_B1_OFF + _C1]
    b2 = b_ref[:, _B2_OFF:_B2_OFF + _C2]
    b3 = b_ref[:, _B3_OFF:_B3_OFF + _C3]
    bf1 = b_ref[:, _BF1_OFF:_BF1_OFF + _FC1]
    bf2 = b_ref[:, _BF2_OFF:_BF2_OFF + _NPAD]

    # conv1: one matmul over the tap-duplicated patch rows (tap, pos, n).
    a1 = jnp.dot(p1_ref[...], w1_ref[...], preferred_element_type=f32)
    a1 = jnp.maximum(a1 + b1, 0.0).astype(bf16)            # (16*m2, 32)

    # conv2 im2col by construction: tap t's rows are one contiguous block.
    # Lane-concat the 16 blocks -> lane-dense (m2, 512), then ONE matmul.
    p2 = jnp.concatenate(
        [a1[t * m2:(t + 1) * m2, :] for t in range(_K2 * _K2)], axis=1)
    a2 = jnp.dot(p2, w2_ref[...], preferred_element_type=f32)
    a2 = jnp.maximum(a2 + b2, 0.0).astype(bf16)            # (m2, 64), rows (pos, n)

    # conv3: gather each sample's 9 positions into lanes -> ONE (bt, 576) matmul.
    p3 = jnp.concatenate(
        [a2[p * bt:(p + 1) * bt, :] for p in range(_H2 * _W2)], axis=1)
    a3 = jnp.dot(p3, w3_ref[...], preferred_element_type=f32)
    a3 = jnp.maximum(a3 + b3, 0.0).astype(bf16)            # (bt, 64) == flatten

    # fc1 + ReLU, fc2 (output lane-padded to 128 -> unmasked store).
    h = jnp.dot(a3, wf1_ref[...], preferred_element_type=f32)
    h = jnp.maximum(h + bf1, 0.0).astype(bf16)             # (bt, 512)
    out = jnp.dot(h, wf2_ref[...], preferred_element_type=f32)
    o_ref[...] = (out + bf2).astype(o_ref.dtype)


# ------------------------------ JAX wrappers -------------------------------- #
def _im2col_conv2_taps(x, bt):
    """Conv1 im2col, rows pre-ordered/duplicated for the fused kernel.

    Returns (144*N, cin*64) bf16.  Within each batch tile of `bt` samples the
    rows are ordered (conv2 tap t=(i,j), conv2 output pos=(ho,wo), sample) and
    row (t, pos, n) holds the conv1 input patch of conv1-output position
    (2*ho+i, 2*wo+j) -- i.e. exactly the conv1 activation row conv2 tap t needs
    for output pos -- so the kernel's conv2 im2col is 16 contiguous row blocks.
    Feature order is (cin, kh, kw) to match the PyTorch Conv2d weight reshape.
    """
    n, c, h, w = x.shape
    g = n // bt
    # conv1 patches at every conv1 output position: (n, h1, w1, c, kh, kw)
    cols = []
    for kh in range(_K1):
        for kw in range(_K1):
            cols.append(x[:, :, kh:kh + _S1 * _H1:_S1, kw:kw + _S1 * _W1:_S1])
    pat = jnp.stack(cols, axis=0).reshape(_K1, _K1, n, c, _H1, _W1)
    pat = pat.transpose(2, 4, 5, 3, 0, 1)                  # (n, h1, w1, c, kh, kw)
    # duplicate per conv2 tap (i, j): pick the stride-2 3x3 grid it reads.
    taps = []
    for i in range(_K2):
        for j in range(_K2):
            taps.append(pat[:, i:i + _S2 * (_H2 - 1) + 1:_S2,
                            j:j + _S2 * (_W2 - 1) + 1:_S2])
    dup = jnp.stack(taps, axis=0)                          # (16, n, 3, 3, c, 8, 8)
    dup = dup.reshape(_K2 * _K2, g, bt, _H2 * _W2, c * _K1 * _K1)
    dup = dup.transpose(1, 0, 3, 2, 4)                     # (g, t, pos, n, feat)
    return dup.reshape(g * _K2 * _K2 * _H2 * _W2 * bt,
                       c * _K1 * _K1).astype(jnp.bfloat16)


def prepare_params(params, n_actions):
    """One-time layout prep: matmul-ready bf16 weights + one packed bias row."""
    cin = params["conv1_w"].shape[1]
    bf = lambda a: a.astype(jnp.bfloat16)
    w1 = params["conv1_w"].reshape(_C1, cin * _K1 * _K1).T                   # (cin*64, 32)
    w2 = params["conv2_w"].transpose(2, 3, 1, 0).reshape(_K2 * _K2 * _C1, _C2)  # (512, 64)
    w3 = params["conv3_w"].transpose(2, 3, 1, 0).reshape(_K3 * _K3 * _C2, _C3)  # (576, 64)
    wf1 = params["fc1_w"].T                                                  # (64, 512)
    wf2 = jnp.zeros((_FC1, _NPAD), jnp.float32).at[:, :n_actions].set(
        params["fc2_w"].T)
    biases = jnp.zeros((1, _BIAS_W), jnp.float32)
    biases = biases.at[0, _B1_OFF:_B1_OFF + _C1].set(params["conv1_b"])
    biases = biases.at[0, _B2_OFF:_B2_OFF + _C2].set(params["conv2_b"])
    biases = biases.at[0, _B3_OFF:_B3_OFF + _C3].set(params["conv3_b"])
    biases = biases.at[0, _BF1_OFF:_BF1_OFF + _FC1].set(params["fc1_b"])
    biases = biases.at[0, _BF2_OFF:_BF2_OFF + n_actions].set(params["fc2_b"])
    return {"w1": bf(w1), "w2": bf(w2), "w3": bf(w3),
            "wf1": bf(wf1), "wf2": bf(wf2), "biases": biases}


@functools.partial(jax.jit, static_argnames=("n_actions", "batch_tile"))
def dqn_forward(prep, x, *, n_actions, batch_tile=8):
    batch, cin, h, w = x.shape
    assert h == _S1 * (_H1 - 1) + _K1 and w == h, \
        "fc1 = Linear(64, 512) implies a 36x36 input"
    bt = min(batch_tile, batch)
    assert batch % bt == 0, "batch must be a multiple of the batch tile"
    g = batch // bt
    m1 = _K2 * _K2 * _H2 * _W2 * bt            # 144 * bt duplicated patch rows
    k1 = cin * _K1 * _K1

    p1 = _im2col_conv2_taps(x, bt)             # (144*batch, cin*64) bf16

    out = pl.pallas_call(
        functools.partial(_fused_dqn_kernel, bt=bt),
        out_shape=jax.ShapeDtypeStruct((batch, _NPAD), jnp.float32),
        grid=(g,),
        in_specs=[
            pl.BlockSpec((m1, k1), lambda i: (i, 0)),                   # p1 (batch-tiled)
            pl.BlockSpec((k1, _C1), lambda i: (0, 0)),                  # w1
            pl.BlockSpec((_K2 * _K2 * _C1, _C2), lambda i: (0, 0)),     # w2 (512, 64)
            pl.BlockSpec((_K3 * _K3 * _C2, _C3), lambda i: (0, 0)),     # w3 (576, 64)
            pl.BlockSpec((_C3, _FC1), lambda i: (0, 0)),                # wf1
            pl.BlockSpec((_FC1, _NPAD), lambda i: (0, 0)),              # wf2
            pl.BlockSpec((1, _BIAS_W), lambda i: (0, 0)),               # packed biases
        ],
        out_specs=pl.BlockSpec((bt, _NPAD), lambda i: (i, 0)),
        compiler_params=pltpu.CompilerParams(
            dimension_semantics=("parallel",),
            # Tiny per-step footprint (~2 MiB); explicit limit keeps larger
            # batch tiles honest on v7x's 64 MiB VMEM (raise for v5e/v6e).
            vmem_limit_bytes=32 * 1024 * 1024),
    )(p1, prep["w1"], prep["w2"], prep["w3"], prep["wf1"], prep["wf2"],
      prep["biases"])

    return out[:, :n_actions]


# ---------------------------- params / reference ---------------------------- #
def init_params(key, in_channels, n_actions):
    shapes = {
        "conv1_w": (_C1, in_channels, _K1, _K1), "conv1_b": (_C1,),
        "conv2_w": (_C2, _C1, _K2, _K2),         "conv2_b": (_C2,),
        "conv3_w": (_C3, _C2, _K3, _K3),         "conv3_b": (_C3,),
        "fc1_w":   (_FC1, _C3),                  "fc1_b":   (_FC1,),
        "fc2_w":   (n_actions, _FC1),            "fc2_b":   (n_actions,),
    }
    params = {}
    keys = jax.random.split(key, len(shapes))
    for k, (name, shape) in zip(keys, sorted(shapes.items())):
        params[name] = 0.05 * jax.random.normal(k, shape, dtype=jnp.float32)
    return params


def _reference_forward(params, x):
    """Pure-JAX f32 reference with PyTorch semantics (sanity check only)."""
    dn = ("NCHW", "OIHW", "NCHW")
    y = jax.lax.conv_general_dilated(x, params["conv1_w"], (_S1, _S1), "VALID",
                                     dimension_numbers=dn)
    y = jax.nn.relu(y + params["conv1_b"][None, :, None, None])
    y = jax.lax.conv_general_dilated(y, params["conv2_w"], (_S2, _S2), "VALID",
                                     dimension_numbers=dn)
    y = jax.nn.relu(y + params["conv2_b"][None, :, None, None])
    y = jax.lax.conv_general_dilated(y, params["conv3_w"], (1, 1), "VALID",
                                     dimension_numbers=dn)
    y = jax.nn.relu(y + params["conv3_b"][None, :, None, None])
    y = y.reshape(y.shape[0], -1)
    y = jax.nn.relu(y @ params["fc1_w"].T + params["fc1_b"])
    return y @ params["fc2_w"].T + params["fc2_b"]


# ---------------------------------- main ------------------------------------ #
if __name__ == "__main__":
    key = jax.random.PRNGKey(0)
    k_param, k_x = jax.random.split(key)

    batch, in_channels, n_actions = 16, 4, 4
    H = W = 36   # required so the conv stack flattens to exactly 64 features
    params = init_params(k_param, in_channels, n_actions)
    prep = prepare_params(params, n_actions)
    x = jax.random.normal(k_x, (batch, in_channels, H, W), dtype=jnp.float32)

    q_values = dqn_forward(prep, x, n_actions=n_actions, batch_tile=8)
    q_values = jax.block_until_ready(q_values)
    assert q_values.shape == (batch, n_actions), q_values.shape

    # Loose sanity check vs. the f32 reference (kernel uses bf16 MXU inputs).
    ref = _reference_forward(params, x)
    err = float(jnp.max(jnp.abs(q_values - ref)))
    assert err < 5e-2, f"max abs err vs reference: {err}"
    print("KERNEL_OK")
</pallas_src>

<mosaic_0001>
module attributes {stable_mosaic.version = 11 : i64} {
  func.func @_fused_dqn_kernel(%arg0: i32, %arg1: memref<1152x256xbf16, #tpu.memory_space<vmem>>, %arg2: memref<256x32xbf16, #tpu.memory_space<vmem>>, %arg3: memref<512x64xbf16, #tpu.memory_space<vmem>>, %arg4: memref<576x64xbf16, #tpu.memory_space<vmem>>, %arg5: memref<64x512xbf16, #tpu.memory_space<vmem>>, %arg6: memref<512x128xbf16, #tpu.memory_space<vmem>>, %arg7: memref<1x1024xf32, #tpu.memory_space<vmem>>, %arg8: memref<8x128xf32, #tpu.memory_space<vmem>>) attributes {dimension_semantics = [#tpu.dimension_semantics<parallel>], iteration_bounds = array<i64: 2>, scalar_prefetch = 0 : i64, scratch_operands = 0 : i64, tpu.core_type = #tpu.core_type<tc>, window_params = [{transform_indices = @transform_0, window_bounds = array<i64: 1152, 256>}, {pipeline_mode = #tpu.pipeline_mode<synchronous>, transform_indices = @transform_1, window_bounds = array<i64: 256, 32>}, {pipeline_mode = #tpu.pipeline_mode<synchronous>, transform_indices = @transform_2, window_bounds = array<i64: 512, 64>}, {pipeline_mode = #tpu.pipeline_mode<synchronous>, transform_indices = @transform_3, window_bounds = array<i64: 576, 64>}, {pipeline_mode = #tpu.pipeline_mode<synchronous>, transform_indices = @transform_4, window_bounds = array<i64: 64, 512>}, {pipeline_mode = #tpu.pipeline_mode<synchronous>, transform_indices = @transform_5, window_bounds = array<i64: 512, 128>}, {pipeline_mode = #tpu.pipeline_mode<synchronous>, transform_indices = @transform_6, window_bounds = array<i64: 1, 1024>}, {transform_indices = @transform_7, window_bounds = array<i64: 8, 128>}]} {
    %c0 = arith.constant 0 : index
    %c0_0 = arith.constant 0 : index
    %0 = vector.load %arg7[%c0, %c0_0] : memref<1x1024xf32, #tpu.memory_space<vmem>>, vector<1x32xf32>
    %c0_1 = arith.constant 0 : index
    %c128 = arith.constant 128 : index
    %1 = vector.load %arg7[%c0_1, %c128] : memref<1x1024xf32, #tpu.memory_space<vmem>>, vector<1x64xf32>
    %c0_2 = arith.constant 0 : index
    %c256 = arith.constant 256 : index
    %2 = vector.load %arg7[%c0_2, %c256] : memref<1x1024xf32, #tpu.memory_space<vmem>>, vector<1x64xf32>
    %c0_3 = arith.constant 0 : index
    %c384 = arith.constant 384 : index
    %3 = vector.load %arg7[%c0_3, %c384] : memref<1x1024xf32, #tpu.memory_space<vmem>>, vector<1x512xf32>
    %c0_4 = arith.constant 0 : index
    %c896 = arith.constant 896 : index
    %4 = vector.load %arg7[%c0_4, %c896] : memref<1x1024xf32, #tpu.memory_space<vmem>>, vector<1x128xf32>
    %c0_5 = arith.constant 0 : index
    %c0_6 = arith.constant 0 : index
    %5 = vector.load %arg1[%c0_5, %c0_6] : memref<1152x256xbf16, #tpu.memory_space<vmem>>, vector<1152x256xbf16>
    %c0_7 = arith.constant 0 : index
    %c0_8 = arith.constant 0 : index
    %6 = vector.load %arg2[%c0_7, %c0_8] : memref<256x32xbf16, #tpu.memory_space<vmem>>, vector<256x32xbf16>
    %cst = arith.constant dense<0.000000e+00> : vector<1152x32xf32>
    %7 = tpu.matmul %5, %6, %cst {dimension_numbers = #tpu.dot_dimension_numbers<[1], [0], [0], [1], [0, 0, 1, 1], [], []>} : vector<1152x256xbf16>, vector<256x32xbf16>, vector<1152x32xf32> -> vector<1152x32xf32>
    %8 = vector.broadcast %0 : vector<1x32xf32> to vector<1152x32xf32>
    %9 = arith.addf %7, %8 : vector<1152x32xf32>
    %cst_9 = arith.constant 0.000000e+00 : f32
    %10 = vector.broadcast %cst_9 : f32 to vector<1152x32xf32>
    %11 = arith.maximumf %9, %10 : vector<1152x32xf32>
    %12 = arith.truncf %11 : vector<1152x32xf32> to vector<1152x32xbf16>
    %13 = vector.extract_strided_slice %12 {offsets = [0, 0], sizes = [72, 32], strides = [1, 1]} : vector<1152x32xbf16> to vector<72x32xbf16>
    %14 = vector.extract_strided_slice %12 {offsets = [72, 0], sizes = [72, 32], strides = [1, 1]} : vector<1152x32xbf16> to vector<72x32xbf16>
    %15 = vector.extract_strided_slice %12 {offsets = [144, 0], sizes = [72, 32], strides = [1, 1]} : vector<1152x32xbf16> to vector<72x32xbf16>
    %16 = vector.extract_strided_slice %12 {offsets = [216, 0], sizes = [72, 32], strides = [1, 1]} : vector<1152x32xbf16> to vector<72x32xbf16>
    %17 = vector.extract_strided_slice %12 {offsets = [288, 0], sizes = [72, 32], strides = [1, 1]} : vector<1152x32xbf16> to vector<72x32xbf16>
    %18 = vector.extract_strided_slice %12 {offsets = [360, 0], sizes = [72, 32], strides = [1, 1]} : vector<1152x32xbf16> to vector<72x32xbf16>
    %19 = vector.extract_strided_slice %12 {offsets = [432, 0], sizes = [72, 32], strides = [1, 1]} : vector<1152x32xbf16> to vector<72x32xbf16>
    %20 = vector.extract_strided_slice %12 {offsets = [504, 0], sizes = [72, 32], strides = [1, 1]} : vector<1152x32xbf16> to vector<72x32xbf16>
    %21 = vector.extract_strided_slice %12 {offsets = [576, 0], sizes = [72, 32], strides = [1, 1]} : vector<1152x32xbf16> to vector<72x32xbf16>
    %22 = vector.extract_strided_slice %12 {offsets = [648, 0], sizes = [72, 32], strides = [1, 1]} : vector<1152x32xbf16> to vector<72x32xbf16>
    %23 = vector.extract_strided_slice %12 {offsets = [720, 0], sizes = [72, 32], strides = [1, 1]} : vector<1152x32xbf16> to vector<72x32xbf16>
    %24 = vector.extract_strided_slice %12 {offsets = [792, 0], sizes = [72, 32], strides = [1, 1]} : vector<1152x32xbf16> to vector<72x32xbf16>
    %25 = vector.extract_strided_slice %12 {offsets = [864, 0], sizes = [72, 32], strides = [1, 1]} : vector<1152x32xbf16> to vector<72x32xbf16>
    %26 = vector.extract_strided_slice %12 {offsets = [936, 0], sizes = [72, 32], strides = [1, 1]} : vector<1152x32xbf16> to vector<72x32xbf16>
    %27 = vector.extract_strided_slice %12 {offsets = [1008, 0], sizes = [72, 32], strides = [1, 1]} : vector<1152x32xbf16> to vector<72x32xbf16>
    %28 = vector.extract_strided_slice %12 {offsets = [1080, 0], sizes = [72, 32], strides = [1, 1]} : vector<1152x32xbf16> to vector<72x32xbf16>
    %29 = tpu.concatenate %13, %14, %15, %16, %17, %18, %19, %20, %21, %22, %23, %24, %25, %26, %27, %28 in 1 : vector<72x32xbf16>, vector<72x32xbf16>, vector<72x32xbf16>, vector<72x32xbf16>, vector<72x32xbf16>, vector<72x32xbf16>, vector<72x32xbf16>, vector<72x32xbf16>, vector<72x32xbf16>, vector<72x32xbf16>, vector<72x32xbf16>, vector<72x32xbf16>, vector<72x32xbf16>, vector<72x32xbf16>, vector<72x32xbf16>, vector<72x32xbf16> -> vector<72x512xbf16>
    %c0_10 = arith.constant 0 : index
    %c0_11 = arith.constant 0 : index
    %30 = vector.load %arg3[%c0_10, %c0_11] : memref<512x64xbf16, #tpu.memory_space<vmem>>, vector<512x64xbf16>
    %cst_12 = arith.constant dense<0.000000e+00> : vector<72x64xf32>
    %31 = tpu.matmul %29, %30, %cst_12 {dimension_numbers = #tpu.dot_dimension_numbers<[1], [0], [0], [1], [0, 0, 1, 1], [], []>} : vector<72x512xbf16>, vector<512x64xbf16>, vector<72x64xf32> -> vector<72x64xf32>
    %32 = vector.broadcast %1 : vector<1x64xf32> to vector<72x64xf32>
    %33 = arith.addf %31, %32 : vector<72x64xf32>
    %cst_13 = arith.constant 0.000000e+00 : f32
    %34 = vector.broadcast %cst_13 : f32 to vector<72x64xf32>
    %35 = arith.maximumf %33, %34 : vector<72x64xf32>
    %36 = arith.truncf %35 : vector<72x64xf32> to vector<72x64xbf16>
    %37 = vector.extract_strided_slice %36 {offsets = [0, 0], sizes = [8, 64], strides = [1, 1]} : vector<72x64xbf16> to vector<8x64xbf16>
    %38 = vector.extract_strided_slice %36 {offsets = [8, 0], sizes = [8, 64], strides = [1, 1]} : vector<72x64xbf16> to vector<8x64xbf16>
    %39 = vector.extract_strided_slice %36 {offsets = [16, 0], sizes = [8, 64], strides = [1, 1]} : vector<72x64xbf16> to vector<8x64xbf16>
    %40 = vector.extract_strided_slice %36 {offsets = [24, 0], sizes = [8, 64], strides = [1, 1]} : vector<72x64xbf16> to vector<8x64xbf16>
    %41 = vector.extract_strided_slice %36 {offsets = [32, 0], sizes = [8, 64], strides = [1, 1]} : vector<72x64xbf16> to vector<8x64xbf16>
    %42 = vector.extract_strided_slice %36 {offsets = [40, 0], sizes = [8, 64], strides = [1, 1]} : vector<72x64xbf16> to vector<8x64xbf16>
    %43 = vector.extract_strided_slice %36 {offsets = [48, 0], sizes = [8, 64], strides = [1, 1]} : vector<72x64xbf16> to vector<8x64xbf16>
    %44 = vector.extract_strided_slice %36 {offsets = [56, 0], sizes = [8, 64], strides = [1, 1]} : vector<72x64xbf16> to vector<8x64xbf16>
    %45 = vector.extract_strided_slice %36 {offsets = [64, 0], sizes = [8, 64], strides = [1, 1]} : vector<72x64xbf16> to vector<8x64xbf16>
    %46 = tpu.concatenate %37, %38, %39, %40, %41, %42, %43, %44, %45 in 1 : vector<8x64xbf16>, vector<8x64xbf16>, vector<8x64xbf16>, vector<8x64xbf16>, vector<8x64xbf16>, vector<8x64xbf16>, vector<8x64xbf16>, vector<8x64xbf16>, vector<8x64xbf16> -> vector<8x576xbf16>
    %c0_14 = arith.constant 0 : index
    %c0_15 = arith.constant 0 : index
    %47 = vector.load %arg4[%c0_14, %c0_15] : memref<576x64xbf16, #tpu.memory_space<vmem>>, vector<576x64xbf16>
    %cst_16 = arith.constant dense<0.000000e+00> : vector<8x64xf32>
    %48 = tpu.matmul %46, %47, %cst_16 {dimension_numbers = #tpu.dot_dimension_numbers<[1], [0], [0], [1], [0, 0, 1, 1], [], []>} : vector<8x576xbf16>, vector<576x64xbf16>, vector<8x64xf32> -> vector<8x64xf32>
    %49 = vector.broadcast %2 : vector<1x64xf32> to vector<8x64xf32>
    %50 = arith.addf %48, %49 : vector<8x64xf32>
    %cst_17 = arith.constant 0.000000e+00 : f32
    %51 = vector.broadcast %cst_17 : f32 to vector<8x64xf32>
    %52 = arith.maximumf %50, %51 : vector<8x64xf32>
    %53 = arith.truncf %52 : vector<8x64xf32> to vector<8x64xbf16>
    %c0_18 = arith.constant 0 : index
    %c0_19 = arith.constant 0 : index
    %54 = vector.load %arg5[%c0_18, %c0_19] : memref<64x512xbf16, #tpu.memory_space<vmem>>, vector<64x512xbf16>
    %cst_20 = arith.constant dense<0.000000e+00> : vector<8x512xf32>
    %55 = tpu.matmul %53, %54, %cst_20 {dimension_numbers = #tpu.dot_dimension_numbers<[1], [0], [0], [1], [0, 0, 1, 1], [], []>} : vector<8x64xbf16>, vector<64x512xbf16>, vector<8x512xf32> -> vector<8x512xf32>
    %56 = vector.broadcast %3 : vector<1x512xf32> to vector<8x512xf32>
    %57 = arith.addf %55, %56 : vector<8x512xf32>
    %cst_21 = arith.constant 0.000000e+00 : f32
    %58 = vector.broadcast %cst_21 : f32 to vector<8x512xf32>
    %59 = arith.maximumf %57, %58 : vector<8x512xf32>
    %60 = arith.truncf %59 : vector<8x512xf32> to vector<8x512xbf16>
    %c0_22 = arith.constant 0 : index
    %c0_23 = arith.constant 0 : index
    %61 = vector.load %arg6[%c0_22, %c0_23] : memref<512x128xbf16, #tpu.memory_space<vmem>>, vector<512x128xbf16>
    %cst_24 = arith.constant dense<0.000000e+00> : vector<8x128xf32>
    %62 = tpu.matmul %60, %61, %cst_24 {dimension_numbers = #tpu.dot_dimension_numbers<[1], [0], [0], [1], [0, 0, 1, 1], [], []>} : vector<8x512xbf16>, vector<512x128xbf16>, vector<8x128xf32> -> vector<8x128xf32>
    %63 = vector.broadcast %4 : vector<1x128xf32> to vector<8x128xf32>
    %64 = arith.addf %62, %63 : vector<8x128xf32>
    %c0_25 = arith.constant 0 : index
    %c0_26 = arith.constant 0 : index
    %65 = vector.load %arg8[%c0_25, %c0_26] : memref<8x128xf32, #tpu.memory_space<vmem>>, vector<8x128xf32>
    tpu.vector_store %arg8[%c0_25, %c0_26], %64 {strides = array<i32>} : memref<8x128xf32, #tpu.memory_space<vmem>>, vector<8x128xf32>,
    return
  }
  func.func @transform_0(%arg0: i32) -> (i32, i32) {
    %c0_i32 = arith.constant 0 : i32
    %c0_i32_0 = arith.constant 0 : i32
    return %arg0, %c0_i32 : i32, i32
  }
  func.func @transform_1(%arg0: i32) -> (i32, i32) {
    %c0_i32 = arith.constant 0 : i32
    %c0_i32_0 = arith.constant 0 : i32
    %c0_i32_1 = arith.constant 0 : i32
    return %c0_i32, %c0_i32_0 : i32, i32
  }
  func.func @transform_2(%arg0: i32) -> (i32, i32) {
    %c0_i32 = arith.constant 0 : i32
    %c0_i32_0 = arith.constant 0 : i32
    %c0_i32_1 = arith.constant 0 : i32
    return %c0_i32, %c0_i32_0 : i32, i32
  }
  func.func @transform_3(%arg0: i32) -> (i32, i32) {
    %c0_i32 = arith.constant 0 : i32
    %c0_i32_0 = arith.constant 0 : i32
    %c0_i32_1 = arith.constant 0 : i32
    return %c0_i32, %c0_i32_0 : i32, i32
  }
  func.func @transform_4(%arg0: i32) -> (i32, i32) {
    %c0_i32 = arith.constant 0 : i32
    %c0_i32_0 = arith.constant 0 : i32
    %c0_i32_1 = arith.constant 0 : i32
    return %c0_i32, %c0_i32_0 : i32, i32
  }
  func.func @transform_5(%arg0: i32) -> (i32, i32) {
    %c0_i32 = arith.constant 0 : i32
    %c0_i32_0 = arith.constant 0 : i32
    %c0_i32_1 = arith.constant 0 : i32
    return %c0_i32, %c0_i32_0 : i32, i32
  }
  func.func @transform_6(%arg0: i32) -> (i32, i32) {
    %c0_i32 = arith.constant 0 : i32
    %c0_i32_0 = arith.constant 0 : i32
    %c0_i32_1 = arith.constant 0 : i32
    return %c0_i32, %c0_i32_0 : i32, i32
  }
  func.func @transform_7(%arg0: i32) -> (i32, i32) {
    %c0_i32 = arith.constant 0 : i32
    %c0_i32_0 = arith.constant 0 : i32
    return %arg0, %c0_i32 : i32, i32
  }
}

</mosaic_0001>

<llo_original>
// kernel: dqn_forward.1
$region0: #{dqn_forward.1}
  #allocation0 [shape = 'u32[]', space=smem, size = 0x4, offset = 0x4, fixed_abs, tag = 'smem constant byte address 0x4 - core index']
  #allocation1 [shape = 'u32[144,128]{1,0:T(1,128)}', space=vmem, size = 0x12000, scoped, tag = 'internal scratch']
  %s0 = inlined_call_operand.vmem [shape: bf16[2304,256], index: 0, kind: input, shape index: {}]
  %s1 = inlined_call_operand.vmem [shape: bf16[256,32], index: 1, kind: input, shape index: {}]
  %s2 = inlined_call_operand.vmem [shape: bf16[512,64], index: 2, kind: input, shape index: {}]
  %s3 = inlined_call_operand.vmem [shape: bf16[576,64], index: 3, kind: input, shape index: {}]
  %s4 = inlined_call_operand.vmem [shape: bf16[64,512], index: 4, kind: input, shape index: {}]
  %s5 = inlined_call_operand.vmem [shape: bf16[512,128], index: 5, kind: input, shape index: {}]
  %s6 = inlined_call_operand.vmem [shape: f32[1,1024], index: 6, kind: input, shape index: {}]
  %s7 = inlined_call_operand.vmem [shape: f32[16,128], index: 7, kind: output, shape index: {}]
  %s8 = sld [smem:[#allocation0]]
  $region61: #{dqn_forward.1} parent=0
    _
  %s10 = ssub.s32 1, %s8
  %s11 = scalar_select 0, %s10, %s8
  loop: start=0, step=1, limit=4
  $region2: #{dqn_forward.1} parent=0 // loop_pre_header
    _
  $region3: #{dqn_forward.1} parent=0 // loop_header
    %s13 = sphi 0, %s17
    %p14 = scmp.ge.s32.totalorder %s13, 4
    %s23 = sphi 0, %s25
    %s26 = sphi 0, %s23
    %s27 = sphi 0, %s26
    %s43 = sphi 0, %s27
    %s47 = sphi 0, %s47
    %s49 = sphi 0, %s47
    %s50 = sphi 0, %s49
    %s64 = sphi 0, %s50
    %s68 = sphi 0, %s68
    %s70 = sphi 0, %s68
    %s71 = sphi 0, %s70
    %s85 = sphi 0, %s71
    %s89 = sphi 0, %s89
    %s91 = sphi 0, %s89
    %s92 = sphi 0, %s91
    %s106 = sphi 0, %s92
    %s110 = sphi 0, %s110
    %s112 = sphi 0, %s110
    %s113 = sphi 0, %s112
    %s127 = sphi 0, %s113
    %s131 = sphi 0, %s131
    %s133 = sphi 0, %s131
    %s134 = sphi 0, %s133
    %s148 = sphi 0, %s134
    %s152 = sphi 0, %s152
    %s154 = sphi 0, %s152
    %s155 = sphi 0, %s154
    %s169 = sphi 0, %s155
    %s175 = sphi 0, %s177
    %s178 = sphi 0, %s175
    %s179 = sphi 0, %s178
    %s195 = sphi 0, %s179
  $region4: #{dqn_forward.1} parent=0 // loop_header_branch
    %16 = sbr.rel (%p14) target = $region8
  $region5: #{dqn_forward.1} parent=0 // loop_body
    %s18 = ssub.s32 %s13, 1
    %s19 = ssub.s32 %s13, 2
    %s20 = sadd.s32 %s13, 1
    %s21 = ssub.s32 %s13, %s20
    %p22 = scmp.eq.s32.totalorder %s21, 0
    %s24 = sadd.s32 %s23, 1
    %s25 = scalar_select %p22, %s23, %s24
    %p28 = pneg %p22
    %p29 = scmp.eq.s32.totalorder %s13, 1
    %p30 = por %p28, %p29
    %p31 = scmp.ne.s32.totalorder %s23, %s26
    %p32 = scmp.eq.s32.totalorder %s13, 0
    %p33 = por %p31, %p32
    %p34 = scmp.ne.s32.totalorder %s23, %s26
    %p35 = scmp.eq.s32.totalorder %s18, 1
    %p36 = por %p34, %p35
    %p37 = scmp.ne.s32.totalorder %s26, %s27
    %p38 = scmp.eq.s32.totalorder %s18, 0
    %p39 = por %p37, %p38
    %p40 = scmp.ne.s32.totalorder %s26, %s27
    %p41 = scmp.eq.s32.totalorder %s19, 1
    %p42 = por %p40, %p41
    %p44 = scmp.ne.s32.totalorder %s27, %s43
    %p45 = scmp.eq.s32.totalorder %s19, 0
    %p46 = por %p44, %p45
    %s48 = sadd.s32 %s47, 1
    %p51 = scmp.eq.s32.totalorder %s13, 1
    %p52 = scmp.ne.s32.totalorder %s47, %s49
    %p53 = scmp.eq.s32.totalorder %s13, 0
    %p54 = por %p52, %p53
    %p55 = scmp.ne.s32.totalorder %s47, %s49
    %p56 = scmp.eq.s32.totalorder %s18, 1
    %p57 = por %p55, %p56
    %p58 = scmp.ne.s32.totalorder %s49, %s50
    %p59 = scmp.eq.s32.totalorder %s18, 0
    %p60 = por %p58, %p59
    %p61 = scmp.ne.s32.totalorder %s49, %s50
    %p62 = scmp.eq.s32.totalorder %s19, 1
    %p63 = por %p61, %p62
    %p65 = scmp.ne.s32.totalorder %s50, %s64
    %p66 = scmp.eq.s32.totalorder %s19, 0
    %p67 = por %p65, %p66
    %s69 = sadd.s32 %s68, 1
    %p72 = scmp.eq.s32.totalorder %s13, 1
    %p73 = scmp.ne.s32.totalorder %s68, %s70
    %p74 = scmp.eq.s32.totalorder %s13, 0
    %p75 = por %p73, %p74
    %p76 = scmp.ne.s32.totalorder %s68, %s70
    %p77 = scmp.eq.s32.totalorder %s18, 1
    %p78 = por %p76, %p77
    %p79 = scmp.ne.s32.totalorder %s70, %s71
    %p80 = scmp.eq.s32.totalorder %s18, 0
    %p81 = por %p79, %p80
    %p82 = scmp.ne.s32.totalorder %s70, %s71
    %p83 = scmp.eq.s32.totalorder %s19, 1
    %p84 = por %p82, %p83
    %p86 = scmp.ne.s32.totalorder %s71, %s85
    %p87 = scmp.eq.s32.totalorder %s19, 0
    %p88 = por %p86, %p87
    %s90 = sadd.s32 %s89, 1
    %p93 = scmp.eq.s32.totalorder %s13, 1
    %p94 = scmp.ne.s32.totalorder %s89, %s91
    %p95 = scmp.eq.s32.totalorder %s13, 0
    %p96 = por %p94, %p95
    %p97 = scmp.ne.s32.totalorder %s89, %s91
    %p98 = scmp.eq.s32.totalorder %s18, 1
    %p99 = por %p97, %p98
    %p100 = scmp.ne.s32.totalorder %s91, %s92
    %p101 = scmp.eq.s32.totalorder %s18, 0
    %p102 = por %p100, %p101
    %p103 = scmp.ne.s32.totalorder %s91, %s92
    %p104 = scmp.eq.s32.totalorder %s19, 1
    %p105 = por %p103, %p104
    %p107 = scmp.ne.s32.totalorder %s92, %s106
    %p108 = scmp.eq.s32.totalorder %s19, 0
    %p109 = por %p107, %p108
    %s111 = sadd.s32 %s110, 1
    %p114 = scmp.eq.s32.totalorder %s13, 1
    %p115 = scmp.ne.s32.totalorder %s110, %s112
    %p116 = scmp.eq.s32.totalorder %s13, 0
    %p117 = por %p115, %p116
    %p118 = scmp.ne.s32.totalorder %s110, %s112
    %p119 = scmp.eq.s32.totalorder %s18, 1
    %p120 = por %p118, %p119
    %p121 = scmp.ne.s32.totalorder %s112, %s113
    %p122 = scmp.eq.s32.totalorder %s18, 0
    %p123 = por %p121, %p122
    %p124 = scmp.ne.s32.totalorder %s112, %s113
    %p125 = scmp.eq.s32.totalorder %s19, 1
    %p126 = por %p124, %p125
    %p128 = scmp.ne.s32.totalorder %s113, %s127
    %p129 = scmp.eq.s32.totalorder %s19, 0
    %p130 = por %p128, %p129
    %s132 = sadd.s32 %s131, 1
    %p135 = scmp.eq.s32.totalorder %s13, 1
    %p136 = scmp.ne.s32.totalorder %s131, %s133
    %p137 = scmp.eq.s32.totalorder %s13, 0
    %p138 = por %p136, %p137
    %p139 = scmp.ne.s32.totalorder %s131, %s133
    %p140 = scmp.eq.s32.totalorder %s18, 1
    %p141 = por %p139, %p140
    %p142 = scmp.ne.s32.totalorder %s133, %s134
    %p143 = scmp.eq.s32.totalorder %s18, 0
    %p144 = por %p142, %p143
    %p145 = scmp.ne.s32.totalorder %s133, %s134
    %p146 = scmp.eq.s32.totalorder %s19, 1
    %p147 = por %p145, %p146
    %p149 = scmp.ne.s32.totalorder %s134, %s148
    %p150 = scmp.eq.s32.totalorder %s19, 0
    %p151 = por %p149, %p150
    %s153 = sadd.s32 %s152, 1
    %p156 = scmp.eq.s32.totalorder %s13, 1
    %p157 = scmp.ne.s32.totalorder %s152, %s154
    %p158 = scmp.eq.s32.totalorder %s13, 0
    %p159 = por %p157, %p158
    %p160 = scmp.ne.s32.totalorder %s152, %s154
    %p161 = scmp.eq.s32.totalorder %s18, 1
    %p162 = por %p160, %p161
    %p163 = scmp.ne.s32.totalorder %s154, %s155
    %p164 = scmp.eq.s32.totalorder %s18, 0
    %p165 = por %p163, %p164
    %p166 = scmp.ne.s32.totalorder %s154, %s155
    %p167 = scmp.eq.s32.totalorder %s19, 1
    %p168 = por %p166, %p167
    %p170 = scmp.ne.s32.totalorder %s155, %s169
    %p171 = scmp.eq.s32.totalorder %s19, 0
    %p172 = por %p170, %p171
    %s173 = ssub.s32 %s13, %s20
    %p174 = scmp.eq.s32.totalorder %s173, 0
    %s176 = sadd.s32 %s175, 1
    %s177 = scalar_select %p174, %s175, %s176
    %p180 = pneg %p174
    %p181 = scmp.eq.s32.totalorder %s13, 1
    %p182 = por %p180, %p181
    %p183 = scmp.ne.s32.totalorder %s175, %s178
    %p184 = scmp.eq.s32.totalorder %s13, 0
    %p185 = por %p183, %p184
    %p186 = scmp.ne.s32.totalorder %s175, %s178
    %p187 = scmp.eq.s32.totalorder %s18, 1
    %p188 = por %p186, %p187
    %p189 = scmp.ne.s32.totalorder %s178, %s179
    %p190 = scmp.eq.s32.totalorder %s18, 0
    %p191 = por %p189, %p190
    %p192 = scmp.ne.s32.totalorder %s178, %s179
    %p193 = scmp.eq.s32.totalorder %s19, 1
    %p194 = por %p192, %p193
    %p196 = scmp.ne.s32.totalorder %s179, %s195
    %p197 = scmp.eq.s32.totalorder %s19, 0
    %p198 = por %p196, %p197
    %p199 = scmp.le.s32.totalorder 1, %s13
    %p200 = scmp.lt.s32.totalorder %s13, 3
    %p201 = pnand %p199, %p200
    %p202 = pneg %p201
    // Predicated region
    $region9: #{dqn_forward.1} parent=5 // pred_check
      _
    $region10: #{dqn_forward.1} parent=5 // pred_check_branch
      %204 = sbr.rel (%p201) target = $region12
    $region11: #{dqn_forward.1} parent=5 // pred_region
      %s205 = ssub.s32 %s13, 1
      // Predicated region
      $region13: #{dqn_forward.1} parent=11 // pred_check
        %p206 = pneg %p60
      $region14: #{dqn_forward.1} parent=11 // pred_check_branch
        %208 = sbr.rel (%p206) target = $region16
      $region15: #{dqn_forward.1} parent=11 // pred_region
        _
      $region16: #{dqn_forward.1} parent=11 // pred_fallthru
        _
      // Predicated region
      $region17: #{dqn_forward.1} parent=11 // pred_check
        %p209 = pneg %p81
      $region18: #{dqn_forward.1} parent=11 // pred_check_branch
        %211 = sbr.rel (%p209) target = $region20
      $region19: #{dqn_forward.1} parent=11 // pred_region
        _
      $region20: #{dqn_forward.1} parent=11 // pred_fallthru
        _
      // Predicated region
      $region21: #{dqn_forward.1} parent=11 // pred_check
        %p212 = pneg %p102
      $region22: #{dqn_forward.1} parent=11 // pred_check_branch
        %214 = sbr.rel (%p212) target = $region24
      $region23: #{dqn_forward.1} parent=11 // pred_region
        _
      $region24: #{dqn_forward.1} parent=11 // pred_fallthru
        _
      // Predicated region
      $region25: #{dqn_forward.1} parent=11 // pred_check
        %p215 = pneg %p123
      $region26: #{dqn_forward.1} parent=11 // pred_check_branch
        %217 = sbr.rel (%p215) target = $region28
      $region27: #{dqn_forward.1} parent=11 // pred_region
        _
      $region28: #{dqn_forward.1} parent=11 // pred_fallthru
        _
      // Predicated region
      $region29: #{dqn_forward.1} parent=11 // pred_check
        %p218 = pneg %p144
      $region30: #{dqn_forward.1} parent=11 // pred_check_branch
        %220 = sbr.rel (%p218) target = $region32
      $region31: #{dqn_forward.1} parent=11 // pred_region
        _
      $region32: #{dqn_forward.1} parent=11 // pred_fallthru
        _
      // Predicated region
      $region33: #{dqn_forward.1} parent=11 // pred_check
        %p221 = pneg %p165
      $region34: #{dqn_forward.1} parent=11 // pred_check_branch
        %223 = sbr.rel (%p221) target = $region36
      $region35: #{dqn_forward.1} parent=11 // pred_region
        _
      $region36: #{dqn_forward.1} parent=11 // pred_fallthru
        _
    $region12: #{dqn_forward.1} parent=5 // pred_fallthru
      _
    %p224 = scmp.lt.s32.totalorder %s13, 2
    // Predicated region
    $region37: #{dqn_forward.1} parent=5 // pred_check
      %p225 = pneg %p224
    $region38: #{dqn_forward.1} parent=5 // pred_check_branch
      %227 = sbr.rel (%p225) target = $region40
    $region39: #{dqn_forward.1} parent=5 // pred_region
      // Predicated region
      $region41: #{dqn_forward.1} parent=39 // pred_check
        %p228 = pneg %p33
      $region42: #{dqn_forward.1} parent=39 // pred_check_branch
        %230 = sbr.rel (%p228) target = $region44
      $region43: #{dqn_forward.1} parent=39 // pred_region
        %s231 = smul.u32 144, %s13
        %p232 = scmp.lt.s32.totalorder %s231, 287
        %s233 = scalar_select %p232, %s231, 287
        %s234 = smul.addr %s233, 2
        %s235 = smul.addr %s234, 4
        %s236 = scalar_lea.vmem %s0, %s235
        %s237 = smul.u32 144, %s13
      $region44: #{dqn_forward.1} parent=39 // pred_fallthru
        _
    $region40: #{dqn_forward.1} parent=5 // pred_fallthru
      _
    %p238 = scmp.le.s32.totalorder 1, %s13
    %p239 = scmp.lt.s32.totalorder %s13, 3
    %p240 = pnand %p238, %p239
    %p241 = pneg %p240
    // Predicated region
    $region45: #{dqn_forward.1} parent=5 // pred_check
      _
    $region46: #{dqn_forward.1} parent=5 // pred_check_branch
      %243 = sbr.rel (%p240) target = $region48
    $region47: #{dqn_forward.1} parent=5 // pred_region
      %s244 = ssub.s32 %s13, 1
      %s245 = smul.u32 144, %s18
      %p246 = scmp.lt.s32.totalorder %s245, 287
      %s247 = scalar_select %p246, %s245, 287
      %s248 = smul.addr %s247, 2
      %s249 = smul.addr %s248, 4
      %s250 = scalar_lea.vmem %s0, %s249
      %p251 = pneg %p39
      %p252 = pneg %p36
      %p253 = pneg %p60
      %p254 = pneg %p57
      %p255 = pneg %p81
      %p256 = pneg %p78
      %p257 = pneg %p102
      %p258 = pneg %p99
      %p259 = pneg %p123
      %p260 = pneg %p120
      %p261 = pneg %p144
      %p262 = pneg %p141
      %p263 = pneg %p165
      %p264 = pneg %p162
      %p265 = pneg %p191
      %p266 = pneg %p188
      %p267 = scmp.lt.s32.totalorder %s18, 1
      %s268 = scalar_select %p267, %s18, 1
      %s269 = smul.addr %s268, 8
      %s270 = scalar_lea.vmem %s7, %s269
      %s271 = smul.u32 144, %s18
      %p272 = scmp.lt.s32.totalorder %s271, 287
      %s273 = scalar_select %p272, %s271, 287
      %s274 = smul.addr %s273, 2
      %s275 = smul.addr %s274, 4
      %s276 = scalar_lea.vmem %s0, %s275
      %s277 = smul.u32 144, %s18
      %p278 = scmp.lt.s32.totalorder %s18, 1
      %s279 = scalar_select %p278, %s18, 1
      %s280 = smul.addr %s279, 8
      %s281 = scalar_lea.vmem %s7, %s280
      %v283 = vld [vmem:[%s6] sm:$0x1]
      %v284 = vld [vmem:[%s6 + $0x1] sm:$0x1]
      %v285 = vld [vmem:[%s6 + $0x2] sm:$0x1]
      %v286 = vld [vmem:[%s6 + $0x3] sm:$0xf]
      %v287 = vld [vmem:[%s6 + $0x7] sm:$0x1]
      %v288 = vld [vmem:[%s276] sm:$0xff]
      %v289 = vld [vmem:[%s276 + $0x8] sm:$0xff]
      %v290 = vld [vmem:[%s276 + $0x10] sm:$0xff]
      %v291 = vld [vmem:[%s276 + $0x18] sm:$0xff]
      %v292 = vld [vmem:[%s276 + $0x20] sm:$0xff]
      %v293 = vld [vmem:[%s276 + $0x28] sm:$0xff]
      %v294 = vld [vmem:[%s276 + $0x30] sm:$0xff]
      %v295 = vld [vmem:[%s276 + $0x38] sm:$0xff]
      %v296 = vld [vmem:[%s276 + $0x40] sm:$0xff]
      %v297 = vld [vmem:[%s276 + $0x48] sm:$0xff]
      %v298 = vld [vmem:[%s276 + $0x50] sm:$0xff]
      %v299 = vld [vmem:[%s276 + $0x58] sm:$0xff]
      %v300 = vld [vmem:[%s276 + $0x60] sm:$0xff]
      %v301 = vld [vmem:[%s276 + $0x68] sm:$0xff]
      %v302 = vld [vmem:[%s276 + $0x70] sm:$0xff]
      %v303 = vld [vmem:[%s276 + $0x78] sm:$0xff]
      %v304 = vld [vmem:[%s276 + $0x80] sm:$0xff]
      %v305 = vld [vmem:[%s276 + $0x88] sm:$0xff]
      %v306 = vld [vmem:[%s276 + $0x90] sm:$0xff]
      %v307 = vld [vmem:[%s276 + $0x98] sm:$0xff]
      %v308 = vld [vmem:[%s276 + $0xa0] sm:$0xff]
      %v309 = vld [vmem:[%s276 + $0xa8] sm:$0xff]
      %v310 = vld [vmem:[%s276 + $0xb0] sm:$0xff]
      %v311 = vld [vmem:[%s276 + $0xb8] sm:$0xff]
      %v312 = vld [vmem:[%s276 + $0xc0] sm:$0xff]
      %v313 = vld [vmem:[%s276 + $0xc8] sm:$0xff]
      %v314 = vld [vmem:[%s276 + $0xd0] sm:$0xff]
      %v315 = vld [vmem:[%s276 + $0xd8] sm:$0xff]
      %v316 = vld [vmem:[%s276 + $0xe0] sm:$0xff]
      %v317 = vld [vmem:[%s276 + $0xe8] sm:$0xff]
      %v318 = vld [vmem:[%s276 + $0xf0] sm:$0xff]
      %v319 = vld [vmem:[%s276 + $0xf8] sm:$0xff]
      %v320 = vld [vmem:[%s276 + $0x100] sm:$0xff]
      %v321 = vld [vmem:[%s276 + $0x108] sm:$0xff]
      %v322 = vld [vmem:[%s276 + $0x110] sm:$0xff]
      %v323 = vld [vmem:[%s276 + $0x118] sm:$0xff]
      %v324 = vld [vmem:[%s276 + $0x120] sm:$0xff]
      %v325 = vld [vmem:[%s276 + $0x128] sm:$0xff]
      %v326 = vld [vmem:[%s276 + $0x130] sm:$0xff]
      %v327 = vld [vmem:[%s276 + $0x138] sm:$0xff]
      %v328 = vld [vmem:[%s276 + $0x140] sm:$0xff]
      %v329 = vld [vmem:[%s276 + $0x148] sm:$0xff]
      %v330 = vld [vmem:[%s276 + $0x150] sm:$0xff]
      %v331 = vld [vmem:[%s276 + $0x158] sm:$0xff]
      %v332 = vld [vmem:[%s276 + $0x160] sm:$0xff]
      %v333 = vld [vmem:[%s276 + $0x168] sm:$0xff]
      %v334 = vld [vmem:[%s276 + $0x170] sm:$0xff]
      %v335 = vld [vmem:[%s276 + $0x178] sm:$0xff]
      %v336 = vld [vmem:[%s276 + $0x180] sm:$0xff]
      %v337 = vld [vmem:[%s276 + $0x188] sm:$0xff]
      %v338 = vld [vmem:[%s276 + $0x190] sm:$0xff]
      %v339 = vld [vmem:[%s276 + $0x198] sm:$0xff]
      %v340 = vld [vmem:[%s276 + $0x1a0] sm:$0xff]
      %v341 = vld [vmem:[%s276 + $0x1a8] sm:$0xff]
      %v342 = vld [vmem:[%s276 + $0x1b0] sm:$0xff]
      %v343 = vld [vmem:[%s276 + $0x1b8] sm:$0xff]
      %v344 = vld [vmem:[%s276 + $0x1c0] sm:$0xff]
      %v345 = vld [vmem:[%s276 + $0x1c8] sm:$0xff]
      %v346 = vld [vmem:[%s276 + $0x1d0] sm:$0xff]
      %v347 = vld [vmem:[%s276 + $0x1d8] sm:$0xff]
      %v348 = vld [vmem:[%s276 + $0x1e0] sm:$0xff]
      %v349 = vld [vmem:[%s276 + $0x1e8] sm:$0xff]
      %v350 = vld [vmem:[%s276 + $0x1f0] sm:$0xff]
      %v351 = vld [vmem:[%s276 + $0x1f8] sm:$0xff]
      %v352 = vld [vmem:[%s276 + $0x200] sm:$0xff]
      %v353 = vld [vmem:[%s276 + $0x208] sm:$0xff]
      %v354 = vld [vmem:[%s276 + $0x210] sm:$0xff]
      %v355 = vld [vmem:[%s276 + $0x218] sm:$0xff]
      %v356 = vld [vmem:[%s276 + $0x220] sm:$0xff]
      %v357 = vld [vmem:[%s276 + $0x228] sm:$0xff]
      %v358 = vld [vmem:[%s276 + $0x230] sm:$0xff]
      %v359 = vld [vmem:[%s276 + $0x238] sm:$0xff]
      %v360 = vld [vmem:[%s276 + $0x240] sm:$0xff]
      %v361 = vld [vmem:[%s276 + $0x248] sm:$0xff]
      %v362 = vld [vmem:[%s276 + $0x250] sm:$0xff]
      %v363 = vld [vmem:[%s276 + $0x258] sm:$0xff]
      %v364 = vld [vmem:[%s276 + $0x260] sm:$0xff]
      %v365 = vld [vmem:[%s276 + $0x268] sm:$0xff]
      %v366 = vld [vmem:[%s276 + $0x270] sm:$0xff]
      %v367 = vld [vmem:[%s276 + $0x278] sm:$0xff]
      %v368 = vld [vmem:[%s276 + $0x280] sm:$0xff]
      %v369 = vld [vmem:[%s276 + $0x288] sm:$0xff]
      %v370 = vld [vmem:[%s276 + $0x290] sm:$0xff]
      %v371 = vld [vmem:[%s276 + $0x298] sm:$0xff]
      %v372 = vld [vmem:[%s276 + $0x2a0] sm:$0xff]
      %v373 = vld [vmem:[%s276 + $0x2a8] sm:$0xff]
      %v374 = vld [vmem:[%s276 + $0x2b0] sm:$0xff]
      %v375 = vld [vmem:[%s276 + $0x2b8] sm:$0xff]
      %v376 = vld [vmem:[%s276 + $0x2c0] sm:$0xff]
      %v377 = vld [vmem:[%s276 + $0x2c8] sm:$0xff]
      %v378 = vld [vmem:[%s276 + $0x2d0] sm:$0xff]
      %v379 = vld [vmem:[%s276 + $0x2d8] sm:$0xff]
      %v380 = vld [vmem:[%s276 + $0x2e0] sm:$0xff]
      %v381 = vld [vmem:[%s276 + $0x2e8] sm:$0xff]
      %v382 = vld [vmem:[%s276 + $0x2f0] sm:$0xff]
      %v383 = vld [vmem:[%s276 + $0x2f8] sm:$0xff]
      %v384 = vld [vmem:[%s276 + $0x300] sm:$0xff]
      %v385 = vld [vmem:[%s276 + $0x308] sm:$0xff]
      %v386 = vld [vmem:[%s276 + $0x310] sm:$0xff]
      %v387 = vld [vmem:[%s276 + $0x318] sm:$0xff]
      %v388 = vld [vmem:[%s276 + $0x320] sm:$0xff]
      %v389 = vld [vmem:[%s276 + $0x328] sm:$0xff]
      %v390 = vld [vmem:[%s276 + $0x330] sm:$0xff]
      %v391 = vld [vmem:[%s276 + $0x338] sm:$0xff]
      %v392 = vld [vmem:[%s276 + $0x340] sm:$0xff]
      %v393 = vld [vmem:[%s276 + $0x348] sm:$0xff]
      %v394 = vld [vmem:[%s276 + $0x350] sm:$0xff]
      %v395 = vld [vmem:[%s276 + $0x358] sm:$0xff]
      %v396 = vld [vmem:[%s276 + $0x360] sm:$0xff]
      %v397 = vld [vmem:[%s276 + $0x368] sm:$0xff]
      %v398 = vld [vmem:[%s276 + $0x370] sm:$0xff]
      %v399 = vld [vmem:[%s276 + $0x378] sm:$0xff]
      %v400 = vld [vmem:[%s276 + $0x380] sm:$0xff]
      %v401 = vld [vmem:[%s276 + $0x388] sm:$0xff]
      %v402 = vld [vmem:[%s276 + $0x390] sm:$0xff]
      %v403 = vld [vmem:[%s276 + $0x398] sm:$0xff]
      %v404 = vld [vmem:[%s276 + $0x3a0] sm:$0xff]
      %v405 = vld [vmem:[%s276 + $0x3a8] sm:$0xff]
      %v406 = vld [vmem:[%s276 + $0x3b0] sm:$0xff]
      %v407 = vld [vmem:[%s276 + $0x3b8] sm:$0xff]
      %v408 = vld [vmem:[%s276 + $0x3c0] sm:$0xff]
      %v409 = vld [vmem:[%s276 + $0x3c8] sm:$0xff]
      %v410 = vld [vmem:[%s276 + $0x3d0] sm:$0xff]
      %v411 = vld [vmem:[%s276 + $0x3d8] sm:$0xff]
      %v412 = vld [vmem:[%s276 + $0x3e0] sm:$0xff]
      %v413 = vld [vmem:[%s276 + $0x3e8] sm:$0xff]
      %v414 = vld [vmem:[%s276 + $0x3f0] sm:$0xff]
      %v415 = vld [vmem:[%s276 + $0x3f8] sm:$0xff]
      %v416 = vld [vmem:[%s276 + $0x400] sm:$0xff]
      %v417 = vld [vmem:[%s276 + $0x408] sm:$0xff]
      %v418 = vld [vmem:[%s276 + $0x410] sm:$0xff]
      %v419 = vld [vmem:[%s276 + $0x418] sm:$0xff]
      %v420 = vld [vmem:[%s276 + $0x420] sm:$0xff]
      %v421 = vld [vmem:[%s276 + $0x428] sm:$0xff]
      %v422 = vld [vmem:[%s276 + $0x430] sm:$0xff]
      %v423 = vld [vmem:[%s276 + $0x438] sm:$0xff]
      %v424 = vld [vmem:[%s276 + $0x440] sm:$0xff]
      %v425 = vld [vmem:[%s276 + $0x448] sm:$0xff]
      %v426 = vld [vmem:[%s276 + $0x450] sm:$0xff]
      %v427 = vld [vmem:[%s276 + $0x458] sm:$0xff]
      %v428 = vld [vmem:[%s276 + $0x460] sm:$0xff]
      %v429 = vld [vmem:[%s276 + $0x468] sm:$0xff]
      %v430 = vld [vmem:[%s276 + $0x470] sm:$0xff]
      %v431 = vld [vmem:[%s276 + $0x478] sm:$0xff]
      %v432 = vld [vmem:[%s1] sm:$0xf]
      %v433 = vld [vmem:[%s1 + $0x4] sm:$0xf]
      %v434 = vld [vmem:[%s1 + $0x8] sm:$0xf]
      %v435 = vld [vmem:[%s1 + $0xc] sm:$0xf]
      %v436 = vld [vmem:[%s1 + $0x10] sm:$0xf]
      %v437 = vld [vmem:[%s1 + $0x14] sm:$0xf]
      %v438 = vld [vmem:[%s1 + $0x18] sm:$0xf]
      %v439 = vld [vmem:[%s1 + $0x1c] sm:$0xf]
      %v440 = vld [vmem:[%s1 + $0x20] sm:$0xf]
      %v441 = vld [vmem:[%s1 + $0x24] sm:$0xf]
      %v442 = vld [vmem:[%s1 + $0x28] sm:$0xf]
      %v443 = vld [vmem:[%s1 + $0x2c] sm:$0xf]
      %v444 = vld [vmem:[%s1 + $0x30] sm:$0xf]
      %v445 = vld [vmem:[%s1 + $0x34] sm:$0xf]
      %v446 = vld [vmem:[%s1 + $0x38] sm:$0xf]
      %v447 = vld [vmem:[%s1 + $0x3c] sm:$0xf]
      %v448 = vld [vmem:[%s1 + $0x40] sm:$0xf]
      %v449 = vld [vmem:[%s1 + $0x44] sm:$0xf]
      %v450 = vld [vmem:[%s1 + $0x48] sm:$0xf]
      %v451 = vld [vmem:[%s1 + $0x4c] sm:$0xf]
      %v452 = vld [vmem:[%s1 + $0x50] sm:$0xf]
      %v453 = vld [vmem:[%s1 + $0x54] sm:$0xf]
      %v454 = vld [vmem:[%s1 + $0x58] sm:$0xf]
      %v455 = vld [vmem:[%s1 + $0x5c] sm:$0xf]
      %v456 = vld [vmem:[%s1 + $0x60] sm:$0xf]
      %v457 = vld [vmem:[%s1 + $0x64] sm:$0xf]
      %v458 = vld [vmem:[%s1 + $0x68] sm:$0xf]
      %v459 = vld [vmem:[%s1 + $0x6c] sm:$0xf]
      %v460 = vld [vmem:[%s1 + $0x70] sm:$0xf]
      %v461 = vld [vmem:[%s1 + $0x74] sm:$0xf]
      %v462 = vld [vmem:[%s1 + $0x78] sm:$0xf]
      %v463 = vld [vmem:[%s1 + $0x7c] sm:$0xf]
      %v465 = vlaneseq
      %v466 = vshrl.u32 %v465, 7
      %v467 = vsub.s32 0, %v466
      %v468 = vrot.slane %v283, %v467
      %v614 = vunpack.c.l.b16 %v288
      %v615 = vunpack.c.h.b16 %v288
      %v616 = vunpack.c.l.b16 %v289
      %v617 = vunpack.c.h.b16 %v289
      %v618 = vunpack.c.l.b16 %v290
      %v619 = vunpack.c.h.b16 %v290
      %v620 = vunpack.c.l.b16 %v291
      %v621 = vunpack.c.h.b16 %v291
      %v622 = vunpack.c.l.b16 %v292
      %v623 = vunpack.c.h.b16 %v292
      %v624 = vunpack.c.l.b16 %v293
      %v625 = vunpack.c.h.b16 %v293
      %v626 = vunpack.c.l.b16 %v294
      %v627 = vunpack.c.h.b16 %v294
      %v628 = vunpack.c.l.b16 %v295
      %v629 = vunpack.c.h.b16 %v295
      %v630 = vunpack.c.l.b16 %v296
      %v631 = vunpack.c.h.b16 %v296
      %v632 = vunpack.c.l.b16 %v297
      %v633 = vunpack.c.h.b16 %v297
      %v634 = vunpack.c.l.b16 %v298
      %v635 = vunpack.c.h.b16 %v298
      %v636 = vunpack.c.l.b16 %v299
      %v637 = vunpack.c.h.b16 %v299
      %v638 = vunpack.c.l.b16 %v300
      %v639 = vunpack.c.h.b16 %v300
      %v640 = vunpack.c.l.b16 %v301
      %v641 = vunpack.c.h.b16 %v301
      %v642 = vunpack.c.l.b16 %v302
      %v643 = vunpack.c.h.b16 %v302
      %v644 = vunpack.c.l.b16 %v303
      %v645 = vunpack.c.h.b16 %v303
      %v646 = vunpack.c.l.b16 %v304
      %v647 = vunpack.c.h.b16 %v304
      %v648 = vunpack.c.l.b16 %v305
      %v649 = vunpack.c.h.b16 %v305
      %v650 = vunpack.c.l.b16 %v306
      %v651 = vunpack.c.h.b16 %v306
      %v652 = vunpack.c.l.b16 %v307
      %v653 = vunpack.c.h.b16 %v307
      %v654 = vunpack.c.l.b16 %v308
      %v655 = vunpack.c.h.b16 %v308
      %v656 = vunpack.c.l.b16 %v309
      %v657 = vunpack.c.h.b16 %v309
      %v658 = vunpack.c.l.b16 %v310
      %v659 = vunpack.c.h.b16 %v310
      %v660 = vunpack.c.l.b16 %v311
      %v661 = vunpack.c.h.b16 %v311
      %v662 = vunpack.c.l.b16 %v312
      %v663 = vunpack.c.h.b16 %v312
      %v664 = vunpack.c.l.b16 %v313
      %v665 = vunpack.c.h.b16 %v313
      %v666 = vunpack.c.l.b16 %v314
      %v667 = vunpack.c.h.b16 %v314
      %v668 = vunpack.c.l.b16 %v315
      %v669 = vunpack.c.h.b16 %v315
      %v670 = vunpack.c.l.b16 %v316
      %v671 = vunpack.c.h.b16 %v316
      %v672 = vunpack.c.l.b16 %v317
      %v673 = vunpack.c.h.b16 %v317
      %v674 = vunpack.c.l.b16 %v318
      %v675 = vunpack.c.h.b16 %v318
      %v676 = vunpack.c.l.b16 %v319
      %v677 = vunpack.c.h.b16 %v319
      %v678 = vunpack.c.l.b16 %v320
      %v679 = vunpack.c.h.b16 %v320
      %v680 = vunpack.c.l.b16 %v321
      %v681 = vunpack.c.h.b16 %v321
      %v682 = vunpack.c.l.b16 %v322
      %v683 = vunpack.c.h.b16 %v322
      %v684 = vunpack.c.l.b16 %v323
      %v685 = vunpack.c.h.b16 %v323
      %v686 = vunpack.c.l.b16 %v324
      %v687 = vunpack.c.h.b16 %v324
      %v688 = vunpack.c.l.b16 %v325
      %v689 = vunpack.c.h.b16 %v325
      %v690 = vunpack.c.l.b16 %v326
      %v691 = vunpack.c.h.b16 %v326
      %v692 = vunpack.c.l.b16 %v327
      %v693 = vunpack.c.h.b16 %v327
      %v694 = vunpack.c.l.b16 %v328
      %v695 = vunpack.c.h.b16 %v328
      %v696 = vunpack.c.l.b16 %v329
      %v697 = vunpack.c.h.b16 %v329
      %v698 = vunpack.c.l.b16 %v330
      %v699 = vunpack.c.h.b16 %v330
      %v700 = vunpack.c.l.b16 %v331
      %v701 = vunpack.c.h.b16 %v331
      %v702 = vunpack.c.l.b16 %v332
      %v703 = vunpack.c.h.b16 %v332
      %v704 = vunpack.c.l.b16 %v333
      %v705 = vunpack.c.h.b16 %v333
      %v706 = vunpack.c.l.b16 %v334
      %v707 = vunpack.c.h.b16 %v334
      %v708 = vunpack.c.l.b16 %v335
      %v709 = vunpack.c.h.b16 %v335
      %v710 = vunpack.c.l.b16 %v336
      %v711 = vunpack.c.h.b16 %v336
      %v712 = vunpack.c.l.b16 %v337
      %v713 = vunpack.c.h.b16 %v337
      %v714 = vunpack.c.l.b16 %v338
      %v715 = vunpack.c.h.b16 %v338
      %v716 = vunpack.c.l.b16 %v339
      %v717 = vunpack.c.h.b16 %v339
      %v718 = vunpack.c.l.b16 %v340
      %v719 = vunpack.c.h.b16 %v340
      %v720 = vunpack.c.l.b16 %v341
      %v721 = vunpack.c.h.b16 %v341
      %v722 = vunpack.c.l.b16 %v342
      %v723 = vunpack.c.h.b16 %v342
      %v724 = vunpack.c.l.b16 %v343
      %v725 = vunpack.c.h.b16 %v343
      %v726 = vunpack.c.l.b16 %v344
      %v727 = vunpack.c.h.b16 %v344
      %v728 = vunpack.c.l.b16 %v345
      %v729 = vunpack.c.h.b16 %v345
      %v730 = vunpack.c.l.b16 %v346
      %v731 = vunpack.c.h.b16 %v346
      %v732 = vunpack.c.l.b16 %v347
      %v733 = vunpack.c.h.b16 %v347
      %v734 = vunpack.c.l.b16 %v348
      %v735 = vunpack.c.h.b16 %v348
      %v736 = vunpack.c.l.b16 %v349
      %v737 = vunpack.c.h.b16 %v349
      %v738 = vunpack.c.l.b16 %v350
      %v739 = vunpack.c.h.b16 %v350
      %v740 = vunpack.c.l.b16 %v351
      %v741 = vunpack.c.h.b16 %v351
      %v742 = vunpack.c.l.b16 %v352
      %v743 = vunpack.c.h.b16 %v352
      %v744 = vunpack.c.l.b16 %v353
      %v745 = vunpack.c.h.b16 %v353
      %v746 = vunpack.c.l.b16 %v354
      %v747 = vunpack.c.h.b16 %v354
      %v748 = vunpack.c.l.b16 %v355
      %v749 = vunpack.c.h.b16 %v355
      %v750 = vunpack.c.l.b16 %v356
      %v751 = vunpack.c.h.b16 %v356
      %v752 = vunpack.c.l.b16 %v357
      %v753 = vunpack.c.h.b16 %v357
      %v754 = vunpack.c.l.b16 %v358
      %v755 = vunpack.c.h.b16 %v358
      %v756 = vunpack.c.l.b16 %v359
      %v757 = vunpack.c.h.b16 %v359
      %v758 = vunpack.c.l.b16 %v360
      %v759 = vunpack.c.h.b16 %v360
      %v760 = vunpack.c.l.b16 %v361
      %v761 = vunpack.c.h.b16 %v361
      %v762 = vunpack.c.l.b16 %v362
      %v763 = vunpack.c.h.b16 %v362
      %v764 = vunpack.c.l.b16 %v363
      %v765 = vunpack.c.h.b16 %v363
      %v766 = vunpack.c.l.b16 %v364
      %v767 = vunpack.c.h.b16 %v364
      %v768 = vunpack.c.l.b16 %v365
      %v769 = vunpack.c.h.b16 %v365
      %v770 = vunpack.c.l.b16 %v366
      %v771 = vunpack.c.h.b16 %v366
      %v772 = vunpack.c.l.b16 %v367
      %v773 = vunpack.c.h.b16 %v367
      %v774 = vunpack.c.l.b16 %v368
      %v775 = vunpack.c.h.b16 %v368
      %v776 = vunpack.c.l.b16 %v369
      %v777 = vunpack.c.h.b16 %v369
      %v778 = vunpack.c.l.b16 %v370
      %v779 = vunpack.c.h.b16 %v370
      %v780 = vunpack.c.l.b16 %v371
      %v781 = vunpack.c.h.b16 %v371
      %v782 = vunpack.c.l.b16 %v372
      %v783 = vunpack.c.h.b16 %v372
      %v784 = vunpack.c.l.b16 %v373
      %v785 = vunpack.c.h.b16 %v373
      %v786 = vunpack.c.l.b16 %v374
      %v787 = vunpack.c.h.b16 %v374
      %v788 = vunpack.c.l.b16 %v375
      %v789 = vunpack.c.h.b16 %v375
      %v790 = vunpack.c.l.b16 %v376
      %v791 = vunpack.c.h.b16 %v376
      %v792 = vunpack.c.l.b16 %v377
      %v793 = vunpack.c.h.b16 %v377
      %v794 = vunpack.c.l.b16 %v378
      %v795 = vunpack.c.h.b16 %v378
      %v796 = vunpack.c.l.b16 %v379
      %v797 = vunpack.c.h.b16 %v379
      %v798 = vunpack.c.l.b16 %v380
      %v799 = vunpack.c.h.b16 %v380
      %v800 = vunpack.c.l.b16 %v381
      %v801 = vunpack.c.h.b16 %v381
      %v802 = vunpack.c.l.b16 %v382
      %v803 = vunpack.c.h.b16 %v382
      %v804 = vunpack.c.l.b16 %v383
      %v805 = vunpack.c.h.b16 %v383
      %v806 = vunpack.c.l.b16 %v384
      %v807 = vunpack.c.h.b16 %v384
      %v808 = vunpack.c.l.b16 %v385
      %v809 = vunpack.c.h.b16 %v385
      %v810 = vunpack.c.l.b16 %v386
      %v811 = vunpack.c.h.b16 %v386
      %v812 = vunpack.c.l.b16 %v387
      %v813 = vunpack.c.h.b16 %v387
      %v814 = vunpack.c.l.b16 %v388
      %v815 = vunpack.c.h.b16 %v388
      %v816 = vunpack.c.l.b16 %v389
      %v817 = vunpack.c.h.b16 %v389
      %v818 = vunpack.c.l.b16 %v390
      %v819 = vunpack.c.h.b16 %v390
      %v820 = vunpack.c.l.b16 %v391
      %v821 = vunpack.c.h.b16 %v391
      %v822 = vunpack.c.l.b16 %v392
      %v823 = vunpack.c.h.b16 %v392
      %v824 = vunpack.c.l.b16 %v393
      %v825 = vunpack.c.h.b16 %v393
      %v826 = vunpack.c.l.b16 %v394
      %v827 = vunpack.c.h.b16 %v394
      %v828 = vunpack.c.l.b16 %v395
      %v829 = vunpack.c.h.b16 %v395
      %v830 = vunpack.c.l.b16 %v396
      %v831 = vunpack.c.h.b16 %v396
      %v832 = vunpack.c.l.b16 %v397
      %v833 = vunpack.c.h.b16 %v397
      %v834 = vunpack.c.l.b16 %v398
      %v835 = vunpack.c.h.b16 %v398
      %v836 = vunpack.c.l.b16 %v399
      %v837 = vunpack.c.h.b16 %v399
      %v838 = vunpack.c.l.b16 %v400
      %v839 = vunpack.c.h.b16 %v400
      %v840 = vunpack.c.l.b16 %v401
      %v841 = vunpack.c.h.b16 %v401
      %v842 = vunpack.c.l.b16 %v402
      %v843 = vunpack.c.h.b16 %v402
      %v844 = vunpack.c.l.b16 %v403
      %v845 = vunpack.c.h.b16 %v403
      %v846 = vunpack.c.l.b16 %v404
      %v847 = vunpack.c.h.b16 %v404
      %v848 = vunpack.c.l.b16 %v405
      %v849 = vunpack.c.h.b16 %v405
      %v850 = vunpack.c.l.b16 %v406
      %v851 = vunpack.c.h.b16 %v406
      %v852 = vunpack.c.l.b16 %v407
      %v853 = vunpack.c.h.b16 %v407
      %v854 = vunpack.c.l.b16 %v408
      %v855 = vunpack.c.h.b16 %v408
      %v856 = vunpack.c.l.b16 %v409
      %v857 = vunpack.c.h.b16 %v409
      %v858 = vunpack.c.l.b16 %v410
      %v859 = vunpack.c.h.b16 %v410
      %v860 = vunpack.c.l.b16 %v411
      %v861 = vunpack.c.h.b16 %v411
      %v862 = vunpack.c.l.b16 %v412
      %v863 = vunpack.c.h.b16 %v412
      %v864 = vunpack.c.l.b16 %v413
      %v865 = vunpack.c.h.b16 %v413
      %v866 = vunpack.c.l.b16 %v414
      %v867 = vunpack.c.h.b16 %v414
      %v868 = vunpack.c.l.b16 %v415
      %v869 = vunpack.c.h.b16 %v415
      %v870 = vunpack.c.l.b16 %v416
      %v871 = vunpack.c.h.b16 %v416
      %v872 = vunpack.c.l.b16 %v417
      %v873 = vunpack.c.h.b16 %v417
      %v874 = vunpack.c.l.b16 %v418
      %v875 = vunpack.c.h.b16 %v418
      %v876 = vunpack.c.l.b16 %v419
      %v877 = vunpack.c.h.b16 %v419
      %v878 = vunpack.c.l.b16 %v420
      %v879 = vunpack.c.h.b16 %v420
      %v880 = vunpack.c.l.b16 %v421
      %v881 = vunpack.c.h.b16 %v421
      %v882 = vunpack.c.l.b16 %v422
      %v883 = vunpack.c.h.b16 %v422
      %v884 = vunpack.c.l.b16 %v423
      %v885 = vunpack.c.h.b16 %v423
      %v886 = vunpack.c.l.b16 %v424
      %v887 = vunpack.c.h.b16 %v424
      %v888 = vunpack.c.l.b16 %v425
      %v889 = vunpack.c.h.b16 %v425
      %v890 = vunpack.c.l.b16 %v426
      %v891 = vunpack.c.h.b16 %v426
      %v892 = vunpack.c.l.b16 %v427
      %v893 = vunpack.c.h.b16 %v427
      %v894 = vunpack.c.l.b16 %v428
      %v895 = vunpack.c.h.b16 %v428
      %v896 = vunpack.c.l.b16 %v429
      %v897 = vunpack.c.h.b16 %v429
      %v898 = vunpack.c.l.b16 %v430
      %v899 = vunpack.c.h.b16 %v430
      %v900 = vunpack.c.l.b16 %v431
      %v901 = vunpack.c.h.b16 %v431
      %v902 = vpack.c.b16 %v616, %v614
      %v903 = vpack.c.b16 %v617, %v615
      %v904 = vpack.c.b16 %v620, %v618
      %v905 = vpack.c.b16 %v621, %v619
      %v906 = vpack.c.b16 %v624, %v622
      %v907 = vpack.c.b16 %v625, %v623
      %v908 = vpack.c.b16 %v628, %v626
      %v909 = vpack.c.b16 %v629, %v627
      %v910 = vpack.c.b16 %v632, %v630
      %v911 = vpack.c.b16 %v633, %v631
      %v912 = vpack.c.b16 %v636, %v634
      %v913 = vpack.c.b16 %v637, %v635
      %v914 = vpack.c.b16 %v640, %v638
      %v915 = vpack.c.b16 %v641, %v639
      %v916 = vpack.c.b16 %v644, %v642
      %v917 = vpack.c.b16 %v645, %v643
      %v918 = vpack.c.b16 %v648, %v646
      %v919 = vpack.c.b16 %v649, %v647
      %v920 = vpack.c.b16 %v652, %v650
      %v921 = vpack.c.b16 %v653, %v651
      %v922 = vpack.c.b16 %v656, %v654
      %v923 = vpack.c.b16 %v657, %v655
      %v924 = vpack.c.b16 %v660, %v658
      %v925 = vpack.c.b16 %v661, %v659
      %v926 = vpack.c.b16 %v664, %v662
      %v927 = vpack.c.b16 %v665, %v663
      %v928 = vpack.c.b16 %v668, %v666
      %v929 = vpack.c.b16 %v669, %v667
      %v930 = vpack.c.b16 %v672, %v670
      %v931 = vpack.c.b16 %v673, %v671
      %v932 = vpack.c.b16 %v676, %v674
      %v933 = vpack.c.b16 %v677, %v675
      %v934 = vpack.c.b16 %v680, %v678
      %v935 = vpack.c.b16 %v681, %v679
      %v936 = vpack.c.b16 %v684, %v682
      %v937 = vpack.c.b16 %v685, %v683
      %v938 = vpack.c.b16 %v688, %v686
      %v939 = vpack.c.b16 %v689, %v687
      %v940 = vpack.c.b16 %v692, %v690
      %v941 = vpack.c.b16 %v693, %v691
      %v942 = vpack.c.b16 %v696, %v694
      %v943 = vpack.c.b16 %v697, %v695
      %v944 = vpack.c.b16 %v700, %v698
      %v945 = vpack.c.b16 %v701, %v699
      %v946 = vpack.c.b16 %v704, %v702
      %v947 = vpack.c.b16 %v705, %v703
      %v948 = vpack.c.b16 %v708, %v706
      %v949 = vpack.c.b16 %v709, %v707
      %v950 = vpack.c.b16 %v712, %v710
      %v951 = vpack.c.b16 %v713, %v711
      %v952 = vpack.c.b16 %v716, %v714
      %v953 = vpack.c.b16 %v717, %v715
      %v954 = vpack.c.b16 %v720, %v718
      %v955 = vpack.c.b16 %v721, %v719
      %v956 = vpack.c.b16 %v724, %v722
      %v957 = vpack.c.b16 %v725, %v723
      %v958 = vpack.c.b16 %v728, %v726
      %v959 = vpack.c.b16 %v729, %v727
      %v960 = vpack.c.b16 %v732, %v730
      %v961 = vpack.c.b16 %v733, %v731
      %v962 = vpack.c.b16 %v736, %v734
      %v963 = vpack.c.b16 %v737, %v735
      %v964 = vpack.c.b16 %v740, %v738
      %v965 = vpack.c.b16 %v741, %v739
      %v966 = vpack.c.b16 %v744, %v742
      %v967 = vpack.c.b16 %v745, %v743
      %v968 = vpack.c.b16 %v748, %v746
      %v969 = vpack.c.b16 %v749, %v747
      %v970 = vpack.c.b16 %v752, %v750
      %v971 = vpack.c.b16 %v753, %v751
      %v972 = vpack.c.b16 %v756, %v754
      %v973 = vpack.c.b16 %v757, %v755
      %v974 = vpack.c.b16 %v760, %v758
      %v975 = vpack.c.b16 %v761, %v759
      %v976 = vpack.c.b16 %v764, %v762
      %v977 = vpack.c.b16 %v765, %v763
      %v978 = vpack.c.b16 %v768, %v766
      %v979 = vpack.c.b16 %v769, %v767
      %v980 = vpack.c.b16 %v772, %v770
      %v981 = vpack.c.b16 %v773, %v771
      %v982 = vpack.c.b16 %v776, %v774
      %v983 = vpack.c.b16 %v777, %v775
      %v984 = vpack.c.b16 %v780, %v778
      %v985 = vpack.c.b16 %v781, %v779
      %v986 = vpack.c.b16 %v784, %v782
      %v987 = vpack.c.b16 %v785, %v783
      %v988 = vpack.c.b16 %v788, %v786
      %v989 = vpack.c.b16 %v789, %v787
      %v990 = vpack.c.b16 %v792, %v790
      %v991 = vpack.c.b16 %v793, %v791
      %v992 = vpack.c.b16 %v796, %v794
      %v993 = vpack.c.b16 %v797, %v795
      %v994 = vpack.c.b16 %v800, %v798
      %v995 = vpack.c.b16 %v801, %v799
      %v996 = vpack.c.b16 %v804, %v802
      %v997 = vpack.c.b16 %v805, %v803
      %v998 = vpack.c.b16 %v808, %v806
      %v999 = vpack.c.b16 %v809, %v807
      %v1000 = vpack.c.b16 %v812, %v810
      %v1001 = vpack.c.b16 %v813, %v811
      %v1002 = vpack.c.b16 %v816, %v814
      %v1003 = vpack.c.b16 %v817, %v815
      %v1004 = vpack.c.b16 %v820, %v818
      %v1005 = vpack.c.b16 %v821, %v819
      %v1006 = vpack.c.b16 %v824, %v822
      %v1007 = vpack.c.b16 %v825, %v823
      %v1008 = vpack.c.b16 %v828, %v826
      %v1009 = vpack.c.b16 %v829, %v827
      %v1010 = vpack.c.b16 %v832, %v830
      %v1011 = vpack.c.b16 %v833, %v831
      %v1012 = vpack.c.b16 %v836, %v834
      %v1013 = vpack.c.b16 %v837, %v835
      %v1014 = vpack.c.b16 %v840, %v838
      %v1015 = vpack.c.b16 %v841, %v839
      %v1016 = vpack.c.b16 %v844, %v842
      %v1017 = vpack.c.b16 %v845, %v843
      %v1018 = vpack.c.b16 %v848, %v846
      %v1019 = vpack.c.b16 %v849, %v847
      %v1020 = vpack.c.b16 %v852, %v850
      %v1021 = vpack.c.b16 %v853, %v851
      %v1022 = vpack.c.b16 %v856, %v854
      %v1023 = vpack.c.b16 %v857, %v855
      %v1024 = vpack.c.b16 %v860, %v858
      %v1025 = vpack.c.b16 %v861, %v859
      %v1026 = vpack.c.b16 %v864, %v862
      %v1027 = vpack.c.b16 %v865, %v863
      %v1028 = vpack.c.b16 %v868, %v866
      %v1029 = vpack.c.b16 %v869, %v867
      %v1030 = vpack.c.b16 %v872, %v870
      %v1031 = vpack.c.b16 %v873, %v871
      %v1032 = vpack.c.b16 %v876, %v874
      %v1033 = vpack.c.b16 %v877, %v875
      %v1034 = vpack.c.b16 %v880, %v878
      %v1035 = vpack.c.b16 %v881, %v879
      %v1036 = vpack.c.b16 %v884, %v882
      %v1037 = vpack.c.b16 %v885, %v883
      %v1038 = vpack.c.b16 %v888, %v886
      %v1039 = vpack.c.b16 %v889, %v887
      %v1040 = vpack.c.b16 %v892, %v890
      %v1041 = vpack.c.b16 %v893, %v891
      %v1042 = vpack.c.b16 %v896, %v894
      %v1043 = vpack.c.b16 %v897, %v895
      %v1044 = vpack.c.b16 %v900, %v898
      %v1045 = vpack.c.b16 %v901, %v899
      %v1222 = vunpack.c.l.b16 %v432
      %v1223 = vunpack.c.l.b16 %v433
      %v1224 = vunpack.c.l.b16 %v434
      %v1225 = vunpack.c.l.b16 %v435
      %v1226 = vunpack.c.l.b16 %v436
      %v1227 = vunpack.c.l.b16 %v437
      %v1228 = vunpack.c.l.b16 %v438
      %v1229 = vunpack.c.l.b16 %v439
      %v1230 = vunpack.c.l.b16 %v440
      %v1231 = vunpack.c.l.b16 %v441
      %v1232 = vunpack.c.l.b16 %v442
      %v1233 = vunpack.c.l.b16 %v443
      %v1234 = vunpack.c.l.b16 %v444
      %v1235 = vunpack.c.l.b16 %v445
      %v1236 = vunpack.c.l.b16 %v446
      %v1237 = vunpack.c.l.b16 %v447
      %v1238 = vunpack.c.l.b16 %v448
      %v1239 = vunpack.c.l.b16 %v449
      %v1240 = vunpack.c.l.b16 %v450
      %v1241 = vunpack.c.l.b16 %v451
      %v1242 = vunpack.c.l.b16 %v452
      %v1243 = vunpack.c.l.b16 %v453
      %v1244 = vunpack.c.l.b16 %v454
      %v1245 = vunpack.c.l.b16 %v455
      %v1246 = vunpack.c.l.b16 %v456
      %v1247 = vunpack.c.l.b16 %v457
      %v1248 = vunpack.c.l.b16 %v458
      %v1249 = vunpack.c.l.b16 %v459
      %v1250 = vunpack.c.l.b16 %v460
      %v1251 = vunpack.c.l.b16 %v461
      %v1252 = vunpack.c.l.b16 %v462
      %v1253 = vunpack.c.l.b16 %v463
      %v1254 = vpack.c.b16 %v1223, %v1222
      %v1255 = vpack.c.b16 %v1225, %v1224
      %v1256 = vpack.c.b16 %v1227, %v1226
      %v1257 = vpack.c.b16 %v1229, %v1228
      %v1258 = vpack.c.b16 %v1231, %v1230
      %v1259 = vpack.c.b16 %v1233, %v1232
      %v1260 = vpack.c.b16 %v1235, %v1234
      %v1261 = vpack.c.b16 %v1237, %v1236
      %v1262 = vpack.c.b16 %v1239, %v1238
      %v1263 = vpack.c.b16 %v1241, %v1240
      %v1264 = vpack.c.b16 %v1243, %v1242
      %v1265 = vpack.c.b16 %v1245, %v1244
      %v1266 = vpack.c.b16 %v1247, %v1246
      %v1267 = vpack.c.b16 %v1249, %v1248
      %v1268 = vpack.c.b16 %v1251, %v1250
      %v1269 = vpack.c.b16 %v1253, %v1252
      %1286 = vmatprep.subr.bf16.mxu0 0
      %1287 = vmatpush1.bf16.msra.mxu0 %v1254
      %1288 = vmatprep.subr.bf16.mxu0 0
      %1289 = vmatpush1.bf16.msra.mxu0 %v1255
      %1290 = vmatprep.subr.bf16.mxu0 0
      %1291 = vmatpush1.bf16.msra.mxu0 %v1256
      %1292 = vmatprep.subr.bf16.mxu0 0
      %1293 = vmatpush1.bf16.msra.mxu0 %v1257
      %1294 = vmatprep.subr.bf16.mxu0 0
      %1295 = vmatpush1.bf16.msra.mxu0 %v1258
      %1296 = vmatprep.subr.bf16.mxu0 0
      %1297 = vmatpush1.bf16.msra.mxu0 %v1259
      %1298 = vmatprep.subr.bf16.mxu0 0
      %1299 = vmatpush1.bf16.msra.mxu0 %v1260
      %1300 = vmatprep.subr.bf16.mxu0 0
      %1301 = vmatpush1.bf16.msra.mxu0 %v1261
      %1302 = vmatprep.subr.bf16.mxu0 0
      %1303 = vmatpush1.bf16.msra.mxu0 %v1262
      %1304 = vmatprep.subr.bf16.mxu0 0
      %1305 = vmatpush1.bf16.msra.mxu0 %v1263
      %1306 = vmatprep.subr.bf16.mxu0 0
      %1307 = vmatpush1.bf16.msra.mxu0 %v1264
      %1308 = vmatprep.subr.bf16.mxu0 0
      %1309 = vmatpush1.bf16.msra.mxu0 %v1265
      %1310 = vmatprep.subr.bf16.mxu0 0
      %1311 = vmatpush1.bf16.msra.mxu0 %v1266
      %1312 = vmatprep.subr.bf16.mxu0 0
      %1313 = vmatpush1.bf16.msra.mxu0 %v1267
      %1314 = vmatprep.subr.bf16.mxu0 0
      %1315 = vmatpush1.bf16.msra.mxu0 %v1268
      %1316 = vmatprep.subr.bf16.mxu0 0
      %1317 = vmatpush1.bf16.msra.mxu0 %v1269
      %1318 = vmatprep.mubr.bf16.mxu0 %v903
      %1319 = vmatmul.mubr.bf16.gmra.mrb[0].mxu0 %v902
      %v1320 = vpop.f32.mrb[0].mxu0
      %v1321 = vadd.f32 %v468, %v1320
      %v1322 = vpop.f32.mrb[0].mxu0
      %v1323 = vpop.f32.mrb[0].mxu0
      %v1324 = vadd.f32 %v468, %v1323
      %v1325 = vpop.f32.mrb[0].mxu0
      %1326 = vmatprep.mubr.bf16.mxu0 %v905
      %1327 = vmatmul.mubr.bf16.gmra.mrb[0].mxu0 %v904
      %v1328 = vpop.f32.mrb[0].mxu0
      %v1329 = vadd.f32 %v468, %v1328
      %v1330 = vpop.f32.mrb[0].mxu0
      %v1331 = vpop.f32.mrb[0].mxu0
      %v1332 = vadd.f32 %v468, %v1331
      %v1333 = vpop.f32.mrb[0].mxu0
      %1334 = vmatprep.mubr.bf16.mxu0 %v907
      %1335 = vmatmul.mubr.bf16.gmra.mrb[0].mxu0 %v906
      %v1336 = vpop.f32.mrb[0].mxu0
      %v1337 = vadd.f32 %v468, %v1336
      %v1338 = vpop.f32.mrb[0].mxu0
      %v1339 = vpop.f32.mrb[0].mxu0
      %v1340 = vadd.f32 %v468, %v1339
      %v1341 = vpop.f32.mrb[0].mxu0
      %1342 = vmatprep.mubr.bf16.mxu0 %v909
      %1343 = vmatmul.mubr.bf16.gmra.mrb[0].mxu0 %v908
      %v1344 = vpop.f32.mrb[0].mxu0
      %v1345 = vadd.f32 %v468, %v1344
      %v1346 = vpop.f32.mrb[0].mxu0
      %v1347 = vpop.f32.mrb[0].mxu0
      %v1348 = vadd.f32 %v468, %v1347
      %v1349 = vpop.f32.mrb[0].mxu0
      %1350 = vmatprep.mubr.bf16.mxu0 %v911
      %1351 = vmatmul.mubr.bf16.gmra.mrb[0].mxu0 %v910
      %v1352 = vpop.f32.mrb[0].mxu0
      %v1353 = vadd.f32 %v468, %v1352
      %v1354 = vpop.f32.mrb[0].mxu0
      %v1355 = vpop.f32.mrb[0].mxu0
      %v1356 = vadd.f32 %v468, %v1355
      %v1357 = vpop.f32.mrb[0].mxu0
      %1358 = vmatprep.mubr.bf16.mxu0 %v913
      %1359 = vmatmul.mubr.bf16.gmra.mrb[0].mxu0 %v912
      %v1360 = vpop.f32.mrb[0].mxu0
      %v1361 = vadd.f32 %v468, %v1360
      %v1362 = vpop.f32.mrb[0].mxu0
      %v1363 = vpop.f32.mrb[0].mxu0
      %v1364 = vadd.f32 %v468, %v1363
      %v1365 = vpop.f32.mrb[0].mxu0
      %1366 = vmatprep.mubr.bf16.mxu0 %v915
      %1367 = vmatmul.mubr.bf16.gmra.mrb[0].mxu0 %v914
      %v1368 = vpop.f32.mrb[0].mxu0
      %v1369 = vadd.f32 %v468, %v1368
      %v1370 = vpop.f32.mrb[0].mxu0
      %v1371 = vpop.f32.mrb[0].mxu0
      %v1372 = vadd.f32 %v468, %v1371
      %v1373 = vpop.f32.mrb[0].mxu0
      %1374 = vmatprep.mubr.bf16.mxu0 %v917
      %1375 = vmatmul.mubr.bf16.gmra.mrb[0].mxu0 %v916
      %v1376 = vpop.f32.mrb[0].mxu0
      %v1377 = vadd.f32 %v468, %v1376
      %v1378 = vpop.f32.mrb[0].mxu0
      %v1379 = vpop.f32.mrb[0].mxu0
      %v1380 = vadd.f32 %v468, %v1379
      %v1381 = vpop.f32.mrb[0].mxu0
      %1382 = vmatprep.mubr.bf16.mxu0 %v919
      %1383 = vmatmul.mubr.bf16.gmra.mrb[0].mxu0 %v918
      %v1384 = vpop.f32.mrb[0].mxu0
      %v1385 = vadd.f32 %v468, %v1384
      %v1386 = vpop.f32.mrb[0].mxu0
      %v1387 = vpop.f32.mrb[0].mxu0
      %v1388 = vadd.f32 %v468, %v1387
      %v1389 = vpop.f32.mrb[0].mxu0
      %1390 = vmatprep.mubr.bf16.mxu0 %v921
      %1391 = vmatmul.mubr.bf16.gmra.mrb[0].mxu0 %v920
      %v1392 = vpop.f32.mrb[0].mxu0
      %v1393 = vadd.f32 %v468, %v1392
      %v1394 = vpop.f32.mrb[0].mxu0
      %v1395 = vpop.f32.mrb[0].mxu0
      %v1396 = vadd.f32 %v468, %v1395
      %v1397 = vpop.f32.mrb[0].mxu0
      %1398 = vmatprep.mubr.bf16.mxu0 %v923
      %1399 = vmatmul.mubr.bf16.gmra.mrb[0].mxu0 %v922
      %v1400 = vpop.f32.mrb[0].mxu0
      %v1401 = vadd.f32 %v468, %v1400
      %v1402 = vpop.f32.mrb[0].mxu0
      %v1403 = vpop.f32.mrb[0].mxu0
      %v1404 = vadd.f32 %v468, %v1403
      %v1405 = vpop.f32.mrb[0].mxu0
      %1406 = vmatprep.mubr.bf16.mxu0 %v925
      %1407 = vmatmul.mubr.bf16.gmra.mrb[0].mxu0 %v924
      %v1408 = vpop.f32.mrb[0].mxu0
      %v1409 = vadd.f32 %v468, %v1408
      %v1410 = vpop.f32.mrb[0].mxu0
      %v1411 = vpop.f32.mrb[0].mxu0
      %v1412 = vadd.f32 %v468, %v1411
      %v1413 = vpop.f32.mrb[0].mxu0
      %1414 = vmatprep.mubr.bf16.mxu0 %v927
      %1415 = vmatmul.mubr.bf16.gmra.mrb[0].mxu0 %v926
      %v1416 = vpop.f32.mrb[0].mxu0
      %v1417 = vadd.f32 %v468, %v1416
      %v1418 = vpop.f32.mrb[0].mxu0
      %v1419 = vpop.f32.mrb[0].mxu0
      %v1420 = vadd.f32 %v468, %v1419
      %v1421 = vpop.f32.mrb[0].mxu0
      %1422 = vmatprep.mubr.bf16.mxu0 %v929
      %1423 = vmatmul.mubr.bf16.gmra.mrb[0].mxu0 %v928
      %v1424 = vpop.f32.mrb[0].mxu0
      %v1425 = vadd.f32 %v468, %v1424
      %v1426 = vpop.f32.mrb[0].mxu0
      %v1427 = vpop.f32.mrb[0].mxu0
      %v1428 = vadd.f32 %v468, %v1427
      %v1429 = vpop.f32.mrb[0].mxu0
      %1430 = vmatprep.mubr.bf16.mxu0 %v931
      %1431 = vmatmul.mubr.bf16.gmra.mrb[0].mxu0 %v930
      %v1432 = vpop.f32.mrb[0].mxu0
      %v1433 = vadd.f32 %v468, %v1432
      %v1434 = vpop.f32.mrb[0].mxu0
      %v1435 = vpop.f32.mrb[0].mxu0
      %v1436 = vadd.f32 %v468, %v1435
      %v1437 = vpop.f32.mrb[0].mxu0
      %1438 = vmatprep.mubr.bf16.mxu0 %v933
      %1439 = vmatmul.mubr.bf16.gmra.mrb[0].mxu0 %v932
      %v1440 = vpop.f32.mrb[0].mxu0
      %v1441 = vadd.f32 %v468, %v1440
      %v1442 = vpop.f32.mrb[0].mxu0
      %v1443 = vpop.f32.mrb[0].mxu0
      %v1444 = vadd.f32 %v468, %v1443
      %v1445 = vpop.f32.mrb[0].mxu0
      %1446 = vmatprep.mubr.bf16.mxu0 %v935
      %1447 = vmatmul.mubr.bf16.gmra.mrb[0].mxu0 %v934
      %v1448 = vpop.f32.mrb[0].mxu0
      %v1449 = vadd.f32 %v468, %v1448
      %v1450 = vpop.f32.mrb[0].mxu0
      %v1451 = vpop.f32.mrb[0].mxu0
      %v1452 = vadd.f32 %v468, %v1451
      %v1453 = vpop.f32.mrb[0].mxu0
      %1454 = vmatprep.mubr.bf16.mxu0 %v937
      %1455 = vmatmul.mubr.bf16.gmra.mrb[0].mxu0 %v936
      %v1456 = vpop.f32.mrb[0].mxu0
      %v1457 = vadd.f32 %v468, %v1456
      %v1458 = vpop.f32.mrb[0].mxu0
      %v1459 = vpop.f32.mrb[0].mxu0
      %v1460 = vadd.f32 %v468, %v1459
      %v1461 = vpop.f32.mrb[0].mxu0
      %1462 = vmatprep.mubr.bf16.mxu0 %v939
      %1463 = vmatmul.mubr.bf16.gmra.mrb[0].mxu0 %v938
      %v1464 = vpop.f32.mrb[0].mxu0
      %v1465 = vadd.f32 %v468, %v1464
      %v1466 = vpop.f32.mrb[0].mxu0
      %v1467 = vpop.f32.mrb[0].mxu0
      %v1468 = vadd.f32 %v468, %v1467
      %v1469 = vpop.f32.mrb[0].mxu0
      %1470 = vmatprep.mubr.bf16.mxu0 %v941
      %1471 = vmatmul.mubr.bf16.gmra.mrb[0].mxu0 %v940
      %v1472 = vpop.f32.mrb[0].mxu0
      %v1473 = vadd.f32 %v468, %v1472
      %v1474 = vpop.f32.mrb[0].mxu0
      %v1475 = vpop.f32.mrb[0].mxu0
      %v1476 = vadd.f32 %v468, %v1475
      %v1477 = vpop.f32.mrb[0].mxu0
      %1478 = vmatprep.mubr.bf16.mxu0 %v943
      %1479 = vmatmul.mubr.bf16.gmra.mrb[0].mxu0 %v942
      %v1480 = vpop.f32.mrb[0].mxu0
      %v1481 = vadd.f32 %v468, %v1480
      %v1482 = vpop.f32.mrb[0].mxu0
      %v1483 = vpop.f32.mrb[0].mxu0
      %v1484 = vadd.f32 %v468, %v1483
      %v1485 = vpop.f32.mrb[0].mxu0
      %1486 = vmatprep.mubr.bf16.mxu0 %v945
      %1487 = vmatmul.mubr.bf16.gmra.mrb[0].mxu0 %v944
      %v1488 = vpop.f32.mrb[0].mxu0
      %v1489 = vadd.f32 %v468, %v1488
      %v1490 = vpop.f32.mrb[0].mxu0
      %v1491 = vpop.f32.mrb[0].mxu0
      %v1492 = vadd.f32 %v468, %v1491
      %v1493 = vpop.f32.mrb[0].mxu0
      %1494 = vmatprep.mubr.bf16.mxu0 %v947
      %1495 = vmatmul.mubr.bf16.gmra.mrb[0].mxu0 %v946
      %v1496 = vpop.f32.mrb[0].mxu0
      %v1497 = vadd.f32 %v468, %v1496
      %v1498 = vpop.f32.mrb[0].mxu0
      %v1499 = vpop.f32.mrb[0].mxu0
      %v1500 = vadd.f32 %v468, %v1499
      %v1501 = vpop.f32.mrb[0].mxu0
      %1502 = vmatprep.mubr.bf16.mxu0 %v949
      %1503 = vmatmul.mubr.bf16.gmra.mrb[0].mxu0 %v948
      %v1504 = vpop.f32.mrb[0].mxu0
      %v1505 = vadd.f32 %v468, %v1504
      %v1506 = vpop.f32.mrb[0].mxu0
      %v1507 = vpop.f32.mrb[0].mxu0
      %v1508 = vadd.f32 %v468, %v1507
      %v1509 = vpop.f32.mrb[0].mxu0
      %1510 = vmatprep.mubr.bf16.mxu0 %v951
      %1511 = vmatmul.mubr.bf16.gmra.mrb[0].mxu0 %v950
      %v1512 = vpop.f32.mrb[0].mxu0
      %v1513 = vadd.f32 %v468, %v1512
      %v1514 = vpop.f32.mrb[0].mxu0
      %v1515 = vpop.f32.mrb[0].mxu0
      %v1516 = vadd.f32 %v468, %v1515
      %v1517 = vpop.f32.mrb[0].mxu0
      %1518 = vmatprep.mubr.bf16.mxu0 %v953
      %1519 = vmatmul.mubr.bf16.gmra.mrb[0].mxu0 %v952
      %v1520 = vpop.f32.mrb[0].mxu0
      %v1521 = vadd.f32 %v468, %v1520
      %v1522 = vpop.f32.mrb[0].mxu0
      %v1523 = vpop.f32.mrb[0].mxu0
      %v1524 = vadd.f32 %v468, %v1523
      %v1525 = vpop.f32.mrb[0].mxu0
      %1526 = vmatprep.mubr.bf16.mxu0 %v955
      %1527 = vmatmul.mubr.bf16.gmra.mrb[0].mxu0 %v954
      %v1528 = vpop.f32.mrb[0].mxu0
      %v1529 = vadd.f32 %v468, %v1528
      %v1530 = vpop.f32.mrb[0].mxu0
      %v1531 = vpop.f32.mrb[0].mxu0
      %v1532 = vadd.f32 %v468, %v1531
      %v1533 = vpop.f32.mrb[0].mxu0
      %1534 = vmatprep.mubr.bf16.mxu0 %v957
      %1535 = vmatmul.mubr.bf16.gmra.mrb[0].mxu0 %v956
      %v1536 = vpop.f32.mrb[0].mxu0
      %v1537 = vadd.f32 %v468, %v1536
      %v1538 = vpop.f32.mrb[0].mxu0
      %v1539 = vpop.f32.mrb[0].mxu0
      %v1540 = vadd.f32 %v468, %v1539
      %v1541 = vpop.f32.mrb[0].mxu0
      %1542 = vmatprep.mubr.bf16.mxu0 %v959
      %1543 = vmatmul.mubr.bf16.gmra.mrb[0].mxu0 %v958
      %v1544 = vpop.f32.mrb[0].mxu0
      %v1545 = vadd.f32 %v468, %v1544
      %v1546 = vpop.f32.mrb[0].mxu0
      %v1547 = vpop.f32.mrb[0].mxu0
      %v1548 = vadd.f32 %v468, %v1547
      %v1549 = vpop.f32.mrb[0].mxu0
      %1550 = vmatprep.mubr.bf16.mxu0 %v961
      %1551 = vmatmul.mubr.bf16.gmra.mrb[0].mxu0 %v960
      %v1552 = vpop.f32.mrb[0].mxu0
      %v1553 = vadd.f32 %v468, %v1552
      %v1554 = vpop.f32.mrb[0].mxu0
      %v1555 = vpop.f32.mrb[0].mxu0
      %v1556 = vadd.f32 %v468, %v1555
      %v1557 = vpop.f32.mrb[0].mxu0
      %1558 = vmatprep.mubr.bf16.mxu0 %v963
      %1559 = vmatmul.mubr.bf16.gmra.mrb[0].mxu0 %v962
      %v1560 = vpop.f32.mrb[0].mxu0
      %v1561 = vadd.f32 %v468, %v1560
      %v1562 = vpop.f32.mrb[0].mxu0
      %v1563 = vpop.f32.mrb[0].mxu0
      %v1564 = vadd.f32 %v468, %v1563
      %v1565 = vpop.f32.mrb[0].mxu0
      %1566 = vmatprep.mubr.bf16.mxu0 %v965
      %1567 = vmatmul.mubr.bf16.gmra.mrb[0].mxu0 %v964
      %v1568 = vpop.f32.mrb[0].mxu0
      %v1569 = vadd.f32 %v468, %v1568
      %v1570 = vpop.f32.mrb[0].mxu0
      %v1571 = vpop.f32.mrb[0].mxu0
      %v1572 = vadd.f32 %v468, %v1571
      %v1573 = vpop.f32.mrb[0].mxu0
      %1574 = vmatprep.mubr.bf16.mxu0 %v967
      %1575 = vmatmul.mubr.bf16.gmra.mrb[0].mxu0 %v966
      %v1576 = vpop.f32.mrb[0].mxu0
      %v1577 = vadd.f32 %v468, %v1576
      %v1578 = vpop.f32.mrb[0].mxu0
      %v1579 = vpop.f32.mrb[0].mxu0
      %v1580 = vadd.f32 %v468, %v1579
      %v1581 = vpop.f32.mrb[0].mxu0
      %1582 = vmatprep.mubr.bf16.mxu0 %v969
      %1583 = vmatmul.mubr.bf16.gmra.mrb[0].mxu0 %v968
      %v1584 = vpop.f32.mrb[0].mxu0
      %v1585 = vadd.f32 %v468, %v1584
      %v1586 = vpop.f32.mrb[0].mxu0
      %v1587 = vpop.f32.mrb[0].mxu0
      %v1588 = vadd.f32 %v468, %v1587
      %v1589 = vpop.f32.mrb[0].mxu0
      %1590 = vmatprep.mubr.bf16.mxu0 %v971
      %1591 = vmatmul.mubr.bf16.gmra.mrb[0].mxu0 %v970
      %v1592 = vpop.f32.mrb[0].mxu0
      %v1593 = vadd.f32 %v468, %v1592
      %v1594 = vpop.f32.mrb[0].mxu0
      %v1595 = vpop.f32.mrb[0].mxu0
      %v1596 = vadd.f32 %v468, %v1595
      %v1597 = vpop.f32.mrb[0].mxu0
      %1598 = vmatprep.mubr.bf16.mxu0 %v973
      %1599 = vmatmul.mubr.bf16.gmra.mrb[0].mxu0 %v972
      %v1600 = vpop.f32.mrb[0].mxu0
      %v1601 = vadd.f32 %v468, %v1600
      %v1602 = vpop.f32.mrb[0].mxu0
      %v1603 = vpop.f32.mrb[0].mxu0
      %v1604 = vadd.f32 %v468, %v1603
      %v1605 = vpop.f32.mrb[0].mxu0
      %1606 = vmatprep.mubr.bf16.mxu0 %v975
      %1607 = vmatmul.mubr.bf16.gmra.mrb[0].mxu0 %v974
      %v1608 = vpop.f32.mrb[0].mxu0
      %v1609 = vadd.f32 %v468, %v1608
      %v1610 = vpop.f32.mrb[0].mxu0
      %v1611 = vpop.f32.mrb[0].mxu0
      %v1612 = vadd.f32 %v468, %v1611
      %v1613 = vpop.f32.mrb[0].mxu0
      %1614 = vmatprep.mubr.bf16.mxu0 %v977
      %1615 = vmatmul.mubr.bf16.gmra.mrb[0].mxu0 %v976
      %v1616 = vpop.f32.mrb[0].mxu0
      %v1617 = vadd.f32 %v468, %v1616
      %v1618 = vpop.f32.mrb[0].mxu0
      %v1619 = vpop.f32.mrb[0].mxu0
      %v1620 = vadd.f32 %v468, %v1619
      %v1621 = vpop.f32.mrb[0].mxu0
      %1622 = vmatprep.mubr.bf16.mxu0 %v979
      %1623 = vmatmul.mubr.bf16.gmra.mrb[0].mxu0 %v978
      %v1624 = vpop.f32.mrb[0].mxu0
      %v1625 = vadd.f32 %v468, %v1624
      %v1626 = vpop.f32.mrb[0].mxu0
      %v1627 = vpop.f32.mrb[0].mxu0
      %v1628 = vadd.f32 %v468, %v1627
      %v1629 = vpop.f32.mrb[0].mxu0
      %1630 = vmatprep.mubr.bf16.mxu0 %v981
      %1631 = vmatmul.mubr.bf16.gmra.mrb[0].mxu0 %v980
      %v1632 = vpop.f32.mrb[0].mxu0
      %v1633 = vadd.f32 %v468, %v1632
      %v1634 = vpop.f32.mrb[0].mxu0
      %v1635 = vpop.f32.mrb[0].mxu0
      %v1636 = vadd.f32 %v468, %v1635
      %v1637 = vpop.f32.mrb[0].mxu0
      %1638 = vmatprep.mubr.bf16.mxu0 %v983
      %1639 = vmatmul.mubr.bf16.gmra.mrb[0].mxu0 %v982
      %v1640 = vpop.f32.mrb[0].mxu0
      %v1641 = vadd.f32 %v468, %v1640
      %v1642 = vpop.f32.mrb[0].mxu0
      %v1643 = vpop.f32.mrb[0].mxu0
      %v1644 = vadd.f32 %v468, %v1643
      %v1645 = vpop.f32.mrb[0].mxu0
      %1646 = vmatprep.mubr.bf16.mxu0 %v985
      %1647 = vmatmul.mubr.bf16.gmra.mrb[0].mxu0 %v984
      %v1648 = vpop.f32.mrb[0].mxu0
      %v1649 = vadd.f32 %v468, %v1648
      %v1650 = vpop.f32.mrb[0].mxu0
      %v1651 = vpop.f32.mrb[0].mxu0
      %v1652 = vadd.f32 %v468, %v1651
      %v1653 = vpop.f32.mrb[0].mxu0
      %1654 = vmatprep.mubr.bf16.mxu0 %v987
      %1655 = vmatmul.mubr.bf16.gmra.mrb[0].mxu0 %v986
      %v1656 = vpop.f32.mrb[0].mxu0
      %v1657 = vadd.f32 %v468, %v1656
      %v1658 = vpop.f32.mrb[0].mxu0
      %v1659 = vpop.f32.mrb[0].mxu0
      %v1660 = vadd.f32 %v468, %v1659
      %v1661 = vpop.f32.mrb[0].mxu0
      %1662 = vmatprep.mubr.bf16.mxu0 %v989
      %1663 = vmatmul.mubr.bf16.gmra.mrb[0].mxu0 %v988
      %v1664 = vpop.f32.mrb[0].mxu0
      %v1665 = vadd.f32 %v468, %v1664
      %v1666 = vpop.f32.mrb[0].mxu0
      %v1667 = vpop.f32.mrb[0].mxu0
      %v1668 = vadd.f32 %v468, %v1667
      %v1669 = vpop.f32.mrb[0].mxu0
      %1670 = vmatprep.mubr.bf16.mxu0 %v991
      %1671 = vmatmul.mubr.bf16.gmra.mrb[0].mxu0 %v990
      %v1672 = vpop.f32.mrb[0].mxu0
      %v1673 = vadd.f32 %v468, %v1672
      %v1674 = vpop.f32.mrb[0].mxu0
      %v1675 = vpop.f32.mrb[0].mxu0
      %v1676 = vadd.f32 %v468, %v1675
      %v1677 = vpop.f32.mrb[0].mxu0
      %1678 = vmatprep.mubr.bf16.mxu0 %v993
      %1679 = vmatmul.mubr.bf16.gmra.mrb[0].mxu0 %v992
      %v1680 = vpop.f32.mrb[0].mxu0
      %v1681 = vadd.f32 %v468, %v1680
      %v1682 = vpop.f32.mrb[0].mxu0
      %v1683 = vpop.f32.mrb[0].mxu0
      %v1684 = vadd.f32 %v468, %v1683
      %v1685 = vpop.f32.mrb[0].mxu0
      %1686 = vmatprep.mubr.bf16.mxu0 %v995
      %1687 = vmatmul.mubr.bf16.gmra.mrb[0].mxu0 %v994
      %v1688 = vpop.f32.mrb[0].mxu0
      %v1689 = vadd.f32 %v468, %v1688
      %v1690 = vpop.f32.mrb[0].mxu0
      %v1691 = vpop.f32.mrb[0].mxu0
      %v1692 = vadd.f32 %v468, %v1691
      %v1693 = vpop.f32.mrb[0].mxu0
      %1694 = vmatprep.mubr.bf16.mxu0 %v997
      %1695 = vmatmul.mubr.bf16.gmra.mrb[0].mxu0 %v996
      %v1696 = vpop.f32.mrb[0].mxu0
      %v1697 = vadd.f32 %v468, %v1696
      %v1698 = vpop.f32.mrb[0].mxu0
      %v1699 = vpop.f32.mrb[0].mxu0
      %v1700 = vadd.f32 %v468, %v1699
      %v1701 = vpop.f32.mrb[0].mxu0
      %1702 = vmatprep.mubr.bf16.mxu0 %v999
      %1703 = vmatmul.mubr.bf16.gmra.mrb[0].mxu0 %v998
      %v1704 = vpop.f32.mrb[0].mxu0
      %v1705 = vadd.f32 %v468, %v1704
      %v1706 = vpop.f32.mrb[0].mxu0
      %v1707 = vpop.f32.mrb[0].mxu0
      %v1708 = vadd.f32 %v468, %v1707
      %v1709 = vpop.f32.mrb[0].mxu0
      %1710 = vmatprep.mubr.bf16.mxu0 %v1001
      %1711 = vmatmul.mubr.bf16.gmra.mrb[0].mxu0 %v1000
      %v1712 = vpop.f32.mrb[0].mxu0
      %v1713 = vadd.f32 %v468, %v1712
      %v1714 = vpop.f32.mrb[0].mxu0
      %v1715 = vpop.f32.mrb[0].mxu0
      %v1716 = vadd.f32 %v468, %v1715
      %v1717 = vpop.f32.mrb[0].mxu0
      %1718 = vmatprep.mubr.bf16.mxu0 %v1003
      %1719 = vmatmul.mubr.bf16.gmra.mrb[0].mxu0 %v1002
      %v1720 = vpop.f32.mrb[0].mxu0
      %v1721 = vadd.f32 %v468, %v1720
      %v1722 = vpop.f32.mrb[0].mxu0
      %v1723 = vpop.f32.mrb[0].mxu0
      %v1724 = vadd.f32 %v468, %v1723
      %v1725 = vpop.f32.mrb[0].mxu0
      %1726 = vmatprep.mubr.bf16.mxu0 %v1005
      %1727 = vmatmul.mubr.bf16.gmra.mrb[0].mxu0 %v1004
      %v1728 = vpop.f32.mrb[0].mxu0
      %v1729 = vadd.f32 %v468, %v1728
      %v1730 = vpop.f32.mrb[0].mxu0
      %v1731 = vpop.f32.mrb[0].mxu0
      %v1732 = vadd.f32 %v468, %v1731
      %v1733 = vpop.f32.mrb[0].mxu0
      %1734 = vmatprep.mubr.bf16.mxu0 %v1007
      %1735 = vmatmul.mubr.bf16.gmra.mrb[0].mxu0 %v1006
      %v1736 = vpop.f32.mrb[0].mxu0
      %v1737 = vadd.f32 %v468, %v1736
      %v1738 = vpop.f32.mrb[0].mxu0
      %v1739 = vpop.f32.mrb[0].mxu0
      %v1740 = vadd.f32 %v468, %v1739
      %v1741 = vpop.f32.mrb[0].mxu0
      %1742 = vmatprep.mubr.bf16.mxu0 %v1009
      %1743 = vmatmul.mubr.bf16.gmra.mrb[0].mxu0 %v1008
      %v1744 = vpop.f32.mrb[0].mxu0
      %v1745 = vadd.f32 %v468, %v1744
      %v1746 = vpop.f32.mrb[0].mxu0
      %v1747 = vpop.f32.mrb[0].mxu0
      %v1748 = vadd.f32 %v468, %v1747
      %v1749 = vpop.f32.mrb[0].mxu0
      %1750 = vmatprep.mubr.bf16.mxu0 %v1011
      %1751 = vmatmul.mubr.bf16.gmra.mrb[0].mxu0 %v1010
      %v1752 = vpop.f32.mrb[0].mxu0
      %v1753 = vadd.f32 %v468, %v1752
      %v1754 = vpop.f32.mrb[0].mxu0
      %v1755 = vpop.f32.mrb[0].mxu0
      %v1756 = vadd.f32 %v468, %v1755
      %v1757 = vpop.f32.mrb[0].mxu0
      %1758 = vmatprep.mubr.bf16.mxu0 %v1013
      %1759 = vmatmul.mubr.bf16.gmra.mrb[0].mxu0 %v1012
      %v1760 = vpop.f32.mrb[0].mxu0
      %v1761 = vadd.f32 %v468, %v1760
      %v1762 = vpop.f32.mrb[0].mxu0
      %v1763 = vpop.f32.mrb[0].mxu0
      %v1764 = vadd.f32 %v468, %v1763
      %v1765 = vpop.f32.mrb[0].mxu0
      %1766 = vmatprep.mubr.bf16.mxu0 %v1015
      %1767 = vmatmul.mubr.bf16.gmra.mrb[0].mxu0 %v1014
      %v1768 = vpop.f32.mrb[0].mxu0
      %v1769 = vadd.f32 %v468, %v1768
      %v1770 = vpop.f32.mrb[0].mxu0
      %v1771 = vpop.f32.mrb[0].mxu0
      %v1772 = vadd.f32 %v468, %v1771
      %v1773 = vpop.f32.mrb[0].mxu0
      %1774 = vmatprep.mubr.bf16.mxu0 %v1017
      %1775 = vmatmul.mubr.bf16.gmra.mrb[0].mxu0 %v1016
      %v1776 = vpop.f32.mrb[0].mxu0
      %v1777 = vadd.f32 %v468, %v1776
      %v1778 = vpop.f32.mrb[0].mxu0
      %v1779 = vpop.f32.mrb[0].mxu0
      %v1780 = vadd.f32 %v468, %v1779
      %v1781 = vpop.f32.mrb[0].mxu0
      %1782 = vmatprep.mubr.bf16.mxu0 %v1019
      %1783 = vmatmul.mubr.bf16.gmra.mrb[0].mxu0 %v1018
      %v1784 = vpop.f32.mrb[0].mxu0
      %v1785 = vadd.f32 %v468, %v1784
      %v1786 = vpop.f32.mrb[0].mxu0
      %v1787 = vpop.f32.mrb[0].mxu0
      %v1788 = vadd.f32 %v468, %v1787
      %v1789 = vpop.f32.mrb[0].mxu0
      %1790 = vmatprep.mubr.bf16.mxu0 %v1021
      %1791 = vmatmul.mubr.bf16.gmra.mrb[0].mxu0 %v1020
      %v1792 = vpop.f32.mrb[0].mxu0
      %v1793 = vadd.f32 %v468, %v1792
      %v1794 = vpop.f32.mrb[0].mxu0
      %v1795 = vpop.f32.mrb[0].mxu0
      %v1796 = vadd.f32 %v468, %v1795
      %v1797 = vpop.f32.mrb[0].mxu0
      %1798 = vmatprep.mubr.bf16.mxu0 %v1023
      %1799 = vmatmul.mubr.bf16.gmra.mrb[0].mxu0 %v1022
      %v1800 = vpop.f32.mrb[0].mxu0
      %v1801 = vadd.f32 %v468, %v1800
      %v1802 = vpop.f32.mrb[0].mxu0
      %v1803 = vpop.f32.mrb[0].mxu0
      %v1804 = vadd.f32 %v468, %v1803
      %v1805 = vpop.f32.mrb[0].mxu0
      %1806 = vmatprep.mubr.bf16.mxu0 %v1025
      %1807 = vmatmul.mubr.bf16.gmra.mrb[0].mxu0 %v1024
      %v1808 = vpop.f32.mrb[0].mxu0
      %v1809 = vadd.f32 %v468, %v1808
      %v1810 = vpop.f32.mrb[0].mxu0
      %v1811 = vpop.f32.mrb[0].mxu0
      %v1812 = vadd.f32 %v468, %v1811
      %v1813 = vpop.f32.mrb[0].mxu0
      %1814 = vmatprep.mubr.bf16.mxu0 %v1027
      %1815 = vmatmul.mubr.bf16.gmra.mrb[0].mxu0 %v1026
      %v1816 = vpop.f32.mrb[0].mxu0
      %v1817 = vadd.f32 %v468, %v1816
      %v1818 = vpop.f32.mrb[0].mxu0
      %v1819 = vpop.f32.mrb[0].mxu0
      %v1820 = vadd.f32 %v468, %v1819
      %v1821 = vpop.f32.mrb[0].mxu0
      %1822 = vmatprep.mubr.bf16.mxu0 %v1029
      %1823 = vmatmul.mubr.bf16.gmra.mrb[0].mxu0 %v1028
      %v1824 = vpop.f32.mrb[0].mxu0
      %v1825 = vadd.f32 %v468, %v1824
      %v1826 = vpop.f32.mrb[0].mxu0
      %v1827 = vpop.f32.mrb[0].mxu0
      %v1828 = vadd.f32 %v468, %v1827
      %v1829 = vpop.f32.mrb[0].mxu0
      %1830 = vmatprep.mubr.bf16.mxu0 %v1031
      %1831 = vmatmul.mubr.bf16.gmra.mrb[0].mxu0 %v1030
      %v1832 = vpop.f32.mrb[0].mxu0
      %v1833 = vadd.f32 %v468, %v1832
      %v1834 = vpop.f32.mrb[0].mxu0
      %v1835 = vpop.f32.mrb[0].mxu0
      %v1836 = vadd.f32 %v468, %v1835
      %v1837 = vpop.f32.mrb[0].mxu0
      %1838 = vmatprep.mubr.bf16.mxu0 %v1033
      %1839 = vmatmul.mubr.bf16.gmra.mrb[0].mxu0 %v1032
      %v1840 = vpop.f32.mrb[0].mxu0
      %v1841 = vadd.f32 %v468, %v1840
      %v1842 = vpop.f32.mrb[0].mxu0
      %v1843 = vpop.f32.mrb[0].mxu0
      %v1844 = vadd.f32 %v468, %v1843
      %v1845 = vpop.f32.mrb[0].mxu0
      %1846 = vmatprep.mubr.bf16.mxu0 %v1035
      %1847 = vmatmul.mubr.bf16.gmra.mrb[0].mxu0 %v1034
      %v1848 = vpop.f32.mrb[0].mxu0
      %v1849 = vadd.f32 %v468, %v1848
      %v1850 = vpop.f32.mrb[0].mxu0
      %v1851 = vpop.f32.mrb[0].mxu0
      %v1852 = vadd.f32 %v468, %v1851
      %v1853 = vpop.f32.mrb[0].mxu0
      %1854 = vmatprep.mubr.bf16.mxu0 %v1037
      %1855 = vmatmul.mubr.bf16.gmra.mrb[0].mxu0 %v1036
      %v1856 = vpop.f32.mrb[0].mxu0
      %v1857 = vadd.f32 %v468, %v1856
      %v1858 = vpop.f32.mrb[0].mxu0
      %v1859 = vpop.f32.mrb[0].mxu0
      %v1860 = vadd.f32 %v468, %v1859
      %v1861 = vpop.f32.mrb[0].mxu0
      %1862 = vmatprep.mubr.bf16.mxu0 %v1039
      %1863 = vmatmul.mubr.bf16.gmra.mrb[0].mxu0 %v1038
      %v1864 = vpop.f32.mrb[0].mxu0
      %v1865 = vadd.f32 %v468, %v1864
      %v1866 = vpop.f32.mrb[0].mxu0
      %v1867 = vpop.f32.mrb[0].mxu0
      %v1868 = vadd.f32 %v468, %v1867
      %v1869 = vpop.f32.mrb[0].mxu0
      %1870 = vmatprep.mubr.bf16.mxu0 %v1041
      %1871 = vmatmul.mubr.bf16.gmra.mrb[0].mxu0 %v1040
      %v1872 = vpop.f32.mrb[0].mxu0
      %v1873 = vadd.f32 %v468, %v1872
      %v1874 = vpop.f32.mrb[0].mxu0
      %v1875 = vpop.f32.mrb[0].mxu0
      %v1876 = vadd.f32 %v468, %v1875
      %v1877 = vpop.f32.mrb[0].mxu0
      %1878 = vmatprep.mubr.bf16.mxu0 %v1043
      %1879 = vmatmul.mubr.bf16.gmra.mrb[0].mxu0 %v1042
      %v1880 = vpop.f32.mrb[0].mxu0
      %v1881 = vadd.f32 %v468, %v1880
      %v1882 = vpop.f32.mrb[0].mxu0
      %v1883 = vpop.f32.mrb[0].mxu0
      %v1884 = vadd.f32 %v468, %v1883
      %v1885 = vpop.f32.mrb[0].mxu0
      %1886 = vmatprep.mubr.bf16.mxu0 %v1045
      %1887 = vmatmul.mubr.bf16.gmra.mrb[0].mxu0 %v1044
      %v1888 = vpop.f32.mrb[0].mxu0
      %v1889 = vadd.f32 %v468, %v1888
      %v1890 = vpop.f32.mrb[0].mxu0
      %v1891 = vpop.f32.mrb[0].mxu0
      %v1892 = vadd.f32 %v468, %v1891
      %v1893 = vpop.f32.mrb[0].mxu0
      %1894 = vdwg.mxu0
      %v1895 = vmax.f32 %v1321, 0.0
      %v1896 = vmax.f32 %v1324, 0.0
      %v1897 = vmax.f32 %v1329, 0.0
      %v1898 = vmax.f32 %v1332, 0.0
      %v1899 = vmax.f32 %v1337, 0.0
      %v1900 = vmax.f32 %v1340, 0.0
      %v1901 = vmax.f32 %v1345, 0.0
      %v1902 = vmax.f32 %v1348, 0.0
      %v1903 = vmax.f32 %v1353, 0.0
      %v1904 = vmax.f32 %v1356, 0.0
      %v1905 = vmax.f32 %v1361, 0.0
      %v1906 = vmax.f32 %v1364, 0.0
      %v1907 = vmax.f32 %v1369, 0.0
      %v1908 = vmax.f32 %v1372, 0.0
      %v1909 = vmax.f32 %v1377, 0.0
      %v1910 = vmax.f32 %v1380, 0.0
      %v1911 = vmax.f32 %v1385, 0.0
      %v1912 = vmax.f32 %v1388, 0.0
      %v1913 = vmax.f32 %v1393, 0.0
      %v1914 = vmax.f32 %v1396, 0.0
      %v1915 = vmax.f32 %v1401, 0.0
      %v1916 = vmax.f32 %v1404, 0.0
      %v1917 = vmax.f32 %v1409, 0.0
      %v1918 = vmax.f32 %v1412, 0.0
      %v1919 = vmax.f32 %v1417, 0.0
      %v1920 = vmax.f32 %v1420, 0.0
      %v1921 = vmax.f32 %v1425, 0.0
      %v1922 = vmax.f32 %v1428, 0.0
      %v1923 = vmax.f32 %v1433, 0.0
      %v1924 = vmax.f32 %v1436, 0.0
      %v1925 = vmax.f32 %v1441, 0.0
      %v1926 = vmax.f32 %v1444, 0.0
      %v1927 = vmax.f32 %v1449, 0.0
      %v1928 = vmax.f32 %v1452, 0.0
      %v1929 = vmax.f32 %v1457, 0.0
      %v1930 = vmax.f32 %v1460, 0.0
      %v1931 = vmax.f32 %v1465, 0.0
      %v1932 = vmax.f32 %v1468, 0.0
      %v1933 = vmax.f32 %v1473, 0.0
      %v1934 = vmax.f32 %v1476, 0.0
      %v1935 = vmax.f32 %v1481, 0.0
      %v1936 = vmax.f32 %v1484, 0.0
      %v1937 = vmax.f32 %v1489, 0.0
      %v1938 = vmax.f32 %v1492, 0.0
      %v1939 = vmax.f32 %v1497, 0.0
      %v1940 = vmax.f32 %v1500, 0.0
      %v1941 = vmax.f32 %v1505, 0.0
      %v1942 = vmax.f32 %v1508, 0.0
      %v1943 = vmax.f32 %v1513, 0.0
      %v1944 = vmax.f32 %v1516, 0.0
      %v1945 = vmax.f32 %v1521, 0.0
      %v1946 = vmax.f32 %v1524, 0.0
      %v1947 = vmax.f32 %v1529, 0.0
      %v1948 = vmax.f32 %v1532, 0.0
      %v1949 = vmax.f32 %v1537, 0.0
      %v1950 = vmax.f32 %v1540, 0.0
      %v1951 = vmax.f32 %v1545, 0.0
      %v1952 = vmax.f32 %v1548, 0.0
      %v1953 = vmax.f32 %v1553, 0.0
      %v1954 = vmax.f32 %v1556, 0.0
      %v1955 = vmax.f32 %v1561, 0.0
      %v1956 = vmax.f32 %v1564, 0.0
      %v1957 = vmax.f32 %v1569, 0.0
      %v1958 = vmax.f32 %v1572, 0.0
      %v1959 = vmax.f32 %v1577, 0.0
      %v1960 = vmax.f32 %v1580, 0.0
      %v1961 = vmax.f32 %v1585, 0.0
      %v1962 = vmax.f32 %v1588, 0.0
      %v1963 = vmax.f32 %v1593, 0.0
      %v1964 = vmax.f32 %v1596, 0.0
      %v1965 = vmax.f32 %v1601, 0.0
      %v1966 = vmax.f32 %v1604, 0.0
      %v1967 = vmax.f32 %v1609, 0.0
      %v1968 = vmax.f32 %v1612, 0.0
      %v1969 = vmax.f32 %v1617, 0.0
      %v1970 = vmax.f32 %v1620, 0.0
      %v1971 = vmax.f32 %v1625, 0.0
      %v1972 = vmax.f32 %v1628, 0.0
      %v1973 = vmax.f32 %v1633, 0.0
      %v1974 = vmax.f32 %v1636, 0.0
      %v1975 = vmax.f32 %v1641, 0.0
      %v1976 = vmax.f32 %v1644, 0.0
      %v1977 = vmax.f32 %v1649, 0.0
      %v1978 = vmax.f32 %v1652, 0.0
      %v1979 = vmax.f32 %v1657, 0.0
      %v1980 = vmax.f32 %v1660, 0.0
      %v1981 = vmax.f32 %v1665, 0.0
      %v1982 = vmax.f32 %v1668, 0.0
      %v1983 = vmax.f32 %v1673, 0.0
      %v1984 = vmax.f32 %v1676, 0.0
      %v1985 = vmax.f32 %v1681, 0.0
      %v1986 = vmax.f32 %v1684, 0.0
      %v1987 = vmax.f32 %v1689, 0.0
      %v1988 = vmax.f32 %v1692, 0.0
      %v1989 = vmax.f32 %v1697, 0.0
      %v1990 = vmax.f32 %v1700, 0.0
      %v1991 = vmax.f32 %v1705, 0.0
      %v1992 = vmax.f32 %v1708, 0.0
      %v1993 = vmax.f32 %v1713, 0.0
      %v1994 = vmax.f32 %v1716, 0.0
      %v1995 = vmax.f32 %v1721, 0.0
      %v1996 = vmax.f32 %v1724, 0.0
      %v1997 = vmax.f32 %v1729, 0.0
      %v1998 = vmax.f32 %v1732, 0.0
      %v1999 = vmax.f32 %v1737, 0.0
      %v2000 = vmax.f32 %v1740, 0.0
      %v2001 = vmax.f32 %v1745, 0.0
      %v2002 = vmax.f32 %v1748, 0.0
      %v2003 = vmax.f32 %v1753, 0.0
      %v2004 = vmax.f32 %v1756, 0.0
      %v2005 = vmax.f32 %v1761, 0.0
      %v2006 = vmax.f32 %v1764, 0.0
      %v2007 = vmax.f32 %v1769, 0.0
      %v2008 = vmax.f32 %v1772, 0.0
      %v2009 = vmax.f32 %v1777, 0.0
      %v2010 = vmax.f32 %v1780, 0.0
      %v2011 = vmax.f32 %v1785, 0.0
      %v2012 = vmax.f32 %v1788, 0.0
      %v2013 = vmax.f32 %v1793, 0.0
      %v2014 = vmax.f32 %v1796, 0.0
      %v2015 = vmax.f32 %v1801, 0.0
      %v2016 = vmax.f32 %v1804, 0.0
      %v2017 = vmax.f32 %v1809, 0.0
      %v2018 = vmax.f32 %v1812, 0.0
      %v2019 = vmax.f32 %v1817, 0.0
      %v2020 = vmax.f32 %v1820, 0.0
      %v2021 = vmax.f32 %v1825, 0.0
      %v2022 = vmax.f32 %v1828, 0.0
      %v2023 = vmax.f32 %v1833, 0.0
      %v2024 = vmax.f32 %v1836, 0.0
      %v2025 = vmax.f32 %v1841, 0.0
      %v2026 = vmax.f32 %v1844, 0.0
      %v2027 = vmax.f32 %v1849, 0.0
      %v2028 = vmax.f32 %v1852, 0.0
      %v2029 = vmax.f32 %v1857, 0.0
      %v2030 = vmax.f32 %v1860, 0.0
      %v2031 = vmax.f32 %v1865, 0.0
      %v2032 = vmax.f32 %v1868, 0.0
      %v2033 = vmax.f32 %v1873, 0.0
      %v2034 = vmax.f32 %v1876, 0.0
      %v2035 = vmax.f32 %v1881, 0.0
      %v2036 = vmax.f32 %v1884, 0.0
      %v2037 = vmax.f32 %v1889, 0.0
      %v2038 = vmax.f32 %v1892, 0.0
      %v2039 = vpack.c.bf16 %v1896, %v1895
      %v2040 = vpack.c.bf16 %v1898, %v1897
      %v2041 = vpack.c.bf16 %v1900, %v1899
      %v2042 = vpack.c.bf16 %v1902, %v1901
      %v2043 = vpack.c.bf16 %v1904, %v1903
      %v2044 = vpack.c.bf16 %v1906, %v1905
      %v2045 = vpack.c.bf16 %v1908, %v1907
      %v2046 = vpack.c.bf16 %v1910, %v1909
      %v2047 = vpack.c.bf16 %v1912, %v1911
      %v2048 = vpack.c.bf16 %v1914, %v1913
      %v2049 = vpack.c.bf16 %v1916, %v1915
      %v2050 = vpack.c.bf16 %v1918, %v1917
      %v2051 = vpack.c.bf16 %v1920, %v1919
      %v2052 = vpack.c.bf16 %v1922, %v1921
      %v2053 = vpack.c.bf16 %v1924, %v1923
      %v2054 = vpack.c.bf16 %v1926, %v1925
      %v2055 = vpack.c.bf16 %v1928, %v1927
      %v2056 = vpack.c.bf16 %v1930, %v1929
      %v2057 = vpack.c.bf16 %v1932, %v1931
      %v2058 = vpack.c.bf16 %v1934, %v1933
      %v2059 = vpack.c.bf16 %v1936, %v1935
      %v2060 = vpack.c.bf16 %v1938, %v1937
      %v2061 = vpack.c.bf16 %v1940, %v1939
      %v2062 = vpack.c.bf16 %v1942, %v1941
      %v2063 = vpack.c.bf16 %v1944, %v1943
      %v2064 = vpack.c.bf16 %v1946, %v1945
      %v2065 = vpack.c.bf16 %v1948, %v1947
      %v2066 = vpack.c.bf16 %v1950, %v1949
      %v2067 = vpack.c.bf16 %v1952, %v1951
      %v2068 = vpack.c.bf16 %v1954, %v1953
      %v2069 = vpack.c.bf16 %v1956, %v1955
      %v2070 = vpack.c.bf16 %v1958, %v1957
      %v2071 = vpack.c.bf16 %v1960, %v1959
      %v2072 = vpack.c.bf16 %v1962, %v1961
      %v2073 = vpack.c.bf16 %v1964, %v1963
      %v2074 = vpack.c.bf16 %v1966, %v1965
      %v2075 = vpack.c.bf16 %v1968, %v1967
      %v2076 = vpack.c.bf16 %v1970, %v1969
      %v2077 = vpack.c.bf16 %v1972, %v1971
      %v2078 = vpack.c.bf16 %v1974, %v1973
      %v2079 = vpack.c.bf16 %v1976, %v1975
      %v2080 = vpack.c.bf16 %v1978, %v1977
      %v2081 = vpack.c.bf16 %v1980, %v1979
      %v2082 = vpack.c.bf16 %v1982, %v1981
      %v2083 = vpack.c.bf16 %v1984, %v1983
      %v2084 = vpack.c.bf16 %v1986, %v1985
      %v2085 = vpack.c.bf16 %v1988, %v1987
      %v2086 = vpack.c.bf16 %v1990, %v1989
      %v2087 = vpack.c.bf16 %v1992, %v1991
      %v2088 = vpack.c.bf16 %v1994, %v1993
      %v2089 = vpack.c.bf16 %v1996, %v1995
      %v2090 = vpack.c.bf16 %v1998, %v1997
      %v2091 = vpack.c.bf16 %v2000, %v1999
      %v2092 = vpack.c.bf16 %v2002, %v2001
      %v2093 = vpack.c.bf16 %v2004, %v2003
      %v2094 = vpack.c.bf16 %v2006, %v2005
      %v2095 = vpack.c.bf16 %v2008, %v2007
      %v2096 = vpack.c.bf16 %v2010, %v2009
      %v2097 = vpack.c.bf16 %v2012, %v2011
      %v2098 = vpack.c.bf16 %v2014, %v2013
      %v2099 = vpack.c.bf16 %v2016, %v2015
      %v2100 = vpack.c.bf16 %v2018, %v2017
      %v2101 = vpack.c.bf16 %v2020, %v2019
      %v2102 = vpack.c.bf16 %v2022, %v2021
      %v2103 = vpack.c.bf16 %v2024, %v2023
      %v2104 = vpack.c.bf16 %v2026, %v2025
      %v2105 = vpack.c.bf16 %v2028, %v2027
      %v2106 = vpack.c.bf16 %v2030, %v2029
      %v2107 = vpack.c.bf16 %v2032, %v2031
      %v2108 = vpack.c.bf16 %v2034, %v2033
      %v2109 = vpack.c.bf16 %v2036, %v2035
      %v2110 = vpack.c.bf16 %v2038, %v2037
      %vm2116 = vcmask 1043456
      %v2117 = vrot.slane %v2043, 4
      %v2118 = vrot.slane %v2044, 4
      %v2119 = vsel %vm2116, %v2117, %v2118
      %v2120 = vrot.slane %v2045, 4
      %v2121 = vsel %vm2116, %v2118, %v2120
      %v2122 = vrot.slane %v2046, 4
      %v2123 = vsel %vm2116, %v2120, %v2122
      %v2124 = vrot.slane %v2047, 4
      %v2125 = vsel %vm2116, %v2122, %v2124
      %2126 = vrot.lane.b32.xlu0 %v2119, 32
      %v2127 = vpop.permute.xlu0 %2126
      %2128 = vrot.lane.b32.xlu0 %v2121, 32
      %v2129 = vpop.permute.xlu0 %2128
      %2130 = vrot.lane.b32.xlu0 %v2123, 32
      %v2131 = vpop.permute.xlu0 %2130
      %2132 = vrot.lane.b32.xlu0 %v2125, 32
      %v2133 = vpop.permute.xlu0 %2132
      %2134 = vrot.lane.b32.xlu0 %v2124, 32
      %v2135 = vpop.permute.xlu0 %2134
      %2141 = vrot.lane.b32.xlu0 %v2048, 64
      %v2142 = vpop.permute.xlu0 %2141
      %2143 = vrot.lane.b32.xlu0 %v2049, 64
      %v2144 = vpop.permute.xlu0 %2143
      %2145 = vrot.lane.b32.xlu0 %v2050, 64
      %v2146 = vpop.permute.xlu0 %2145
      %2147 = vrot.lane.b32.xlu0 %v2051, 64
      %v2148 = vpop.permute.xlu0 %2147
      %2149 = vrot.lane.b32.xlu0 %v2052, 64
      %v2150 = vpop.permute.xlu0 %2149
      %v2155 = vrot.slane %v2052, 4
      %v2156 = vrot.slane %v2053, 4
      %v2157 = vsel %vm2116, %v2155, %v2156
      %v2158 = vrot.slane %v2054, 4
      %v2159 = vsel %vm2116, %v2156, %v2158
      %v2160 = vrot.slane %v2055, 4
      %v2161 = vsel %vm2116, %v2158, %v2160
      %v2162 = vrot.slane %v2056, 4
      %v2163 = vsel %vm2116, %v2160, %v2162
      %2164 = vrot.lane.b32.xlu0 %v2157, 96
      %v2165 = vpop.permute.xlu0 %2164
      %2166 = vrot.lane.b32.xlu0 %v2159, 96
      %v2167 = vpop.permute.xlu0 %2166
      %2168 = vrot.lane.b32.xlu0 %v2161, 96
      %v2169 = vpop.permute.xlu0 %2168
      %2170 = vrot.lane.b32.xlu0 %v2163, 96
      %v2171 = vpop.permute.xlu0 %2170
      %2172 = vrot.lane.b32.xlu0 %v2162, 96
      %v2173 = vpop.permute.xlu0 %2172
      %v2179 = vrot.slane %v2061, 4
      %v2180 = vrot.slane %v2062, 4
      %v2181 = vsel %vm2116, %v2179, %v2180
      %v2182 = vrot.slane %v2063, 4
      %v2183 = vsel %vm2116, %v2180, %v2182
      %v2184 = vrot.slane %v2064, 4
      %v2185 = vsel %vm2116, %v2182, %v2184
      %v2186 = vrot.slane %v2065, 4
      %v2187 = vsel %vm2116, %v2184, %v2186
      %2188 = vrot.lane.b32.xlu0 %v2181, 32
      %v2189 = vpop.permute.xlu0 %2188
      %2190 = vrot.lane.b32.xlu0 %v2183, 32
      %v2191 = vpop.permute.xlu0 %2190
      %2192 = vrot.lane.b32.xlu0 %v2185, 32
      %v2193 = vpop.permute.xlu0 %2192
      %2194 = vrot.lane.b32.xlu0 %v2187, 32
      %v2195 = vpop.permute.xlu0 %2194
      %2196 = vrot.lane.b32.xlu0 %v2186, 32
      %v2197 = vpop.permute.xlu0 %2196
      %2203 = vrot.lane.b32.xlu0 %v2066, 64
      %v2204 = vpop.permute.xlu0 %2203
      %2205 = vrot.lane.b32.xlu0 %v2067, 64
      %v2206 = vpop.permute.xlu0 %2205
      %2207 = vrot.lane.b32.xlu0 %v2068, 64
      %v2208 = vpop.permute.xlu0 %2207
      %2209 = vrot.lane.b32.xlu0 %v2069, 64
      %v2210 = vpop.permute.xlu0 %2209
      %2211 = vrot.lane.b32.xlu0 %v2070, 64
      %v2212 = vpop.permute.xlu0 %2211
      %v2217 = vrot.slane %v2070, 4
      %v2218 = vrot.slane %v2071, 4
      %v2219 = vsel %vm2116, %v2217, %v2218
      %v2220 = vrot.slane %v2072, 4
      %v2221 = vsel %vm2116, %v2218, %v2220
      %v2222 = vrot.slane %v2073, 4
      %v2223 = vsel %vm2116, %v2220, %v2222
      %v2224 = vrot.slane %v2074, 4
      %v2225 = vsel %vm2116, %v2222, %v2224
      %2226 = vrot.lane.b32.xlu0 %v2219, 96
      %v2227 = vpop.permute.xlu0 %2226
      %2228 = vrot.lane.b32.xlu0 %v2221, 96
      %v2229 = vpop.permute.xlu0 %2228
      %2230 = vrot.lane.b32.xlu0 %v2223, 96
      %v2231 = vpop.permute.xlu0 %2230
      %2232 = vrot.lane.b32.xlu0 %v2225, 96
      %v2233 = vpop.permute.xlu0 %2232
      %2234 = vrot.lane.b32.xlu0 %v2224, 96
      %v2235 = vpop.permute.xlu0 %2234
      %v2241 = vrot.slane %v2079, 4
      %v2242 = vrot.slane %v2080, 4
      %v2243 = vsel %vm2116, %v2241, %v2242
      %v2244 = vrot.slane %v2081, 4
      %v2245 = vsel %vm2116, %v2242, %v2244
      %v2246 = vrot.slane %v2082, 4
      %v2247 = vsel %vm2116, %v2244, %v2246
      %v2248 = vrot.slane %v2083, 4
      %v2249 = vsel %vm2116, %v2246, %v2248
      %2250 = vrot.lane.b32.xlu0 %v2243, 32
      %v2251 = vpop.permute.xlu0 %2250
      %2252 = vrot.lane.b32.xlu0 %v2245, 32
      %v2253 = vpop.permute.xlu0 %2252
      %2254 = vrot.lane.b32.xlu0 %v2247, 32
      %v2255 = vpop.permute.xlu0 %2254
      %2256 = vrot.lane.b32.xlu0 %v2249, 32
      %v2257 = vpop.permute.xlu0 %2256
      %2258 = vrot.lane.b32.xlu0 %v2248, 32
      %v2259 = vpop.permute.xlu0 %2258
      %2265 = vrot.lane.b32.xlu0 %v2084, 64
      %v2266 = vpop.permute.xlu0 %2265
      %2267 = vrot.lane.b32.xlu0 %v2085, 64
      %v2268 = vpop.permute.xlu0 %2267
      %2269 = vrot.lane.b32.xlu0 %v2086, 64
      %v2270 = vpop.permute.xlu0 %2269
      %2271 = vrot.lane.b32.xlu0 %v2087, 64
      %v2272 = vpop.permute.xlu0 %2271
      %2273 = vrot.lane.b32.xlu0 %v2088, 64
      %v2274 = vpop.permute.xlu0 %2273
      %v2279 = vrot.slane %v2088, 4
      %v2280 = vrot.slane %v2089, 4
      %v2281 = vsel %vm2116, %v2279, %v2280
      %v2282 = vrot.slane %v2090, 4
      %v2283 = vsel %vm2116, %v2280, %v2282
      %v2284 = vrot.slane %v2091, 4
      %v2285 = vsel %vm2116, %v2282, %v2284
      %v2286 = vrot.slane %v2092, 4
      %v2287 = vsel %vm2116, %v2284, %v2286
      %2288 = vrot.lane.b32.xlu0 %v2281, 96
      %v2289 = vpop.permute.xlu0 %2288
      %2290 = vrot.lane.b32.xlu0 %v2283, 96
      %v2291 = vpop.permute.xlu0 %2290
      %2292 = vrot.lane.b32.xlu0 %v2285, 96
      %v2293 = vpop.permute.xlu0 %2292
      %2294 = vrot.lane.b32.xlu0 %v2287, 96
      %v2295 = vpop.permute.xlu0 %2294
      %2296 = vrot.lane.b32.xlu0 %v2286, 96
      %v2297 = vpop.permute.xlu0 %2296
      %v2303 = vrot.slane %v2097, 4
      %v2304 = vrot.slane %v2098, 4
      %v2305 = vsel %vm2116, %v2303, %v2304
      %v2306 = vrot.slane %v2099, 4
      %v2307 = vsel %vm2116, %v2304, %v2306
      %v2308 = vrot.slane %v2100, 4
      %v2309 = vsel %vm2116, %v2306, %v2308
      %v2310 = vrot.slane %v2101, 4
      %v2311 = vsel %vm2116, %v2308, %v2310
      %2312 = vrot.lane.b32.xlu0 %v2305, 32
      %v2313 = vpop.permute.xlu0 %2312
      %2314 = vrot.lane.b32.xlu0 %v2307, 32
      %v2315 = vpop.permute.xlu0 %2314
      %2316 = vrot.lane.b32.xlu0 %v2309, 32
      %v2317 = vpop.permute.xlu0 %2316
      %2318 = vrot.lane.b32.xlu0 %v2311, 32
      %v2319 = vpop.permute.xlu0 %2318
      %2320 = vrot.lane.b32.xlu0 %v2310, 32
      %v2321 = vpop.permute.xlu0 %2320
      %2327 = vrot.lane.b32.xlu0 %v2102, 64
      %v2328 = vpop.permute.xlu0 %2327
      %2329 = vrot.lane.b32.xlu0 %v2103, 64
      %v2330 = vpop.permute.xlu0 %2329
      %2331 = vrot.lane.b32.xlu0 %v2104, 64
      %v2332 = vpop.permute.xlu0 %2331
      %2333 = vrot.lane.b32.xlu0 %v2105, 64
      %v2334 = vpop.permute.xlu0 %2333
      %2335 = vrot.lane.b32.xlu0 %v2106, 64
      %v2336 = vpop.permute.xlu0 %2335
      %v2341 = vrot.slane %v2106, 4
      %v2342 = vrot.slane %v2107, 4
      %v2343 = vsel %vm2116, %v2341, %v2342
      %v2344 = vrot.slane %v2108, 4
      %v2345 = vsel %vm2116, %v2342, %v2344
      %v2346 = vrot.slane %v2109, 4
      %v2347 = vsel %vm2116, %v2344, %v2346
      %v2348 = vrot.slane %v2110, 4
      %v2349 = vsel %vm2116, %v2346, %v2348
      %2350 = vrot.lane.b32.xlu0 %v2343, 96
      %v2351 = vpop.permute.xlu0 %2350
      %2352 = vrot.lane.b32.xlu0 %v2345, 96
      %v2353 = vpop.permute.xlu0 %2352
      %2354 = vrot.lane.b32.xlu0 %v2347, 96
      %v2355 = vpop.permute.xlu0 %2354
      %2356 = vrot.lane.b32.xlu0 %v2349, 96
      %v2357 = vpop.permute.xlu0 %2356
      %2358 = vrot.lane.b32.xlu0 %v2348, 96
      %v2359 = vpop.permute.xlu0 %2358
      %vm2360 = vcmask 261120
      %v2363 = vsel %vm2360, %v2039, %v2127
      %v2366 = vsel %vm2360, %v2040, %v2129
      %v2369 = vsel %vm2360, %v2041, %v2131
      %v2372 = vsel %vm2360, %v2042, %v2133
      %v2375 = vsel %vm2360, %v2043, %v2135
      %vm2376 = vcmask 523264
      %v2378 = vsel %vm2376, %v2363, %v2142
      %v2380 = vsel %vm2376, %v2366, %v2144
      %v2382 = vsel %vm2376, %v2369, %v2146
      %v2384 = vsel %vm2376, %v2372, %v2148
      %v2386 = vsel %vm2376, %v2375, %v2150
      %vm2387 = vcmask 785408
      %v2389 = vsel %vm2387, %v2378, %v2165
      %v2392 = vsel %vm2387, %v2380, %v2167
      %v2395 = vsel %vm2387, %v2382, %v2169
      %v2398 = vsel %vm2387, %v2384, %v2171
      %v2401 = vsel %vm2387, %v2386, %v2173
      %v2405 = vsel %vm2360, %v2057, %v2189
      %v2408 = vsel %vm2360, %v2058, %v2191
      %v2411 = vsel %vm2360, %v2059, %v2193
      %v2414 = vsel %vm2360, %v2060, %v2195
      %v2417 = vsel %vm2360, %v2061, %v2197
      %v2419 = vsel %vm2376, %v2405, %v2204
      %v2421 = vsel %vm2376, %v2408, %v2206
      %v2423 = vsel %vm2376, %v2411, %v2208
      %v2425 = vsel %vm2376, %v2414, %v2210
      %v2427 = vsel %vm2376, %v2417, %v2212
      %v2429 = vsel %vm2387, %v2419, %v2227
      %v2432 = vsel %vm2387, %v2421, %v2229
      %v2435 = vsel %vm2387, %v2423, %v2231
      %v2438 = vsel %vm2387, %v2425, %v2233
      %v2441 = vsel %vm2387, %v2427, %v2235
      %v2445 = vsel %vm2360, %v2075, %v2251
      %v2448 = vsel %vm2360, %v2076, %v2253
      %v2451 = vsel %vm2360, %v2077, %v2255
      %v2454 = vsel %vm2360, %v2078, %v2257
      %v2457 = vsel %vm2360, %v2079, %v2259
      %v2459 = vsel %vm2376, %v2445, %v2266
      %v2461 = vsel %vm2376, %v2448, %v2268
      %v2463 = vsel %vm2376, %v2451, %v2270
      %v2465 = vsel %vm2376, %v2454, %v2272
      %v2467 = vsel %vm2376, %v2457, %v2274
      %v2469 = vsel %vm2387, %v2459, %v2289
      %v2472 = vsel %vm2387, %v2461, %v2291
      %v2475 = vsel %vm2387, %v2463, %v2293
      %v2478 = vsel %vm2387, %v2465, %v2295
      %v2481 = vsel %vm2387, %v2467, %v2297
      %v2485 = vsel %vm2360, %v2093, %v2313
      %v2488 = vsel %vm2360, %v2094, %v2315
      %v2491 = vsel %vm2360, %v2095, %v2317
      %v2494 = vsel %vm2360, %v2096, %v2319
      %v2497 = vsel %vm2360, %v2097, %v2321
      %v2499 = vsel %vm2376, %v2485, %v2328
      %v2501 = vsel %vm2376, %v2488, %v2330
      %v2503 = vsel %vm2376, %v2491, %v2332
      %v2505 = vsel %vm2376, %v2494, %v2334
      %v2507 = vsel %vm2376, %v2497, %v2336
      %v2509 = vsel %vm2387, %v2499, %v2351
      %v2512 = vsel %vm2387, %v2501, %v2353
      %v2515 = vsel %vm2387, %v2503, %v2355
      %v2518 = vsel %vm2387, %v2505, %v2357
      %v2521 = vsel %vm2387, %v2507, %v2359
      %v2523 = vld [vmem:[%s2] sm:$0xf]
      %v2524 = vld [vmem:[%s2 + $0x4] sm:$0xf]
      %v2525 = vld [vmem:[%s2 + $0x8] sm:$0xf]
      %v2526 = vld [vmem:[%s2 + $0xc] sm:$0xf]
      %v2527 = vld [vmem:[%s2 + $0x10] sm:$0xf]
      %v2528 = vld [vmem:[%s2 + $0x14] sm:$0xf]
      %v2529 = vld [vmem:[%s2 + $0x18] sm:$0xf]
      %v2530 = vld [vmem:[%s2 + $0x1c] sm:$0xf]
      %v2531 = vld [vmem:[%s2 + $0x20] sm:$0xf]
      %v2532 = vld [vmem:[%s2 + $0x24] sm:$0xf]
      %v2533 = vld [vmem:[%s2 + $0x28] sm:$0xf]
      %v2534 = vld [vmem:[%s2 + $0x2c] sm:$0xf]
      %v2535 = vld [vmem:[%s2 + $0x30] sm:$0xf]
      %v2536 = vld [vmem:[%s2 + $0x34] sm:$0xf]
      %v2537 = vld [vmem:[%s2 + $0x38] sm:$0xf]
      %v2538 = vld [vmem:[%s2 + $0x3c] sm:$0xf]
      %v2539 = vld [vmem:[%s2 + $0x40] sm:$0xf]
      %v2540 = vld [vmem:[%s2 + $0x44] sm:$0xf]
      %v2541 = vld [vmem:[%s2 + $0x48] sm:$0xf]
      %v2542 = vld [vmem:[%s2 + $0x4c] sm:$0xf]
      %v2543 = vld [vmem:[%s2 + $0x50] sm:$0xf]
      %v2544 = vld [vmem:[%s2 + $0x54] sm:$0xf]
      %v2545 = vld [vmem:[%s2 + $0x58] sm:$0xf]
      %v2546 = vld [vmem:[%s2 + $0x5c] sm:$0xf]
      %v2547 = vld [vmem:[%s2 + $0x60] sm:$0xf]
      %v2548 = vld [vmem:[%s2 + $0x64] sm:$0xf]
      %v2549 = vld [vmem:[%s2 + $0x68] sm:$0xf]
      %v2550 = vld [vmem:[%s2 + $0x6c] sm:$0xf]
      %v2551 = vld [vmem:[%s2 + $0x70] sm:$0xf]
      %v2552 = vld [vmem:[%s2 + $0x74] sm:$0xf]
      %v2553 = vld [vmem:[%s2 + $0x78] sm:$0xf]
      %v2554 = vld [vmem:[%s2 + $0x7c] sm:$0xf]
      %v2555 = vld [vmem:[%s2 + $0x80] sm:$0xf]
      %v2556 = vld [vmem:[%s2 + $0x84] sm:$0xf]
      %v2557 = vld [vmem:[%s2 + $0x88] sm:$0xf]
      %v2558 = vld [vmem:[%s2 + $0x8c] sm:$0xf]
      %v2559 = vld [vmem:[%s2 + $0x90] sm:$0xf]
      %v2560 = vld [vmem:[%s2 + $0x94] sm:$0xf]
      %v2561 = vld [vmem:[%s2 + $0x98] sm:$0xf]
      %v2562 = vld [vmem:[%s2 + $0x9c] sm:$0xf]
      %v2563 = vld [vmem:[%s2 + $0xa0] sm:$0xf]
      %v2564 = vld [vmem:[%s2 + $0xa4] sm:$0xf]
      %v2565 = vld [vmem:[%s2 + $0xa8] sm:$0xf]
      %v2566 = vld [vmem:[%s2 + $0xac] sm:$0xf]
      %v2567 = vld [vmem:[%s2 + $0xb0] sm:$0xf]
      %v2568 = vld [vmem:[%s2 + $0xb4] sm:$0xf]
      %v2569 = vld [vmem:[%s2 + $0xb8] sm:$0xf]
      %v2570 = vld [vmem:[%s2 + $0xbc] sm:$0xf]
      %v2571 = vld [vmem:[%s2 + $0xc0] sm:$0xf]
      %v2572 = vld [vmem:[%s2 + $0xc4] sm:$0xf]
      %v2573 = vld [vmem:[%s2 + $0xc8] sm:$0xf]
      %v2574 = vld [vmem:[%s2 + $0xcc] sm:$0xf]
      %v2575 = vld [vmem:[%s2 + $0xd0] sm:$0xf]
      %v2576 = vld [vmem:[%s2 + $0xd4] sm:$0xf]
      %v2577 = vld [vmem:[%s2 + $0xd8] sm:$0xf]
      %v2578 = vld [vmem:[%s2 + $0xdc] sm:$0xf]
      %v2579 = vld [vmem:[%s2 + $0xe0] sm:$0xf]
      %v2580 = vld [vmem:[%s2 + $0xe4] sm:$0xf]
      %v2581 = vld [vmem:[%s2 + $0xe8] sm:$0xf]
      %v2582 = vld [vmem:[%s2 + $0xec] sm:$0xf]
      %v2583 = vld [vmem:[%s2 + $0xf0] sm:$0xf]
      %v2584 = vld [vmem:[%s2 + $0xf4] sm:$0xf]
      %v2585 = vld [vmem:[%s2 + $0xf8] sm:$0xf]
      %v2586 = vld [vmem:[%s2 + $0xfc] sm:$0xf]
      %v2588 = vlaneseq
      %v2589 = vshrl.u32 %v2588, 7
      %v2590 = vsub.s32 0, %v2589
      %v2591 = vrot.slane %v284, %v2590
      %v2657 = vunpack.c.l.b16 %v2523
      %v2658 = vunpack.c.l.b16 %v2524
      %v2659 = vunpack.c.l.b16 %v2525
      %v2660 = vunpack.c.l.b16 %v2526
      %v2661 = vunpack.c.l.b16 %v2527
      %v2662 = vunpack.c.l.b16 %v2528
      %v2663 = vunpack.c.l.b16 %v2529
      %v2664 = vunpack.c.l.b16 %v2530
      %v2665 = vunpack.c.l.b16 %v2531
      %v2666 = vunpack.c.l.b16 %v2532
      %v2667 = vunpack.c.l.b16 %v2533
      %v2668 = vunpack.c.l.b16 %v2534
      %v2669 = vunpack.c.l.b16 %v2535
      %v2670 = vunpack.c.l.b16 %v2536
      %v2671 = vunpack.c.l.b16 %v2537
      %v2672 = vunpack.c.l.b16 %v2538
      %v2673 = vunpack.c.l.b16 %v2539
      %v2674 = vunpack.c.l.b16 %v2540
      %v2675 = vunpack.c.l.b16 %v2541
      %v2676 = vunpack.c.l.b16 %v2542
      %v2677 = vunpack.c.l.b16 %v2543
      %v2678 = vunpack.c.l.b16 %v2544
      %v2679 = vunpack.c.l.b16 %v2545
      %v2680 = vunpack.c.l.b16 %v2546
      %v2681 = vunpack.c.l.b16 %v2547
      %v2682 = vunpack.c.l.b16 %v2548
      %v2683 = vunpack.c.l.b16 %v2549
      %v2684 = vunpack.c.l.b16 %v2550
      %v2685 = vunpack.c.l.b16 %v2551
      %v2686 = vunpack.c.l.b16 %v2552
      %v2687 = vunpack.c.l.b16 %v2553
      %v2688 = vunpack.c.l.b16 %v2554
      %v2689 = vunpack.c.l.b16 %v2555
      %v2690 = vunpack.c.l.b16 %v2556
      %v2691 = vunpack.c.l.b16 %v2557
      %v2692 = vunpack.c.l.b16 %v2558
      %v2693 = vunpack.c.l.b16 %v2559
      %v2694 = vunpack.c.l.b16 %v2560
      %v2695 = vunpack.c.l.b16 %v2561
      %v2696 = vunpack.c.l.b16 %v2562
      %v2697 = vunpack.c.l.b16 %v2563
      %v2698 = vunpack.c.l.b16 %v2564
      %v2699 = vunpack.c.l.b16 %v2565
      %v2700 = vunpack.c.l.b16 %v2566
      %v2701 = vunpack.c.l.b16 %v2567
      %v2702 = vunpack.c.l.b16 %v2568
      %v2703 = vunpack.c.l.b16 %v2569
      %v2704 = vunpack.c.l.b16 %v2570
      %v2705 = vunpack.c.l.b16 %v2571
      %v2706 = vunpack.c.l.b16 %v2572
      %v2707 = vunpack.c.l.b16 %v2573
      %v2708 = vunpack.c.l.b16 %v2574
      %v2709 = vunpack.c.l.b16 %v2575
      %v2710 = vunpack.c.l.b16 %v2576
      %v2711 = vunpack.c.l.b16 %v2577
      %v2712 = vunpack.c.l.b16 %v2578
      %v2713 = vunpack.c.l.b16 %v2579
      %v2714 = vunpack.c.l.b16 %v2580
      %v2715 = vunpack.c.l.b16 %v2581
      %v2716 = vunpack.c.l.b16 %v2582
      %v2717 = vunpack.c.l.b16 %v2583
      %v2718 = vunpack.c.l.b16 %v2584
      %v2719 = vunpack.c.l.b16 %v2585
      %v2720 = vunpack.c.l.b16 %v2586
      %v2721 = vpack.c.b16 %v2658, %v2657
      %v2722 = vpack.c.b16 %v2660, %v2659
      %v2723 = vpack.c.b16 %v2662, %v2661
      %v2724 = vpack.c.b16 %v2664, %v2663
      %v2725 = vpack.c.b16 %v2666, %v2665
      %v2726 = vpack.c.b16 %v2668, %v2667
      %v2727 = vpack.c.b16 %v2670, %v2669
      %v2728 = vpack.c.b16 %v2672, %v2671
      %v2729 = vpack.c.b16 %v2674, %v2673
      %v2730 = vpack.c.b16 %v2676, %v2675
      %v2731 = vpack.c.b16 %v2678, %v2677
      %v2732 = vpack.c.b16 %v2680, %v2679
      %v2733 = vpack.c.b16 %v2682, %v2681
      %v2734 = vpack.c.b16 %v2684, %v2683
      %v2735 = vpack.c.b16 %v2686, %v2685
      %v2736 = vpack.c.b16 %v2688, %v2687
      %v2737 = vpack.c.b16 %v2690, %v2689
      %v2738 = vpack.c.b16 %v2692, %v2691
      %v2739 = vpack.c.b16 %v2694, %v2693
      %v2740 = vpack.c.b16 %v2696, %v2695
      %v2741 = vpack.c.b16 %v2698, %v2697
      %v2742 = vpack.c.b16 %v2700, %v2699
      %v2743 = vpack.c.b16 %v2702, %v2701
      %v2744 = vpack.c.b16 %v2704, %v2703
      %v2745 = vpack.c.b16 %v2706, %v2705
      %v2746 = vpack.c.b16 %v2708, %v2707
      %v2747 = vpack.c.b16 %v2710, %v2709
      %v2748 = vpack.c.b16 %v2712, %v2711
      %v2749 = vpack.c.b16 %v2714, %v2713
      %v2750 = vpack.c.b16 %v2716, %v2715
      %v2751 = vpack.c.b16 %v2718, %v2717
      %v2752 = vpack.c.b16 %v2720, %v2719
      %2785 = vmatprep.subr.bf16.mxu0 0
      %2786 = vmatpush1.bf16.msra.mxu0 %v2721
      %2787 = vmatprep.subr.bf16.mxu0 0
      %2788 = vmatpush1.bf16.msra.mxu0 %v2722
      %2789 = vmatprep.subr.bf16.mxu0 0
      %2790 = vmatpush1.bf16.msra.mxu0 %v2723
      %2791 = vmatprep.subr.bf16.mxu0 0
      %2792 = vmatpush1.bf16.msra.mxu0 %v2724
      %2793 = vmatprep.subr.bf16.mxu0 0
      %2794 = vmatpush1.bf16.msra.mxu0 %v2725
      %2795 = vmatprep.subr.bf16.mxu0 0
      %2796 = vmatpush1.bf16.msra.mxu0 %v2726
      %2797 = vmatprep.subr.bf16.mxu0 0
      %2798 = vmatpush1.bf16.msra.mxu0 %v2727
      %2799 = vmatprep.subr.bf16.mxu0 0
      %2800 = vmatpush1.bf16.msra.mxu0 %v2728
      %2801 = vmatprep.subr.bf16.mxu0 0
      %2802 = vmatpush1.bf16.msra.mxu0 %v2729
      %2803 = vmatprep.subr.bf16.mxu0 0
      %2804 = vmatpush1.bf16.msra.mxu0 %v2730
      %2805 = vmatprep.subr.bf16.mxu0 0
      %2806 = vmatpush1.bf16.msra.mxu0 %v2731
      %2807 = vmatprep.subr.bf16.mxu0 0
      %2808 = vmatpush1.bf16.msra.mxu0 %v2732
      %2809 = vmatprep.subr.bf16.mxu0 0
      %2810 = vmatpush1.bf16.msra.mxu0 %v2733
      %2811 = vmatprep.subr.bf16.mxu0 0
      %2812 = vmatpush1.bf16.msra.mxu0 %v2734
      %2813 = vmatprep.subr.bf16.mxu0 0
      %2814 = vmatpush1.bf16.msra.mxu0 %v2735
      %2815 = vmatprep.subr.bf16.mxu0 0
      %2816 = vmatpush1.bf16.msra.mxu0 %v2736
      %2817 = vmatprep.mubr.bf16.mxu0 %v2429
      %2818 = vmatmul.mubr.bf16.gmra.mrb[0].mxu0 %v2389
      %v2819 = vpop.f32.mrb[0].mxu0
      %v2820 = vadd.f32 %v2591, %v2819
      %v2821 = vpop.f32.mrb[0].mxu0
      %v2822 = vpop.f32.mrb[0].mxu0
      %v2823 = vadd.f32 %v2591, %v2822
      %v2824 = vpop.f32.mrb[0].mxu0
      %2825 = vmatprep.mubr.bf16.mxu0 %v2432
      %2826 = vmatmul.mubr.bf16.gmra.mrb[0].mxu0 %v2392
      %v2827 = vpop.f32.mrb[0].mxu0
      %v2828 = vadd.f32 %v2591, %v2827
      %v2829 = vpop.f32.mrb[0].mxu0
      %v2830 = vpop.f32.mrb[0].mxu0
      %v2831 = vadd.f32 %v2591, %v2830
      %v2832 = vpop.f32.mrb[0].mxu0
      %2833 = vmatprep.mubr.bf16.mxu0 %v2435
      %2834 = vmatmul.mubr.bf16.gmra.mrb[0].mxu0 %v2395
      %v2835 = vpop.f32.mrb[0].mxu0
      %v2836 = vadd.f32 %v2591, %v2835
      %v2837 = vpop.f32.mrb[0].mxu0
      %v2838 = vpop.f32.mrb[0].mxu0
      %v2839 = vadd.f32 %v2591, %v2838
      %v2840 = vpop.f32.mrb[0].mxu0
      %2841 = vmatprep.mubr.bf16.mxu0 %v2438
      %2842 = vmatmul.mubr.bf16.gmra.mrb[0].mxu0 %v2398
      %v2843 = vpop.f32.mrb[0].mxu0
      %v2844 = vadd.f32 %v2591, %v2843
      %v2845 = vpop.f32.mrb[0].mxu0
      %v2846 = vpop.f32.mrb[0].mxu0
      %v2847 = vadd.f32 %v2591, %v2846
      %v2848 = vpop.f32.mrb[0].mxu0
      %2849 = vmatprep.mubr.bf16.mxu0 %v2441
      %2850 = vmatmul.mubr.bf16.gmra.mrb[0].mxu0 %v2401
      %v2851 = vpop.f32.mrb[0].mxu0
      %v2852 = vadd.f32 %v2591, %v2851
      %v2853 = vpop.f32.mrb[0].mxu0
      %v2854 = vpop.f32.mrb[0].mxu0
      %v2855 = vpop.f32.mrb[0].mxu0
      %2856 = vdwg.mxu0
      %2857 = vmatprep.subr.bf16.mxu0 0
      %2858 = vmatpush1.bf16.msra.mxu0 %v2737
      %2859 = vmatprep.subr.bf16.mxu0 0
      %2860 = vmatpush1.bf16.msra.mxu0 %v2738
      %2861 = vmatprep.subr.bf16.mxu0 0
      %2862 = vmatpush1.bf16.msra.mxu0 %v2739
      %2863 = vmatprep.subr.bf16.mxu0 0
      %2864 = vmatpush1.bf16.msra.mxu0 %v2740
      %2865 = vmatprep.subr.bf16.mxu0 0
      %2866 = vmatpush1.bf16.msra.mxu0 %v2741
      %2867 = vmatprep.subr.bf16.mxu0 0
      %2868 = vmatpush1.bf16.msra.mxu0 %v2742
      %2869 = vmatprep.subr.bf16.mxu0 0
      %2870 = vmatpush1.bf16.msra.mxu0 %v2743
      %2871 = vmatprep.subr.bf16.mxu0 0
      %2872 = vmatpush1.bf16.msra.mxu0 %v2744
      %2873 = vmatprep.subr.bf16.mxu0 0
      %2874 = vmatpush1.bf16.msra.mxu0 %v2745
      %2875 = vmatprep.subr.bf16.mxu0 0
      %2876 = vmatpush1.bf16.msra.mxu0 %v2746
      %2877 = vmatprep.subr.bf16.mxu0 0
      %2878 = vmatpush1.bf16.msra.mxu0 %v2747
      %2879 = vmatprep.subr.bf16.mxu0 0
      %2880 = vmatpush1.bf16.msra.mxu0 %v2748
      %2881 = vmatprep.subr.bf16.mxu0 0
      %2882 = vmatpush1.bf16.msra.mxu0 %v2749
      %2883 = vmatprep.subr.bf16.mxu0 0
      %2884 = vmatpush1.bf16.msra.mxu0 %v2750
      %2885 = vmatprep.subr.bf16.mxu0 0
      %2886 = vmatpush1.bf16.msra.mxu0 %v2751
      %2887 = vmatprep.subr.bf16.mxu0 0
      %2888 = vmatpush1.bf16.msra.mxu0 %v2752
      %2889 = vmatprep.mubr.bf16.mxu0 %v2509
      %2890 = vmatmul.mubr.bf16.gmra.mrb[0].mxu0 %v2469
      %v2891 = vpop.f32.mrb[0].mxu0
      %v2892 = vadd.f32 %v2820, %v2891
      %v2893 = vpop.f32.mrb[0].mxu0
      %v2894 = vpop.f32.mrb[0].mxu0
      %v2895 = vadd.f32 %v2823, %v2894
      %v2896 = vpop.f32.mrb[0].mxu0
      %2897 = vmatprep.mubr.bf16.mxu0 %v2512
      %2898 = vmatmul.mubr.bf16.gmra.mrb[0].mxu0 %v2472
      %v2899 = vpop.f32.mrb[0].mxu0
      %v2900 = vadd.f32 %v2828, %v2899
      %v2901 = vpop.f32.mrb[0].mxu0
      %v2902 = vpop.f32.mrb[0].mxu0
      %v2903 = vadd.f32 %v2831, %v2902
      %v2904 = vpop.f32.mrb[0].mxu0
      %2905 = vmatprep.mubr.bf16.mxu0 %v2515
      %2906 = vmatmul.mubr.bf16.gmra.mrb[0].mxu0 %v2475
      %v2907 = vpop.f32.mrb[0].mxu0
      %v2908 = vadd.f32 %v2836, %v2907
      %v2909 = vpop.f32.mrb[0].mxu0
      %v2910 = vpop.f32.mrb[0].mxu0
      %v2911 = vadd.f32 %v2839, %v2910
      %v2912 = vpop.f32.mrb[0].mxu0
      %2913 = vmatprep.mubr.bf16.mxu0 %v2518
      %2914 = vmatmul.mubr.bf16.gmra.mrb[0].mxu0 %v2478
      %v2915 = vpop.f32.mrb[0].mxu0
      %v2916 = vadd.f32 %v2844, %v2915
      %v2917 = vpop.f32.mrb[0].mxu0
      %v2918 = vpop.f32.mrb[0].mxu0
      %v2919 = vadd.f32 %v2847, %v2918
      %v2920 = vpop.f32.mrb[0].mxu0
      %2921 = vmatprep.mubr.bf16.mxu0 %v2521
      %2922 = vmatmul.mubr.bf16.gmra.mrb[0].mxu0 %v2481
      %v2923 = vpop.f32.mrb[0].mxu0
      %v2924 = vadd.f32 %v2852, %v2923
      %v2925 = vpop.f32.mrb[0].mxu0
      %v2926 = vpop.f32.mrb[0].mxu0
      %v2927 = vpop.f32.mrb[0].mxu0
      %2928 = vdwg.mxu0
      %v2929 = vmax.f32 %v2892, 0.0
      %v2930 = vmax.f32 %v2895, 0.0
      %v2931 = vmax.f32 %v2900, 0.0
      %v2932 = vmax.f32 %v2903, 0.0
      %v2933 = vmax.f32 %v2908, 0.0
      %v2934 = vmax.f32 %v2911, 0.0
      %v2935 = vmax.f32 %v2916, 0.0
      %v2936 = vmax.f32 %v2919, 0.0
      %v2937 = vmax.f32 %v2924, 0.0
      %v2938 = vpack.c.bf16 %v2930, %v2929
      %v2939 = vpack.c.bf16 %v2932, %v2931
      %v2940 = vpack.c.bf16 %v2934, %v2933
      %v2941 = vpack.c.bf16 %v2936, %v2935
      %v2942 = vpack.c.bf16 %v2937, %v2937
      %v2944 = vrot.slane %v2938, 4
      %2945 = vrot.lane.b32.xlu0 %v2944, 64
      %v2946 = vpop.permute.xlu0 %2945
      %v2948 = vrot.slane %v2939, 4
      %2949 = vrot.lane.b32.xlu0 %v2948, 64
      %v2950 = vpop.permute.xlu0 %2949
      %v2952 = vrot.slane %v2940, 4
      %2953 = vrot.lane.b32.xlu0 %v2952, 64
      %v2954 = vpop.permute.xlu0 %2953
      %v2956 = vrot.slane %v2941, 4
      %2957 = vrot.lane.b32.xlu0 %v2956, 64
      %v2958 = vpop.permute.xlu0 %2957
      %v2961 = vsel %vm2376, %v2938, %v2946
      %v2965 = vsel %vm2376, %v2939, %v2950
      %v2969 = vsel %vm2376, %v2940, %v2954
      %v2973 = vsel %vm2376, %v2941, %v2958
      %v2975 = vld [vmem:[%s3] sm:$0xf]
      %v2976 = vld [vmem:[%s3 + $0x4] sm:$0xf]
      %v2977 = vld [vmem:[%s3 + $0x8] sm:$0xf]
      %v2978 = vld [vmem:[%s3 + $0xc] sm:$0xf]
      %v2979 = vld [vmem:[%s3 + $0x10] sm:$0xf]
      %v2980 = vld [vmem:[%s3 + $0x14] sm:$0xf]
      %v2981 = vld [vmem:[%s3 + $0x18] sm:$0xf]
      %v2982 = vld [vmem:[%s3 + $0x1c] sm:$0xf]
      %v2983 = vld [vmem:[%s3 + $0x20] sm:$0xf]
      %v2984 = vld [vmem:[%s3 + $0x24] sm:$0xf]
      %v2985 = vld [vmem:[%s3 + $0x28] sm:$0xf]
      %v2986 = vld [vmem:[%s3 + $0x2c] sm:$0xf]
      %v2987 = vld [vmem:[%s3 + $0x30] sm:$0xf]
      %v2988 = vld [vmem:[%s3 + $0x34] sm:$0xf]
      %v2989 = vld [vmem:[%s3 + $0x38] sm:$0xf]
      %v2990 = vld [vmem:[%s3 + $0x3c] sm:$0xf]
      %v2991 = vld [vmem:[%s3 + $0x40] sm:$0xf]
      %v2992 = vld [vmem:[%s3 + $0x44] sm:$0xf]
      %v2993 = vld [vmem:[%s3 + $0x48] sm:$0xf]
      %v2994 = vld [vmem:[%s3 + $0x4c] sm:$0xf]
      %v2995 = vld [vmem:[%s3 + $0x50] sm:$0xf]
      %v2996 = vld [vmem:[%s3 + $0x54] sm:$0xf]
      %v2997 = vld [vmem:[%s3 + $0x58] sm:$0xf]
      %v2998 = vld [vmem:[%s3 + $0x5c] sm:$0xf]
      %v2999 = vld [vmem:[%s3 + $0x60] sm:$0xf]
      %v3000 = vld [vmem:[%s3 + $0x64] sm:$0xf]
      %v3001 = vld [vmem:[%s3 + $0x68] sm:$0xf]
      %v3002 = vld [vmem:[%s3 + $0x6c] sm:$0xf]
      %v3003 = vld [vmem:[%s3 + $0x70] sm:$0xf]
      %v3004 = vld [vmem:[%s3 + $0x74] sm:$0xf]
      %v3005 = vld [vmem:[%s3 + $0x78] sm:$0xf]
      %v3006 = vld [vmem:[%s3 + $0x7c] sm:$0xf]
      %v3007 = vld [vmem:[%s3 + $0x80] sm:$0xf]
      %v3008 = vld [vmem:[%s3 + $0x84] sm:$0xf]
      %v3009 = vld [vmem:[%s3 + $0x88] sm:$0xf]
      %v3010 = vld [vmem:[%s3 + $0x8c] sm:$0xf]
      %v3011 = vld [vmem:[%s3 + $0x90] sm:$0xf]
      %v3012 = vld [vmem:[%s3 + $0x94] sm:$0xf]
      %v3013 = vld [vmem:[%s3 + $0x98] sm:$0xf]
      %v3014 = vld [vmem:[%s3 + $0x9c] sm:$0xf]
      %v3015 = vld [vmem:[%s3 + $0xa0] sm:$0xf]
      %v3016 = vld [vmem:[%s3 + $0xa4] sm:$0xf]
      %v3017 = vld [vmem:[%s3 + $0xa8] sm:$0xf]
      %v3018 = vld [vmem:[%s3 + $0xac] sm:$0xf]
      %v3019 = vld [vmem:[%s3 + $0xb0] sm:$0xf]
      %v3020 = vld [vmem:[%s3 + $0xb4] sm:$0xf]
      %v3021 = vld [vmem:[%s3 + $0xb8] sm:$0xf]
      %v3022 = vld [vmem:[%s3 + $0xbc] sm:$0xf]
      %v3023 = vld [vmem:[%s3 + $0xc0] sm:$0xf]
      %v3024 = vld [vmem:[%s3 + $0xc4] sm:$0xf]
      %v3025 = vld [vmem:[%s3 + $0xc8] sm:$0xf]
      %v3026 = vld [vmem:[%s3 + $0xcc] sm:$0xf]
      %v3027 = vld [vmem:[%s3 + $0xd0] sm:$0xf]
      %v3028 = vld [vmem:[%s3 + $0xd4] sm:$0xf]
      %v3029 = vld [vmem:[%s3 + $0xd8] sm:$0xf]
      %v3030 = vld [vmem:[%s3 + $0xdc] sm:$0xf]
      %v3031 = vld [vmem:[%s3 + $0xe0] sm:$0xf]
      %v3032 = vld [vmem:[%s3 + $0xe4] sm:$0xf]
      %v3033 = vld [vmem:[%s3 + $0xe8] sm:$0xf]
      %v3034 = vld [vmem:[%s3 + $0xec] sm:$0xf]
      %v3035 = vld [vmem:[%s3 + $0xf0] sm:$0xf]
      %v3036 = vld [vmem:[%s3 + $0xf4] sm:$0xf]
      %v3037 = vld [vmem:[%s3 + $0xf8] sm:$0xf]
      %v3038 = vld [vmem:[%s3 + $0xfc] sm:$0xf]
      %v3039 = vld [vmem:[%s3 + $0x100] sm:$0xf]
      %v3040 = vld [vmem:[%s3 + $0x104] sm:$0xf]
      %v3041 = vld [vmem:[%s3 + $0x108] sm:$0xf]
      %v3042 = vld [vmem:[%s3 + $0x10c] sm:$0xf]
      %v3043 = vld [vmem:[%s3 + $0x110] sm:$0xf]
      %v3044 = vld [vmem:[%s3 + $0x114] sm:$0xf]
      %v3045 = vld [vmem:[%s3 + $0x118] sm:$0xf]
      %v3046 = vld [vmem:[%s3 + $0x11c] sm:$0xf]
      %v3048 = vlaneseq
      %v3049 = vshrl.u32 %v3048, 7
      %v3050 = vsub.s32 0, %v3049
      %v3051 = vrot.slane %v285, %v3050
      %v3125 = vunpack.c.l.b16 %v2975
      %v3126 = vunpack.c.l.b16 %v2976
      %v3127 = vunpack.c.l.b16 %v2977
      %v3128 = vunpack.c.l.b16 %v2978
      %v3129 = vunpack.c.l.b16 %v2979
      %v3130 = vunpack.c.l.b16 %v2980
      %v3131 = vunpack.c.l.b16 %v2981
      %v3132 = vunpack.c.l.b16 %v2982
      %v3133 = vunpack.c.l.b16 %v2983
      %v3134 = vunpack.c.l.b16 %v2984
      %v3135 = vunpack.c.l.b16 %v2985
      %v3136 = vunpack.c.l.b16 %v2986
      %v3137 = vunpack.c.l.b16 %v2987
      %v3138 = vunpack.c.l.b16 %v2988
      %v3139 = vunpack.c.l.b16 %v2989
      %v3140 = vunpack.c.l.b16 %v2990
      %v3141 = vunpack.c.l.b16 %v2991
      %v3142 = vunpack.c.l.b16 %v2992
      %v3143 = vunpack.c.l.b16 %v2993
      %v3144 = vunpack.c.l.b16 %v2994
      %v3145 = vunpack.c.l.b16 %v2995
      %v3146 = vunpack.c.l.b16 %v2996
      %v3147 = vunpack.c.l.b16 %v2997
      %v3148 = vunpack.c.l.b16 %v2998
      %v3149 = vunpack.c.l.b16 %v2999
      %v3150 = vunpack.c.l.b16 %v3000
      %v3151 = vunpack.c.l.b16 %v3001
      %v3152 = vunpack.c.l.b16 %v3002
      %v3153 = vunpack.c.l.b16 %v3003
      %v3154 = vunpack.c.l.b16 %v3004
      %v3155 = vunpack.c.l.b16 %v3005
      %v3156 = vunpack.c.l.b16 %v3006
      %v3157 = vunpack.c.l.b16 %v3007
      %v3158 = vunpack.c.l.b16 %v3008
      %v3159 = vunpack.c.l.b16 %v3009
      %v3160 = vunpack.c.l.b16 %v3010
      %v3161 = vunpack.c.l.b16 %v3011
      %v3162 = vunpack.c.l.b16 %v3012
      %v3163 = vunpack.c.l.b16 %v3013
      %v3164 = vunpack.c.l.b16 %v3014
      %v3165 = vunpack.c.l.b16 %v3015
      %v3166 = vunpack.c.l.b16 %v3016
      %v3167 = vunpack.c.l.b16 %v3017
      %v3168 = vunpack.c.l.b16 %v3018
      %v3169 = vunpack.c.l.b16 %v3019
      %v3170 = vunpack.c.l.b16 %v3020
      %v3171 = vunpack.c.l.b16 %v3021
      %v3172 = vunpack.c.l.b16 %v3022
      %v3173 = vunpack.c.l.b16 %v3023
      %v3174 = vunpack.c.l.b16 %v3024
      %v3175 = vunpack.c.l.b16 %v3025
      %v3176 = vunpack.c.l.b16 %v3026
      %v3177 = vunpack.c.l.b16 %v3027
      %v3178 = vunpack.c.l.b16 %v3028
      %v3179 = vunpack.c.l.b16 %v3029
      %v3180 = vunpack.c.l.b16 %v3030
      %v3181 = vunpack.c.l.b16 %v3031
      %v3182 = vunpack.c.l.b16 %v3032
      %v3183 = vunpack.c.l.b16 %v3033
      %v3184 = vunpack.c.l.b16 %v3034
      %v3185 = vunpack.c.l.b16 %v3035
      %v3186 = vunpack.c.l.b16 %v3036
      %v3187 = vunpack.c.l.b16 %v3037
      %v3188 = vunpack.c.l.b16 %v3038
      %v3189 = vunpack.c.l.b16 %v3039
      %v3190 = vunpack.c.l.b16 %v3040
      %v3191 = vunpack.c.l.b16 %v3041
      %v3192 = vunpack.c.l.b16 %v3042
      %v3193 = vunpack.c.l.b16 %v3043
      %v3194 = vunpack.c.l.b16 %v3044
      %v3195 = vunpack.c.l.b16 %v3045
      %v3196 = vunpack.c.l.b16 %v3046
      %v3197 = vpack.c.b16 %v3126, %v3125
      %v3198 = vpack.c.b16 %v3128, %v3127
      %v3199 = vpack.c.b16 %v3130, %v3129
      %v3200 = vpack.c.b16 %v3132, %v3131
      %v3201 = vpack.c.b16 %v3134, %v3133
      %v3202 = vpack.c.b16 %v3136, %v3135
      %v3203 = vpack.c.b16 %v3138, %v3137
      %v3204 = vpack.c.b16 %v3140, %v3139
      %v3205 = vpack.c.b16 %v3142, %v3141
      %v3206 = vpack.c.b16 %v3144, %v3143
      %v3207 = vpack.c.b16 %v3146, %v3145
      %v3208 = vpack.c.b16 %v3148, %v3147
      %v3209 = vpack.c.b16 %v3150, %v3149
      %v3210 = vpack.c.b16 %v3152, %v3151
      %v3211 = vpack.c.b16 %v3154, %v3153
      %v3212 = vpack.c.b16 %v3156, %v3155
      %v3213 = vpack.c.b16 %v3158, %v3157
      %v3214 = vpack.c.b16 %v3160, %v3159
      %v3215 = vpack.c.b16 %v3162, %v3161
      %v3216 = vpack.c.b16 %v3164, %v3163
      %v3217 = vpack.c.b16 %v3166, %v3165
      %v3218 = vpack.c.b16 %v3168, %v3167
      %v3219 = vpack.c.b16 %v3170, %v3169
      %v3220 = vpack.c.b16 %v3172, %v3171
      %v3221 = vpack.c.b16 %v3174, %v3173
      %v3222 = vpack.c.b16 %v3176, %v3175
      %v3223 = vpack.c.b16 %v3178, %v3177
      %v3224 = vpack.c.b16 %v3180, %v3179
      %v3225 = vpack.c.b16 %v3182, %v3181
      %v3226 = vpack.c.b16 %v3184, %v3183
      %v3227 = vpack.c.b16 %v3186, %v3185
      %v3228 = vpack.c.b16 %v3188, %v3187
      %v3229 = vpack.c.b16 %v3190, %v3189
      %v3230 = vpack.c.b16 %v3192, %v3191
      %v3231 = vpack.c.b16 %v3194, %v3193
      %v3232 = vpack.c.b16 %v3196, %v3195
      %v3270 = vsel %vm2376, %v2942, 0
      %3272 = vmatprep.subr.bf16.mxu0 0
      %3273 = vmatpush1.bf16.msra.mxu0 %v3197
      %3274 = vmatprep.subr.bf16.mxu0 0
      %3275 = vmatpush1.bf16.msra.mxu0 %v3198
      %3276 = vmatprep.subr.bf16.mxu0 0
      %3277 = vmatpush1.bf16.msra.mxu0 %v3199
      %3278 = vmatprep.subr.bf16.mxu0 0
      %3279 = vmatpush1.bf16.msra.mxu0 %v3200
      %3280 = vmatprep.subr.bf16.mxu0 0
      %3281 = vmatpush1.bf16.msra.mxu0 %v3201
      %3282 = vmatprep.subr.bf16.mxu0 0
      %3283 = vmatpush1.bf16.msra.mxu0 %v3202
      %3284 = vmatprep.subr.bf16.mxu0 0
      %3285 = vmatpush1.bf16.msra.mxu0 %v3203
      %3286 = vmatprep.subr.bf16.mxu0 0
      %3287 = vmatpush1.bf16.msra.mxu0 %v3204
      %3288 = vmatprep.subr.bf16.mxu0 0
      %3289 = vmatpush1.bf16.msra.mxu0 %v3205
      %3290 = vmatprep.subr.bf16.mxu0 0
      %3291 = vmatpush1.bf16.msra.mxu0 %v3206
      %3292 = vmatprep.subr.bf16.mxu0 0
      %3293 = vmatpush1.bf16.msra.mxu0 %v3207
      %3294 = vmatprep.subr.bf16.mxu0 0
      %3295 = vmatpush1.bf16.msra.mxu0 %v3208
      %3296 = vmatprep.subr.bf16.mxu0 0
      %3297 = vmatpush1.bf16.msra.mxu0 %v3209
      %3298 = vmatprep.subr.bf16.mxu0 0
      %3299 = vmatpush1.bf16.msra.mxu0 %v3210
      %3300 = vmatprep.subr.bf16.mxu0 0
      %3301 = vmatpush1.bf16.msra.mxu0 %v3211
      %3302 = vmatprep.subr.bf16.mxu0 0
      %3303 = vmatpush1.bf16.msra.mxu0 %v3212
      %3304 = vmatprep.mubr.bf16.mxu0 %v2965
      %3305 = vmatmul.mubr.bf16.gmra.mrb[0].mxu0 %v2961
      %v3306 = vpop.f32.mrb[0].mxu0
      %v3307 = vadd.f32 %v3051, %v3306
      %v3308 = vpop.f32.mrb[0].mxu0
      %v3309 = vpop.f32.mrb[0].mxu0
      %v3310 = vpop.f32.mrb[0].mxu0
      %3311 = vdwg.mxu0
      %3312 = vmatprep.subr.bf16.mxu0 0
      %3313 = vmatpush1.bf16.msra.mxu0 %v3213
      %3314 = vmatprep.subr.bf16.mxu0 0
      %3315 = vmatpush1.bf16.msra.mxu0 %v3214
      %3316 = vmatprep.subr.bf16.mxu0 0
      %3317 = vmatpush1.bf16.msra.mxu0 %v3215
      %3318 = vmatprep.subr.bf16.mxu0 0
      %3319 = vmatpush1.bf16.msra.mxu0 %v3216
      %3320 = vmatprep.subr.bf16.mxu0 0
      %3321 = vmatpush1.bf16.msra.mxu0 %v3217
      %3322 = vmatprep.subr.bf16.mxu0 0
      %3323 = vmatpush1.bf16.msra.mxu0 %v3218
      %3324 = vmatprep.subr.bf16.mxu0 0
      %3325 = vmatpush1.bf16.msra.mxu0 %v3219
      %3326 = vmatprep.subr.bf16.mxu0 0
      %3327 = vmatpush1.bf16.msra.mxu0 %v3220
      %3328 = vmatprep.subr.bf16.mxu0 0
      %3329 = vmatpush1.bf16.msra.mxu0 %v3221
      %3330 = vmatprep.subr.bf16.mxu0 0
      %3331 = vmatpush1.bf16.msra.mxu0 %v3222
      %3332 = vmatprep.subr.bf16.mxu0 0
      %3333 = vmatpush1.bf16.msra.mxu0 %v3223
      %3334 = vmatprep.subr.bf16.mxu0 0
      %3335 = vmatpush1.bf16.msra.mxu0 %v3224
      %3336 = vmatprep.subr.bf16.mxu0 0
      %3337 = vmatpush1.bf16.msra.mxu0 %v3225
      %3338 = vmatprep.subr.bf16.mxu0 0
      %3339 = vmatpush1.bf16.msra.mxu0 %v3226
      %3340 = vmatprep.subr.bf16.mxu0 0
      %3341 = vmatpush1.bf16.msra.mxu0 %v3227
      %3342 = vmatprep.subr.bf16.mxu0 0
      %3343 = vmatpush1.bf16.msra.mxu0 %v3228
      %3344 = vmatprep.mubr.bf16.mxu0 %v2973
      %3345 = vmatmul.mubr.bf16.gmra.mrb[0].mxu0 %v2969
      %v3346 = vpop.f32.mrb[0].mxu0
      %v3347 = vadd.f32 %v3307, %v3346
      %v3348 = vpop.f32.mrb[0].mxu0
      %v3349 = vpop.f32.mrb[0].mxu0
      %v3350 = vpop.f32.mrb[0].mxu0
      %3351 = vdwg.mxu0
      %3352 = vmatprep.subr.bf16.mxu0 0
      %3353 = vmatpush1.bf16.msra.mxu0 %v3229
      %3354 = vmatprep.subr.bf16.mxu0 0
      %3355 = vmatpush1.bf16.msra.mxu0 %v3230
      %3356 = vmatprep.subr.bf16.mxu0 0
      %3357 = vmatpush1.bf16.msra.mxu0 %v3231
      %3358 = vmatprep.subr.bf16.mxu0 0
      %3359 = vmatpush1.bf16.msra.mxu0 %v3232
      %3360 = vmatprep.subr.bf16.mxu0 0
      %3361 = vmatpush1.bf16.msra.mxu0 0
      %3362 = vmatprep.subr.bf16.mxu0 0
      %3363 = vmatpush1.bf16.msra.mxu0 0
      %3364 = vmatprep.subr.bf16.mxu0 0
      %3365 = vmatpush1.bf16.msra.mxu0 0
      %3366 = vmatprep.subr.bf16.mxu0 0
      %3367 = vmatpush1.bf16.msra.mxu0 0
      %3368 = vmatprep.subr.bf16.mxu0 0
      %3369 = vmatpush1.bf16.msra.mxu0 0
      %3370 = vmatprep.subr.bf16.mxu0 0
      %3371 = vmatpush1.bf16.msra.mxu0 0
      %3372 = vmatprep.subr.bf16.mxu0 0
      %3373 = vmatpush1.bf16.msra.mxu0 0
      %3374 = vmatprep.subr.bf16.mxu0 0
      %3375 = vmatpush1.bf16.msra.mxu0 0
      %3376 = vmatprep.subr.bf16.mxu0 0
      %3377 = vmatpush1.bf16.msra.mxu0 0
      %3378 = vmatprep.subr.bf16.mxu0 0
      %3379 = vmatpush1.bf16.msra.mxu0 0
      %3380 = vmatprep.subr.bf16.mxu0 0
      %3381 = vmatpush1.bf16.msra.mxu0 0
      %3382 = vmatprep.subr.bf16.mxu0 0
      %3383 = vmatpush1.bf16.msra.mxu0 0
      %3384 = vmatprep.mubr.bf16.mxu0 0
      %3385 = vmatmul.mubr.bf16.gmra.mrb[0].mxu0 %v3270
      %v3386 = vpop.f32.mrb[0].mxu0
      %v3387 = vadd.f32 %v3347, %v3386
      %v3388 = vpop.f32.mrb[0].mxu0
      %v3389 = vpop.f32.mrb[0].mxu0
      %v3390 = vpop.f32.mrb[0].mxu0
      %3391 = vdwg.mxu0
      %v3392 = vmax.f32 %v3387, 0.0
      %v3393 = vpack.c.bf16 %v3392, %v3392
      %v3394 = vld [vmem:[%s4] sm:$0xff]
      %v3395 = vld [vmem:[%s4 + $0x8] sm:$0xff]
      %v3396 = vld [vmem:[%s4 + $0x10] sm:$0xff]
      %v3397 = vld [vmem:[%s4 + $0x18] sm:$0xff]
      %v3398 = vld [vmem:[%s4 + $0x20] sm:$0xff]
      %v3399 = vld [vmem:[%s4 + $0x28] sm:$0xff]
      %v3400 = vld [vmem:[%s4 + $0x30] sm:$0xff]
      %v3401 = vld [vmem:[%s4 + $0x38] sm:$0xff]
      %v3402 = vld [vmem:[%s4 + $0x40] sm:$0xff]
      %v3403 = vld [vmem:[%s4 + $0x48] sm:$0xff]
      %v3404 = vld [vmem:[%s4 + $0x50] sm:$0xff]
      %v3405 = vld [vmem:[%s4 + $0x58] sm:$0xff]
      %v3406 = vld [vmem:[%s4 + $0x60] sm:$0xff]
      %v3407 = vld [vmem:[%s4 + $0x68] sm:$0xff]
      %v3408 = vld [vmem:[%s4 + $0x70] sm:$0xff]
      %v3409 = vld [vmem:[%s4 + $0x78] sm:$0xff]
      %v3411 = vlaneseq
      %v3412 = vshrl.u32 %v3411, 7
      %v3413 = vsub.s32 0, %v3412
      %v3414 = vrot.slane %v286, %v3413
      %v3415 = vlaneseq
      %v3416 = vshrl.u32 %v3415, 7
      %v3417 = vsub.s32 1, %v3416
      %v3418 = vrot.slane %v286, %v3417
      %v3419 = vlaneseq
      %v3420 = vshrl.u32 %v3419, 7
      %v3421 = vsub.s32 2, %v3420
      %v3422 = vrot.slane %v286, %v3421
      %v3423 = vlaneseq
      %v3424 = vshrl.u32 %v3423, 7
      %v3425 = vsub.s32 3, %v3424
      %v3426 = vrot.slane %v286, %v3425
      %v3447 = vunpack.c.l.b16 %v3394
      %v3448 = vunpack.c.h.b16 %v3394
      %v3449 = vunpack.c.l.b16 %v3395
      %v3450 = vunpack.c.h.b16 %v3395
      %v3451 = vunpack.c.l.b16 %v3396
      %v3452 = vunpack.c.h.b16 %v3396
      %v3453 = vunpack.c.l.b16 %v3397
      %v3454 = vunpack.c.h.b16 %v3397
      %v3455 = vunpack.c.l.b16 %v3398
      %v3456 = vunpack.c.h.b16 %v3398
      %v3457 = vunpack.c.l.b16 %v3399
      %v3458 = vunpack.c.h.b16 %v3399
      %v3459 = vunpack.c.l.b16 %v3400
      %v3460 = vunpack.c.h.b16 %v3400
      %v3461 = vunpack.c.l.b16 %v3401
      %v3462 = vunpack.c.h.b16 %v3401
      %v3463 = vunpack.c.l.b16 %v3402
      %v3464 = vunpack.c.h.b16 %v3402
      %v3465 = vunpack.c.l.b16 %v3403
      %v3466 = vunpack.c.h.b16 %v3403
      %v3467 = vunpack.c.l.b16 %v3404
      %v3468 = vunpack.c.h.b16 %v3404
      %v3469 = vunpack.c.l.b16 %v3405
      %v3470 = vunpack.c.h.b16 %v3405
      %v3471 = vunpack.c.l.b16 %v3406
      %v3472 = vunpack.c.h.b16 %v3406
      %v3473 = vunpack.c.l.b16 %v3407
      %v3474 = vunpack.c.h.b16 %v3407
      %v3475 = vunpack.c.l.b16 %v3408
      %v3476 = vunpack.c.h.b16 %v3408
      %v3477 = vunpack.c.l.b16 %v3409
      %v3478 = vunpack.c.h.b16 %v3409
      %v3479 = vpack.c.b16 %v3451, %v3447
      %v3480 = vpack.c.b16 %v3452, %v3448
      %v3481 = vpack.c.b16 %v3453, %v3449
      %v3482 = vpack.c.b16 %v3454, %v3450
      %v3483 = vpack.c.b16 %v3459, %v3455
      %v3484 = vpack.c.b16 %v3460, %v3456
      %v3485 = vpack.c.b16 %v3461, %v3457
      %v3486 = vpack.c.b16 %v3462, %v3458
      %v3487 = vpack.c.b16 %v3467, %v3463
      %v3488 = vpack.c.b16 %v3468, %v3464
      %v3489 = vpack.c.b16 %v3469, %v3465
      %v3490 = vpack.c.b16 %v3470, %v3466
      %v3491 = vpack.c.b16 %v3475, %v3471
      %v3492 = vpack.c.b16 %v3476, %v3472
      %v3493 = vpack.c.b16 %v3477, %v3473
      %v3494 = vpack.c.b16 %v3478, %v3474
      %v3512 = vsel %vm2376, %v3393, 0
      %3514 = vmatprep.subr.bf16.mxu0 %v3480
      %3515 = vmatpush1.bf16.msra.mxu0 %v3479
      %3516 = vmatprep.subr.bf16.mxu0 %v3484
      %3517 = vmatpush1.bf16.msra.mxu0 %v3483
      %3518 = vmatprep.subr.bf16.mxu0 %v3488
      %3519 = vmatpush1.bf16.msra.mxu0 %v3487
      %3520 = vmatprep.subr.bf16.mxu0 %v3492
      %3521 = vmatpush1.bf16.msra.mxu0 %v3491
      %3522 = vmatprep.subr.bf16.mxu0 0
      %3523 = vmatpush1.bf16.msra.mxu0 0
      %3524 = vmatprep.subr.bf16.mxu0 0
      %3525 = vmatpush1.bf16.msra.mxu0 0
      %3526 = vmatprep.subr.bf16.mxu0 0
      %3527 = vmatpush1.bf16.msra.mxu0 0
      %3528 = vmatprep.subr.bf16.mxu0 0
      %3529 = vmatpush1.bf16.msra.mxu0 0
      %3530 = vmatprep.subr.bf16.mxu0 0
      %3531 = vmatpush1.bf16.msra.mxu0 0
      %3532 = vmatprep.subr.bf16.mxu0 0
      %3533 = vmatpush1.bf16.msra.mxu0 0
      %3534 = vmatprep.subr.bf16.mxu0 0
      %3535 = vmatpush1.bf16.msra.mxu0 0
      %3536 = vmatprep.subr.bf16.mxu0 0
      %3537 = vmatpush1.bf16.msra.mxu0 0
      %3538 = vmatprep.subr.bf16.mxu0 0
      %3539 = vmatpush1.bf16.msra.mxu0 0
      %3540 = vmatprep.subr.bf16.mxu0 0
      %3541 = vmatpush1.bf16.msra.mxu0 0
      %3542 = vmatprep.subr.bf16.mxu0 0
      %3543 = vmatpush1.bf16.msra.mxu0 0
      %3544 = vmatprep.subr.bf16.mxu0 0
      %3545 = vmatpush1.bf16.msra.mxu0 0
      %3546 = vmatprep.mubr.bf16.mxu0 0
      %3547 = vmatmul.mubr.bf16.gmra.mrb[0].mxu0 %v3512
      %v3548 = vpop.f32.mrb[0].mxu0
      %v3549 = vadd.f32 %v3414, %v3548
      %v3550 = vpop.f32.mrb[0].mxu0
      %v3551 = vadd.f32 %v3418, %v3550
      %v3552 = vpop.f32.mrb[0].mxu0
      %v3553 = vpop.f32.mrb[0].mxu0
      %3554 = vdwg.mxu0
      %3555 = vmatprep.subr.bf16.mxu0 %v3482
      %3556 = vmatpush1.bf16.msra.mxu0 %v3481
      %3557 = vmatprep.subr.bf16.mxu0 %v3486
      %3558 = vmatpush1.bf16.msra.mxu0 %v3485
      %3559 = vmatprep.subr.bf16.mxu0 %v3490
      %3560 = vmatpush1.bf16.msra.mxu0 %v3489
      %3561 = vmatprep.subr.bf16.mxu0 %v3494
      %3562 = vmatpush1.bf16.msra.mxu0 %v3493
      %3563 = vmatprep.subr.bf16.mxu0 0
      %3564 = vmatpush1.bf16.msra.mxu0 0
      %3565 = vmatprep.subr.bf16.mxu0 0
      %3566 = vmatpush1.bf16.msra.mxu0 0
      %3567 = vmatprep.subr.bf16.mxu0 0
      %3568 = vmatpush1.bf16.msra.mxu0 0
      %3569 = vmatprep.subr.bf16.mxu0 0
      %3570 = vmatpush1.bf16.msra.mxu0 0
      %3571 = vmatprep.subr.bf16.mxu0 0
      %3572 = vmatpush1.bf16.msra.mxu0 0
      %3573 = vmatprep.subr.bf16.mxu0 0
      %3574 = vmatpush1.bf16.msra.mxu0 0
      %3575 = vmatprep.subr.bf16.mxu0 0
      %3576 = vmatpush1.bf16.msra.mxu0 0
      %3577 = vmatprep.subr.bf16.mxu0 0
      %3578 = vmatpush1.bf16.msra.mxu0 0
      %3579 = vmatprep.subr.bf16.mxu0 0
      %3580 = vmatpush1.bf16.msra.mxu0 0
      %3581 = vmatprep.subr.bf16.mxu0 0
      %3582 = vmatpush1.bf16.msra.mxu0 0
      %3583 = vmatprep.subr.bf16.mxu0 0
      %3584 = vmatpush1.bf16.msra.mxu0 0
      %3585 = vmatprep.subr.bf16.mxu0 0
      %3586 = vmatpush1.bf16.msra.mxu0 0
      %3587 = vmatprep.mubr.bf16.mxu0 0
      %3588 = vmatmul.mubr.bf16.gmra.mrb[0].mxu0 %v3512
      %v3589 = vpop.f32.mrb[0].mxu0
      %v3590 = vadd.f32 %v3422, %v3589
      %v3591 = vpop.f32.mrb[0].mxu0
      %v3592 = vadd.f32 %v3426, %v3591
      %v3593 = vpop.f32.mrb[0].mxu0
      %v3594 = vpop.f32.mrb[0].mxu0
      %3595 = vdwg.mxu0
      %v3596 = vmax.f32 %v3549, 0.0
      %v3597 = vmax.f32 %v3551, 0.0
      %v3598 = vmax.f32 %v3590, 0.0
      %v3599 = vmax.f32 %v3592, 0.0
      %v3600 = vpack.c.bf16 %v3596, %v3596
      %v3601 = vpack.c.bf16 %v3597, %v3597
      %v3602 = vpack.c.bf16 %v3598, %v3598
      %v3603 = vpack.c.bf16 %v3599, %v3599
      %v3604 = vld [vmem:[%s5] sm:$0xf]
      %v3605 = vld [vmem:[%s5 + $0x4] sm:$0xf]
      %v3606 = vld [vmem:[%s5 + $0x8] sm:$0xf]
      %v3607 = vld [vmem:[%s5 + $0xc] sm:$0xf]
      %v3608 = vld [vmem:[%s5 + $0x10] sm:$0xf]
      %v3609 = vld [vmem:[%s5 + $0x14] sm:$0xf]
      %v3610 = vld [vmem:[%s5 + $0x18] sm:$0xf]
      %v3611 = vld [vmem:[%s5 + $0x1c] sm:$0xf]
      %v3612 = vld [vmem:[%s5 + $0x20] sm:$0xf]
      %v3613 = vld [vmem:[%s5 + $0x24] sm:$0xf]
      %v3614 = vld [vmem:[%s5 + $0x28] sm:$0xf]
      %v3615 = vld [vmem:[%s5 + $0x2c] sm:$0xf]
      %v3616 = vld [vmem:[%s5 + $0x30] sm:$0xf]
      %v3617 = vld [vmem:[%s5 + $0x34] sm:$0xf]
      %v3618 = vld [vmem:[%s5 + $0x38] sm:$0xf]
      %v3619 = vld [vmem:[%s5 + $0x3c] sm:$0xf]
      %v3620 = vld [vmem:[%s5 + $0x40] sm:$0xf]
      %v3621 = vld [vmem:[%s5 + $0x44] sm:$0xf]
      %v3622 = vld [vmem:[%s5 + $0x48] sm:$0xf]
      %v3623 = vld [vmem:[%s5 + $0x4c] sm:$0xf]
      %v3624 = vld [vmem:[%s5 + $0x50] sm:$0xf]
      %v3625 = vld [vmem:[%s5 + $0x54] sm:$0xf]
      %v3626 = vld [vmem:[%s5 + $0x58] sm:$0xf]
      %v3627 = vld [vmem:[%s5 + $0x5c] sm:$0xf]
      %v3628 = vld [vmem:[%s5 + $0x60] sm:$0xf]
      %v3629 = vld [vmem:[%s5 + $0x64] sm:$0xf]
      %v3630 = vld [vmem:[%s5 + $0x68] sm:$0xf]
      %v3631 = vld [vmem:[%s5 + $0x6c] sm:$0xf]
      %v3632 = vld [vmem:[%s5 + $0x70] sm:$0xf]
      %v3633 = vld [vmem:[%s5 + $0x74] sm:$0xf]
      %v3634 = vld [vmem:[%s5 + $0x78] sm:$0xf]
      %v3635 = vld [vmem:[%s5 + $0x7c] sm:$0xf]
      %v3636 = vld [vmem:[%s5 + $0x80] sm:$0xf]
      %v3637 = vld [vmem:[%s5 + $0x84] sm:$0xf]
      %v3638 = vld [vmem:[%s5 + $0x88] sm:$0xf]
      %v3639 = vld [vmem:[%s5 + $0x8c] sm:$0xf]
      %v3640 = vld [vmem:[%s5 + $0x90] sm:$0xf]
      %v3641 = vld [vmem:[%s5 + $0x94] sm:$0xf]
      %v3642 = vld [vmem:[%s5 + $0x98] sm:$0xf]
      %v3643 = vld [vmem:[%s5 + $0x9c] sm:$0xf]
      %v3644 = vld [vmem:[%s5 + $0xa0] sm:$0xf]
      %v3645 = vld [vmem:[%s5 + $0xa4] sm:$0xf]
      %v3646 = vld [vmem:[%s5 + $0xa8] sm:$0xf]
      %v3647 = vld [vmem:[%s5 + $0xac] sm:$0xf]
      %v3648 = vld [vmem:[%s5 + $0xb0] sm:$0xf]
      %v3649 = vld [vmem:[%s5 + $0xb4] sm:$0xf]
      %v3650 = vld [vmem:[%s5 + $0xb8] sm:$0xf]
      %v3651 = vld [vmem:[%s5 + $0xbc] sm:$0xf]
      %v3652 = vld [vmem:[%s5 + $0xc0] sm:$0xf]
      %v3653 = vld [vmem:[%s5 + $0xc4] sm:$0xf]
      %v3654 = vld [vmem:[%s5 + $0xc8] sm:$0xf]
      %v3655 = vld [vmem:[%s5 + $0xcc] sm:$0xf]
      %v3656 = vld [vmem:[%s5 + $0xd0] sm:$0xf]
      %v3657 = vld [vmem:[%s5 + $0xd4] sm:$0xf]
      %v3658 = vld [vmem:[%s5 + $0xd8] sm:$0xf]
      %v3659 = vld [vmem:[%s5 + $0xdc] sm:$0xf]
      %v3660 = vld [vmem:[%s5 + $0xe0] sm:$0xf]
      %v3661 = vld [vmem:[%s5 + $0xe4] sm:$0xf]
      %v3662 = vld [vmem:[%s5 + $0xe8] sm:$0xf]
      %v3663 = vld [vmem:[%s5 + $0xec] sm:$0xf]
      %v3664 = vld [vmem:[%s5 + $0xf0] sm:$0xf]
      %v3665 = vld [vmem:[%s5 + $0xf4] sm:$0xf]
      %v3666 = vld [vmem:[%s5 + $0xf8] sm:$0xf]
      %v3667 = vld [vmem:[%s5 + $0xfc] sm:$0xf]
      %v3669 = vlaneseq
      %v3670 = vshrl.u32 %v3669, 7
      %v3671 = vsub.s32 0, %v3670
      %v3672 = vrot.slane %v287, %v3671
      %v3738 = vunpack.c.l.b16 %v3604
      %v3739 = vunpack.c.l.b16 %v3605
      %v3740 = vunpack.c.l.b16 %v3606
      %v3741 = vunpack.c.l.b16 %v3607
      %v3742 = vunpack.c.l.b16 %v3608
      %v3743 = vunpack.c.l.b16 %v3609
      %v3744 = vunpack.c.l.b16 %v3610
      %v3745 = vunpack.c.l.b16 %v3611
      %v3746 = vunpack.c.l.b16 %v3612
      %v3747 = vunpack.c.l.b16 %v3613
      %v3748 = vunpack.c.l.b16 %v3614
      %v3749 = vunpack.c.l.b16 %v3615
      %v3750 = vunpack.c.l.b16 %v3616
      %v3751 = vunpack.c.l.b16 %v3617
      %v3752 = vunpack.c.l.b16 %v3618
      %v3753 = vunpack.c.l.b16 %v3619
      %v3754 = vunpack.c.l.b16 %v3620
      %v3755 = vunpack.c.l.b16 %v3621
      %v3756 = vunpack.c.l.b16 %v3622
      %v3757 = vunpack.c.l.b16 %v3623
      %v3758 = vunpack.c.l.b16 %v3624
      %v3759 = vunpack.c.l.b16 %v3625
      %v3760 = vunpack.c.l.b16 %v3626
      %v3761 = vunpack.c.l.b16 %v3627
      %v3762 = vunpack.c.l.b16 %v3628
      %v3763 = vunpack.c.l.b16 %v3629
      %v3764 = vunpack.c.l.b16 %v3630
      %v3765 = vunpack.c.l.b16 %v3631
      %v3766 = vunpack.c.l.b16 %v3632
      %v3767 = vunpack.c.l.b16 %v3633
      %v3768 = vunpack.c.l.b16 %v3634
      %v3769 = vunpack.c.l.b16 %v3635
      %v3770 = vunpack.c.l.b16 %v3636
      %v3771 = vunpack.c.l.b16 %v3637
      %v3772 = vunpack.c.l.b16 %v3638
      %v3773 = vunpack.c.l.b16 %v3639
      %v3774 = vunpack.c.l.b16 %v3640
      %v3775 = vunpack.c.l.b16 %v3641
      %v3776 = vunpack.c.l.b16 %v3642
      %v3777 = vunpack.c.l.b16 %v3643
      %v3778 = vunpack.c.l.b16 %v3644
      %v3779 = vunpack.c.l.b16 %v3645
      %v3780 = vunpack.c.l.b16 %v3646
      %v3781 = vunpack.c.l.b16 %v3647
      %v3782 = vunpack.c.l.b16 %v3648
      %v3783 = vunpack.c.l.b16 %v3649
      %v3784 = vunpack.c.l.b16 %v3650
      %v3785 = vunpack.c.l.b16 %v3651
      %v3786 = vunpack.c.l.b16 %v3652
      %v3787 = vunpack.c.l.b16 %v3653
      %v3788 = vunpack.c.l.b16 %v3654
      %v3789 = vunpack.c.l.b16 %v3655
      %v3790 = vunpack.c.l.b16 %v3656
      %v3791 = vunpack.c.l.b16 %v3657
      %v3792 = vunpack.c.l.b16 %v3658
      %v3793 = vunpack.c.l.b16 %v3659
      %v3794 = vunpack.c.l.b16 %v3660
      %v3795 = vunpack.c.l.b16 %v3661
      %v3796 = vunpack.c.l.b16 %v3662
      %v3797 = vunpack.c.l.b16 %v3663
      %v3798 = vunpack.c.l.b16 %v3664
      %v3799 = vunpack.c.l.b16 %v3665
      %v3800 = vunpack.c.l.b16 %v3666
      %v3801 = vunpack.c.l.b16 %v3667
      %v3802 = vpack.c.b16 %v3739, %v3738
      %v3803 = vpack.c.b16 %v3741, %v3740
      %v3804 = vpack.c.b16 %v3743, %v3742
      %v3805 = vpack.c.b16 %v3745, %v3744
      %v3806 = vpack.c.b16 %v3747, %v3746
      %v3807 = vpack.c.b16 %v3749, %v3748
      %v3808 = vpack.c.b16 %v3751, %v3750
      %v3809 = vpack.c.b16 %v3753, %v3752
      %v3810 = vpack.c.b16 %v3755, %v3754
      %v3811 = vpack.c.b16 %v3757, %v3756
      %v3812 = vpack.c.b16 %v3759, %v3758
      %v3813 = vpack.c.b16 %v3761, %v3760
      %v3814 = vpack.c.b16 %v3763, %v3762
      %v3815 = vpack.c.b16 %v3765, %v3764
      %v3816 = vpack.c.b16 %v3767, %v3766
      %v3817 = vpack.c.b16 %v3769, %v3768
      %v3818 = vpack.c.b16 %v3771, %v3770
      %v3819 = vpack.c.b16 %v3773, %v3772
      %v3820 = vpack.c.b16 %v3775, %v3774
      %v3821 = vpack.c.b16 %v3777, %v3776
      %v3822 = vpack.c.b16 %v3779, %v3778
      %v3823 = vpack.c.b16 %v3781, %v3780
      %v3824 = vpack.c.b16 %v3783, %v3782
      %v3825 = vpack.c.b16 %v3785, %v3784
      %v3826 = vpack.c.b16 %v3787, %v3786
      %v3827 = vpack.c.b16 %v3789, %v3788
      %v3828 = vpack.c.b16 %v3791, %v3790
      %v3829 = vpack.c.b16 %v3793, %v3792
      %v3830 = vpack.c.b16 %v3795, %v3794
      %v3831 = vpack.c.b16 %v3797, %v3796
      %v3832 = vpack.c.b16 %v3799, %v3798
      %v3833 = vpack.c.b16 %v3801, %v3800
      %3866 = vmatprep.subr.bf16.mxu0 0
      %3867 = vmatpush1.bf16.msra.mxu0 %v3802
      %3868 = vmatprep.subr.bf16.mxu0 0
      %3869 = vmatpush1.bf16.msra.mxu0 %v3803
      %3870 = vmatprep.subr.bf16.mxu0 0
      %3871 = vmatpush1.bf16.msra.mxu0 %v3804
      %3872 = vmatprep.subr.bf16.mxu0 0
      %3873 = vmatpush1.bf16.msra.mxu0 %v3805
      %3874 = vmatprep.subr.bf16.mxu0 0
      %3875 = vmatpush1.bf16.msra.mxu0 %v3806
      %3876 = vmatprep.subr.bf16.mxu0 0
      %3877 = vmatpush1.bf16.msra.mxu0 %v3807
      %3878 = vmatprep.subr.bf16.mxu0 0
      %3879 = vmatpush1.bf16.msra.mxu0 %v3808
      %3880 = vmatprep.subr.bf16.mxu0 0
      %3881 = vmatpush1.bf16.msra.mxu0 %v3809
      %3882 = vmatprep.subr.bf16.mxu0 0
      %3883 = vmatpush1.bf16.msra.mxu0 %v3810
      %3884 = vmatprep.subr.bf16.mxu0 0
      %3885 = vmatpush1.bf16.msra.mxu0 %v3811
      %3886 = vmatprep.subr.bf16.mxu0 0
      %3887 = vmatpush1.bf16.msra.mxu0 %v3812
      %3888 = vmatprep.subr.bf16.mxu0 0
      %3889 = vmatpush1.bf16.msra.mxu0 %v3813
      %3890 = vmatprep.subr.bf16.mxu0 0
      %3891 = vmatpush1.bf16.msra.mxu0 %v3814
      %3892 = vmatprep.subr.bf16.mxu0 0
      %3893 = vmatpush1.bf16.msra.mxu0 %v3815
      %3894 = vmatprep.subr.bf16.mxu0 0
      %3895 = vmatpush1.bf16.msra.mxu0 %v3816
      %3896 = vmatprep.subr.bf16.mxu0 0
      %3897 = vmatpush1.bf16.msra.mxu0 %v3817
      %3898 = vmatprep.mubr.bf16.mxu0 %v3601
      %3899 = vmatmul.mubr.bf16.gmra.mrb[0].mxu0 %v3600
      %v3900 = vpop.f32.mrb[0].mxu0
      %v3901 = vadd.f32 %v3672, %v3900
      %v3902 = vpop.f32.mrb[0].mxu0
      %v3903 = vpop.f32.mrb[0].mxu0
      %v3904 = vpop.f32.mrb[0].mxu0
      %3905 = vdwg.mxu0
      %3906 = vmatprep.subr.bf16.mxu0 0
      %3907 = vmatpush1.bf16.msra.mxu0 %v3818
      %3908 = vmatprep.subr.bf16.mxu0 0
      %3909 = vmatpush1.bf16.msra.mxu0 %v3819
      %3910 = vmatprep.subr.bf16.mxu0 0
      %3911 = vmatpush1.bf16.msra.mxu0 %v3820
      %3912 = vmatprep.subr.bf16.mxu0 0
      %3913 = vmatpush1.bf16.msra.mxu0 %v3821
      %3914 = vmatprep.subr.bf16.mxu0 0
      %3915 = vmatpush1.bf16.msra.mxu0 %v3822
      %3916 = vmatprep.subr.bf16.mxu0 0
      %3917 = vmatpush1.bf16.msra.mxu0 %v3823
      %3918 = vmatprep.subr.bf16.mxu0 0
      %3919 = vmatpush1.bf16.msra.mxu0 %v3824
      %3920 = vmatprep.subr.bf16.mxu0 0
      %3921 = vmatpush1.bf16.msra.mxu0 %v3825
      %3922 = vmatprep.subr.bf16.mxu0 0
      %3923 = vmatpush1.bf16.msra.mxu0 %v3826
      %3924 = vmatprep.subr.bf16.mxu0 0
      %3925 = vmatpush1.bf16.msra.mxu0 %v3827
      %3926 = vmatprep.subr.bf16.mxu0 0
      %3927 = vmatpush1.bf16.msra.mxu0 %v3828
      %3928 = vmatprep.subr.bf16.mxu0 0
      %3929 = vmatpush1.bf16.msra.mxu0 %v3829
      %3930 = vmatprep.subr.bf16.mxu0 0
      %3931 = vmatpush1.bf16.msra.mxu0 %v3830
      %3932 = vmatprep.subr.bf16.mxu0 0
      %3933 = vmatpush1.bf16.msra.mxu0 %v3831
      %3934 = vmatprep.subr.bf16.mxu0 0
      %3935 = vmatpush1.bf16.msra.mxu0 %v3832
      %3936 = vmatprep.subr.bf16.mxu0 0
      %3937 = vmatpush1.bf16.msra.mxu0 %v3833
      %3938 = vmatprep.mubr.bf16.mxu0 %v3603
      %3939 = vmatmul.mubr.bf16.gmra.mrb[0].mxu0 %v3602
      %v3940 = vpop.f32.mrb[0].mxu0
      %v3941 = vadd.f32 %v3901, %v3940
      %v3942 = vpop.f32.mrb[0].mxu0
      %v3943 = vpop.f32.mrb[0].mxu0
      %v3944 = vpop.f32.mrb[0].mxu0
      %3945 = vdwg.mxu0
      %3946 = vst [vmem:[%s281] sm:$0xff] %v3941
      %p3947 = scmp.lt.s32.totalorder %s18, 1
      %s3948 = scalar_select %p3947, %s18, 1
      %s3949 = smul.addr %s3948, 8
      %s3950 = scalar_lea.vmem %s7, %s3949
      // Predicated region
      $region49: #{dqn_forward.1} parent=47 // pred_check
        %p3951 = pneg %p188
      $region50: #{dqn_forward.1} parent=47 // pred_check_branch
        %3953 = sbr.rel (%p3951) target = $region52
      $region51: #{dqn_forward.1} parent=47 // pred_region
        _
      $region52: #{dqn_forward.1} parent=47 // pred_fallthru
        _
    $region48: #{dqn_forward.1} parent=5 // pred_fallthru
      _
    %p3954 = scmp.le.s32.totalorder 2, %s13
    // Predicated region
    $region53: #{dqn_forward.1} parent=5 // pred_check
      %p3955 = pneg %p3954
    $region54: #{dqn_forward.1} parent=5 // pred_check_branch
      %3957 = sbr.rel (%p3955) target = $region56
    $region55: #{dqn_forward.1} parent=5 // pred_region
      %s3958 = ssub.s32 %s13, 2
      // Predicated region
      $region57: #{dqn_forward.1} parent=55 // pred_check
        %p3959 = pneg %p194
      $region58: #{dqn_forward.1} parent=55 // pred_check_branch
        %3961 = sbr.rel (%p3959) target = $region60
      $region59: #{dqn_forward.1} parent=55 // pred_region
        %p3962 = scmp.lt.s32.totalorder %s19, 1
        %s3963 = scalar_select %p3962, %s19, 1
        %s3964 = smul.addr %s3963, 8
        %s3965 = scalar_lea.vmem %s7, %s3964
      $region60: #{dqn_forward.1} parent=55 // pred_fallthru
        _
    $region56: #{dqn_forward.1} parent=5 // pred_fallthru
      _
  $region6: #{dqn_forward.1} parent=0 // loop_footer
    %s17 = sadd.s32 1, %s13
  $region7: #{dqn_forward.1} parent=0 // loop_footer_branch
    %12 = sbr.rel target = $region3
  $region8: #{dqn_forward.1} parent=0 // loop_exit
    _

</llo_original>
